<compile_context>
chip_gen: v7x
topology: tpu7x:2x2x1
jax: 0.10.0
libtpu: 0.0.40
codegen_flags: <defaults>
</compile_context>

<pallas_src>
import functools
import math

import jax
import jax.numpy as jnp
import numpy as np
from jax.experimental import pallas as pl
from jax.experimental.pallas import tpu as pltpu

COMPUTE_DTYPE = jnp.bfloat16   # MXU operand dtype (all accumulation is f32)
NEG_INF = -1e30                # finite masked score (avoids exp(-inf - -inf) NaN)
LN_EPS = 1e-5


def _layer_norm(x, g, b, eps=LN_EPS):
    mu = jnp.mean(x, axis=-1, keepdims=True)
    var = jnp.mean(jnp.square(x - mu), axis=-1, keepdims=True)
    return (x - mu) * jax.lax.rsqrt(var + eps) * g + b


# ------------------------------- kernels -------------------------------------


def block_kernel(*refs, num_heads, has_pos):
    """One CLIP ResidualAttentionBlock on a (BT, S, W) batch tile.

    refs = (x, [pos], g1, b1, wqkv, bqkv, wo_hdw, bo, g2, b2, wfc, bfc,
            wpj, bpj, out)
    """
    x_ref = refs[0]
    widx = 1
    pos_ref = None
    if has_pos:
        pos_ref = refs[1]
        widx = 2
    (g1_ref, b1_ref, wqkv_ref, bqkv_ref, wo_ref, bo_ref, g2_ref, b2_ref,
     wfc_ref, bfc_ref, wpj_ref, bpj_ref) = refs[widx:-1]
    o_ref = refs[-1]

    x = x_ref[...]                                    # (BT, S, W) f32 residual
    if pos_ref is not None:
        x = x + pos_ref[...]                          # positional emb fused in L0
    BT, S, W = x.shape
    H = num_heads
    Dh = W // H
    N = BT * S
    scale = 1.0 / math.sqrt(Dh)

    xt = x.reshape(N, W)                              # token-major slab for MXU

    # ---------------- attention branch ----------------
    xn = _layer_norm(xt, g1_ref[...], b1_ref[...])
    qkv = jnp.dot(xn.astype(COMPUTE_DTYPE), wqkv_ref[...],
                  preferred_element_type=jnp.float32) + bqkv_ref[...]  # (N, 3W)

    # heads-major: (N, 3H, Dh) -> (3H, N, Dh); heads become the batch dim of
    # one batched einsum instead of a python loop + lane concat.
    qkv_h = pltpu.einshape("nhd->hnd", qkv.reshape(N, 3 * H, Dh))
    q = qkv_h[0 * H:1 * H].reshape(H * BT, S, Dh)
    k = qkv_h[1 * H:2 * H].reshape(H * BT, S, Dh)
    v = qkv_h[2 * H:3 * H].reshape(H * BT, S, Dh)

    row = jax.lax.broadcasted_iota(jnp.int32, (S, S), 0)
    col = jax.lax.broadcasted_iota(jnp.int32, (S, S), 1)
    causal_bias = jnp.where(col <= row, 0.0, NEG_INF).astype(jnp.float32)

    s = jnp.einsum("bqd,bkd->bqk", q.astype(COMPUTE_DTYPE),
                   k.astype(COMPUTE_DTYPE),
                   preferred_element_type=jnp.float32) * scale
    s = s + causal_bias                               # one additive mask, all heads
    s = s - jnp.max(s, axis=-1, keepdims=True)
    p = jnp.exp(s)
    p = p * pl.reciprocal(jnp.sum(p, axis=-1, keepdims=True), approx=True)
    attn = jnp.einsum("bqk,bkd->bqd", p.astype(COMPUTE_DTYPE),
                      v.astype(COMPUTE_DTYPE),
                      preferred_element_type=jnp.float32)     # (H*BT, S, Dh)

    # output projection with heads as the weight's batch dim + cheap cross-head
    # sum -> no (H, Dh) -> W lane re-pack inside the kernel.
    attn_h = attn.reshape(H, N, Dh)
    ctxo = jnp.einsum("hnd,hdw->hnw", attn_h.astype(COMPUTE_DTYPE), wo_ref[...],
                      preferred_element_type=jnp.float32)      # (H, N, W)
    xt = xt + jnp.sum(ctxo, axis=0) + bo_ref[...]

    # ---------------- MLP branch (QuickGELU) ----------------
    xn2 = _layer_norm(xt, g2_ref[...], b2_ref[...])
    h1 = jnp.dot(xn2.astype(COMPUTE_DTYPE), wfc_ref[...],
                 preferred_element_type=jnp.float32) + bfc_ref[...]
    h1 = h1 * jax.nn.sigmoid(1.702 * h1)
    h2 = jnp.dot(h1.astype(COMPUTE_DTYPE), wpj_ref[...],
                 preferred_element_type=jnp.float32) + bpj_ref[...]
    xt = xt + h2

    o_ref[...] = xt.reshape(BT, S, W).astype(o_ref.dtype)


def head_kernel(eot_ref, x_ref, g_ref, b_ref, proj_ref, o_ref):
    """ln_final + text_projection on the EOT token of one sequence.

    eot indices are scalar-prefetched into SMEM; the EOT row is selected
    in-kernel with a dynamic slice (fused gather).
    """
    b = pl.program_id(0)
    idx = eot_ref[b]
    xe = x_ref[0, pl.ds(idx, 1), :]                   # (1, W) EOT row
    xn = _layer_norm(xe, g_ref[...], b_ref[...])
    o_ref[...] = jnp.dot(xn.astype(COMPUTE_DTYPE), proj_ref[...],
                         preferred_element_type=jnp.float32).astype(o_ref.dtype)


def logits_kernel(img_ref, txt_t_ref, scale_ref, o_ref):
    """logit_scale.exp() * norm(img) @ norm(text).T  (text pre-transposed)."""
    img = img_ref[...]                                # (Bi, E)
    txt_t = txt_t_ref[...]                            # (E, n_cls)
    img = img * jax.lax.rsqrt(jnp.sum(img * img, axis=-1, keepdims=True))
    txt_t = txt_t * jax.lax.rsqrt(jnp.sum(txt_t * txt_t, axis=0, keepdims=True))
    logits = jnp.dot(img.astype(COMPUTE_DTYPE), txt_t.astype(COMPUTE_DTYPE),
                     preferred_element_type=jnp.float32)
    o_ref[...] = (jnp.exp(scale_ref[...]) * logits).astype(o_ref.dtype)


# ------------------------------- wrappers -------------------------------------


def _const_index_map(ndim):
    return lambda i: (0,) * ndim


def _weight_spec(shape):
    # grid-invariant block: single-buffered (frees VMEM, esp. on v7x's 64 MiB)
    return pl.BlockSpec(shape, _const_index_map(len(shape)),
                        pipeline_mode=pl.Buffered(1))


def residual_block(x, layer_params, num_heads, *, pos_emb=None,
                   block_batch=None, vmem_limit_bytes=40 * 1024 * 1024):
    B, S, W = x.shape
    BT = B if block_batch is None else block_batch
    assert B % BT == 0, "batch must be divisible by the batch tile"
    grid = (B // BT,)

    in_specs = [pl.BlockSpec((BT, S, W), lambda i: (i, 0, 0))]
    inputs = [x]
    if pos_emb is not None:                           # only layer 0: no zero-add DMA
        in_specs.append(_weight_spec(pos_emb.shape))
        inputs.append(pos_emb)
    for w in layer_params:
        in_specs.append(_weight_spec(w.shape))
        inputs.append(w)

    kernel = functools.partial(block_kernel, num_heads=num_heads,
                               has_pos=pos_emb is not None)
    return pl.pallas_call(
        kernel,
        out_shape=jax.ShapeDtypeStruct((B, S, W), x.dtype),
        grid=grid,
        in_specs=in_specs,
        out_specs=pl.BlockSpec((BT, S, W), lambda i: (i, 0, 0)),
        compiler_params=pltpu.CompilerParams(
            dimension_semantics=("parallel",),        # batch tiles -> both v7x TCs
            vmem_limit_bytes=vmem_limit_bytes),       # headroom (v5e default 16 MiB)
    )(*inputs)


def text_head(x, eot_idx, ln_g, ln_b, proj):
    B, S, W = x.shape
    E = proj.shape[-1]
    grid_spec = pltpu.PrefetchScalarGridSpec(
        num_scalar_prefetch=1,                        # eot indices -> SMEM
        grid=(B,),
        in_specs=[
            pl.BlockSpec((1, S, W), lambda b, eot: (b, 0, 0)),
            pl.BlockSpec((1, W), lambda b, eot: (0, 0)),
            pl.BlockSpec((1, W), lambda b, eot: (0, 0)),
            pl.BlockSpec((W, E), lambda b, eot: (0, 0)),
        ],
        out_specs=pl.BlockSpec((1, E), lambda b, eot: (b, 0)),
    )
    return pl.pallas_call(
        head_kernel,
        out_shape=jax.ShapeDtypeStruct((B, E), jnp.float32),
        grid_spec=grid_spec,
        compiler_params=pltpu.CompilerParams(
            dimension_semantics=("arbitrary",)),
    )(eot_idx, x, ln_g, ln_b, proj)


def clip_logits(image_features, text_features, logit_scale):
    Bi, E = image_features.shape
    n_cls = text_features.shape[0]
    txt_t = text_features.T                           # lane-dense text operand
    scale = jnp.reshape(logit_scale, (1, 1)).astype(jnp.float32)
    return pl.pallas_call(
        logits_kernel,
        out_shape=jax.ShapeDtypeStruct((Bi, n_cls), jnp.float32),
        grid=(1,),
        in_specs=[
            pl.BlockSpec((Bi, E), lambda i: (0, 0)),
            pl.BlockSpec((E, n_cls), lambda i: (0, 0)),
            pl.BlockSpec((1, 1), lambda i: (0, 0)),
        ],
        out_specs=pl.BlockSpec((Bi, n_cls), lambda i: (0, 0)),
    )(image_features, txt_t, scale)


def text_encoder_forward(prompts, tokenized_prompts, pos_emb, kernel_layers,
                         ln_f_g, ln_f_b, text_projection, num_heads, *,
                         block_batch=None):
    x = prompts
    for i, lp in enumerate(kernel_layers):
        x = residual_block(x, lp, num_heads,
                           pos_emb=pos_emb if i == 0 else None,
                           block_batch=block_batch)
    eot = jnp.argmax(tokenized_prompts, axis=-1).astype(jnp.int32)
    return text_head(x, eot, ln_f_g, ln_f_b, text_projection)


def vp_clip_forward(image_features, ctx, token_prefix, token_suffix,
                    tokenized_prompts, pos_emb, kernel_layers, ln_f_g, ln_f_b,
                    text_projection, logit_scale, num_heads, *,
                    block_batch=None):
    # VLPromptLearner.forward: prompts = cat([prefix, ctx, suffix], dim=1)
    n_cls = token_prefix.shape[0]
    ctx_b = jnp.broadcast_to(ctx[None], (n_cls,) + ctx.shape)
    prompts = jnp.concatenate([token_prefix, ctx_b, token_suffix], axis=1)
    # TODO(synk): CLIP image encoder (ViT backbone) not defined in this module;
    # image_features are taken as a precomputed input.
    text_features = text_encoder_forward(prompts, tokenized_prompts, pos_emb,
                                         kernel_layers, ln_f_g, ln_f_b,
                                         text_projection, num_heads,
                                         block_batch=block_batch)
    logits = clip_logits(image_features, text_features, logit_scale)
    return logits, text_features


# --------------------------- pure-JAX references ------------------------------


def text_encoder_ref(prompts, tokenized_prompts, pos_emb, layer_params,
                     ln_f_g, ln_f_b, text_projection, num_heads):
    B, S, W = prompts.shape
    Dh = W // num_heads
    scale = 1.0 / math.sqrt(Dh)
    mask = jnp.where(jnp.tril(jnp.ones((S, S), bool)), 0.0, -jnp.inf)

    x = prompts + pos_emb
    for (g1, b1, wqkv, bqkv, wo, bo, g2, b2, wfc, bfc, wpj, bpj) in layer_params:
        xn = _layer_norm(x, g1, b1)
        qkv = xn @ wqkv + bqkv
        q, k, v = jnp.split(qkv, 3, axis=-1)
        q = q.reshape(B, S, num_heads, Dh)
        k = k.reshape(B, S, num_heads, Dh)
        v = v.reshape(B, S, num_heads, Dh)
        s = jnp.einsum('bqhd,bkhd->bhqk', q, k) * scale + mask
        p = jax.nn.softmax(s, axis=-1)
        a = jnp.einsum('bhqk,bkhd->bqhd', p, v).reshape(B, S, W)
        x = x + (a @ wo + bo)
        xn2 = _layer_norm(x, g2, b2)
        h1 = xn2 @ wfc + bfc
        h1 = h1 * jax.nn.sigmoid(1.702 * h1)
        x = x + (h1 @ wpj + bpj)

    eot = jnp.argmax(tokenized_prompts, axis=-1)
    x_eot = _layer_norm(x[jnp.arange(B), eot], ln_f_g, ln_f_b)
    return x_eot @ text_projection


def clip_logits_ref(image_features, text_features, logit_scale):
    img = image_features / jnp.linalg.norm(image_features, axis=-1, keepdims=True)
    txt = text_features / jnp.linalg.norm(text_features, axis=-1, keepdims=True)
    return jnp.exp(logit_scale) * img @ txt.T


# --------------------------------- params -------------------------------------


def init_layer(key, W):
    """f32 math-layout params (weights pre-transposed so kernels do x @ W)."""
    ks = jax.random.split(key, 12)
    s = 0.02
    f32 = jnp.float32
    return (
        1.0 + 0.1 * jax.random.normal(ks[0], (1, W), f32),     # ln_1 gamma
        s * jax.random.normal(ks[1], (1, W), f32),             # ln_1 beta
        s * jax.random.normal(ks[2], (W, 3 * W), f32),         # W_qkv
        s * jax.random.normal(ks[3], (1, 3 * W), f32),         # b_qkv
        s * jax.random.normal(ks[4], (W, W), f32),             # W_out
        s * jax.random.normal(ks[5], (1, W), f32),             # b_out
        1.0 + 0.1 * jax.random.normal(ks[6], (1, W), f32),     # ln_2 gamma
        s * jax.random.normal(ks[7], (1, W), f32),             # ln_2 beta
        s * jax.random.normal(ks[8], (W, 4 * W), f32),         # W_fc
        s * jax.random.normal(ks[9], (1, 4 * W), f32),         # b_fc
        s * jax.random.normal(ks[10], (4 * W, W), f32),        # W_proj
        s * jax.random.normal(ks[11], (1, W), f32),            # b_proj
    )


def pack_layer_for_kernel(p, num_heads):
    """Cast matmul weights to bf16; out-proj stored heads-major (H, Dh, W)."""
    (g1, b1, wqkv, bqkv, wo, bo, g2, b2, wfc, bfc, wpj, bpj) = p
    W = wo.shape[0]
    Dh = W // num_heads
    cd = COMPUTE_DTYPE
    return (g1, b1,
            wqkv.astype(cd), bqkv,
            wo.reshape(num_heads, Dh, W).astype(cd), bo,
            g2, b2,
            wfc.astype(cd), bfc,
            wpj.astype(cd), bpj)


if __name__ == "__main__":
    # toy shapes (real CLIP text tower: S=77, W=512, H=8, L=12, E=512)
    N_CLS, S, W, H, L, E = 8, 8, 32, 4, 2, 16
    N_CTX = 3                       # learned context tokens
    B_IMG = 4                       # image batch
    BLOCK_BATCH = 4                 # sequences per grid step -> grid of 2 steps

    key = jax.random.PRNGKey(0)
    ks = jax.random.split(key, 10)

    ctx = 0.02 * jax.random.normal(ks[0], (N_CTX, W), jnp.float32)
    token_prefix = jax.random.normal(ks[1], (N_CLS, 1, W), jnp.float32)
    token_suffix = jax.random.normal(ks[2], (N_CLS, S - 1 - N_CTX, W), jnp.float32)
    tokenized_prompts = jax.random.randint(ks[3], (N_CLS, S), 0, 100, jnp.int32)
    pos_emb = 0.01 * jax.random.normal(ks[4], (S, W), jnp.float32)
    layer_params = [init_layer(k, W) for k in jax.random.split(ks[5], L)]
    ln_f_g = 1.0 + 0.1 * jax.random.normal(ks[6], (1, W), jnp.float32)
    ln_f_b = 0.02 * jax.random.normal(ks[7], (1, W), jnp.float32)
    text_projection = 0.02 * jax.random.normal(ks[8], (W, E), jnp.float32)
    image_features = jax.random.normal(ks[9], (B_IMG, E), jnp.float32)
    logit_scale = jnp.asarray(1.0, dtype=jnp.float32)

    kernel_layers = [pack_layer_for_kernel(p, H) for p in layer_params]
    text_proj_bf16 = text_projection.astype(COMPUTE_DTYPE)

    logits, text_features = vp_clip_forward(
        image_features, ctx, token_prefix, token_suffix, tokenized_prompts,
        pos_emb, kernel_layers, ln_f_g, ln_f_b, text_proj_bf16, logit_scale,
        H, block_batch=BLOCK_BATCH)
    logits, text_features = jax.block_until_ready((logits, text_features))

    # ---- checks ----
    ctx_b = jnp.broadcast_to(ctx[None], (N_CLS, N_CTX, W))
    prompts = jnp.concatenate([token_prefix, ctx_b, token_suffix], axis=1)
    text_ref = text_encoder_ref(prompts, tokenized_prompts, pos_emb,
                                layer_params, ln_f_g, ln_f_b, text_projection, H)
    # tolerance sized for bf16 MXU operands vs. the pure-f32 reference
    np.testing.assert_allclose(np.asarray(text_features), np.asarray(text_ref),
                               rtol=5e-2, atol=1e-2)
    # logit head checked against the same (kernel) text features to decouple
    # the bf16 text-tower error from the logit-scale amplification
    logits_ref = clip_logits_ref(image_features, text_features, logit_scale)
    np.testing.assert_allclose(np.asarray(logits), np.asarray(logits_ref),
                               rtol=2e-2, atol=5e-2)
    print("KERNEL_OK")
</pallas_src>

<mosaic_0001>
module attributes {stable_mosaic.version = 11 : i64} {
  func.func @block_kernel(%arg0: i32, %arg1: memref<4x8x32xf32, #tpu.memory_space<vmem>>, %arg2: memref<8x32xf32, #tpu.memory_space<vmem>>, %arg3: memref<1x32xf32, #tpu.memory_space<vmem>>, %arg4: memref<1x32xf32, #tpu.memory_space<vmem>>, %arg5: memref<32x96xbf16, #tpu.memory_space<vmem>>, %arg6: memref<1x96xf32, #tpu.memory_space<vmem>>, %arg7: memref<4x8x32xbf16, #tpu.memory_space<vmem>>, %arg8: memref<1x32xf32, #tpu.memory_space<vmem>>, %arg9: memref<1x32xf32, #tpu.memory_space<vmem>>, %arg10: memref<1x32xf32, #tpu.memory_space<vmem>>, %arg11: memref<32x128xbf16, #tpu.memory_space<vmem>>, %arg12: memref<1x128xf32, #tpu.memory_space<vmem>>, %arg13: memref<128x32xbf16, #tpu.memory_space<vmem>>, %arg14: memref<1x32xf32, #tpu.memory_space<vmem>>, %arg15: memref<4x8x32xf32, #tpu.memory_space<vmem>>) attributes {dimension_semantics = [#tpu.dimension_semantics<parallel>], iteration_bounds = array<i64: 2>, scalar_prefetch = 0 : i64, scratch_operands = 0 : i64, tpu.core_type = #tpu.core_type<tc>, window_params = [{transform_indices = @transform_0, window_bounds = array<i64: 4, 8, 32>}, {pipeline_mode = #tpu.pipeline_mode<synchronous>, transform_indices = @transform_1, window_bounds = array<i64: 8, 32>}, {pipeline_mode = #tpu.pipeline_mode<synchronous>, transform_indices = @transform_2, window_bounds = array<i64: 1, 32>}, {pipeline_mode = #tpu.pipeline_mode<synchronous>, transform_indices = @transform_3, window_bounds = array<i64: 1, 32>}, {pipeline_mode = #tpu.pipeline_mode<synchronous>, transform_indices = @transform_4, window_bounds = array<i64: 32, 96>}, {pipeline_mode = #tpu.pipeline_mode<synchronous>, transform_indices = @transform_5, window_bounds = array<i64: 1, 96>}, {pipeline_mode = #tpu.pipeline_mode<synchronous>, transform_indices = @transform_6, window_bounds = array<i64: 4, 8, 32>}, {pipeline_mode = #tpu.pipeline_mode<synchronous>, transform_indices = @transform_7, window_bounds = array<i64: 1, 32>}, {pipeline_mode = #tpu.pipeline_mode<synchronous>, transform_indices = @transform_8, window_bounds = array<i64: 1, 32>}, {pipeline_mode = #tpu.pipeline_mode<synchronous>, transform_indices = @transform_9, window_bounds = array<i64: 1, 32>}, {pipeline_mode = #tpu.pipeline_mode<synchronous>, transform_indices = @transform_10, window_bounds = array<i64: 32, 128>}, {pipeline_mode = #tpu.pipeline_mode<synchronous>, transform_indices = @transform_11, window_bounds = array<i64: 1, 128>}, {pipeline_mode = #tpu.pipeline_mode<synchronous>, transform_indices = @transform_12, window_bounds = array<i64: 128, 32>}, {pipeline_mode = #tpu.pipeline_mode<synchronous>, transform_indices = @transform_13, window_bounds = array<i64: 1, 32>}, {transform_indices = @transform_14, window_bounds = array<i64: 4, 8, 32>}]} {
    %c0 = arith.constant 0 : index
    %c0_0 = arith.constant 0 : index
    %c0_1 = arith.constant 0 : index
    %0 = vector.load %arg1[%c0, %c0_0, %c0_1] : memref<4x8x32xf32, #tpu.memory_space<vmem>>, vector<4x8x32xf32>
    %c0_2 = arith.constant 0 : index
    %c0_3 = arith.constant 0 : index
    %1 = vector.load %arg2[%c0_2, %c0_3] : memref<8x32xf32, #tpu.memory_space<vmem>>, vector<8x32xf32>
    %2 = vector.shape_cast %1 : vector<8x32xf32> to vector<1x8x32xf32>
    %3 = vector.broadcast %2 : vector<1x8x32xf32> to vector<4x8x32xf32>
    %4 = arith.addf %0, %3 : vector<4x8x32xf32>
    %5 = vector.shape_cast %4 : vector<4x8x32xf32> to vector<32x32xf32>
    %c0_4 = arith.constant 0 : index
    %c0_5 = arith.constant 0 : index
    %6 = vector.load %arg3[%c0_4, %c0_5] : memref<1x32xf32, #tpu.memory_space<vmem>>, vector<1x32xf32>
    %c0_6 = arith.constant 0 : index
    %c0_7 = arith.constant 0 : index
    %7 = vector.load %arg4[%c0_6, %c0_7] : memref<1x32xf32, #tpu.memory_space<vmem>>, vector<1x32xf32>
    %cst = arith.constant dense<0.000000e+00> : vector<32xf32>
    %8 = vector.multi_reduction <add>, %5, %cst [1] : vector<32x32xf32> to vector<32xf32>
    %9 = vector.shape_cast %8 : vector<32xf32> to vector<32x1xf32>
    %cst_8 = arith.constant 3.200000e+01 : f32
    %10 = vector.broadcast %cst_8 : f32 to vector<32x1xf32>
    %11 = arith.divf %9, %10 : vector<32x1xf32>
    %12 = vector.broadcast %11 : vector<32x1xf32> to vector<32x32xf32>
    %13 = arith.subf %5, %12 : vector<32x32xf32>
    %14 = arith.mulf %13, %13 : vector<32x32xf32>
    %cst_9 = arith.constant dense<0.000000e+00> : vector<32xf32>
    %15 = vector.multi_reduction <add>, %14, %cst_9 [1] : vector<32x32xf32> to vector<32xf32>
    %16 = vector.shape_cast %15 : vector<32xf32> to vector<32x1xf32>
    %cst_10 = arith.constant 3.200000e+01 : f32
    %17 = vector.broadcast %cst_10 : f32 to vector<32x1xf32>
    %18 = arith.divf %16, %17 : vector<32x1xf32>
    %19 = vector.broadcast %11 : vector<32x1xf32> to vector<32x32xf32>
    %20 = arith.subf %5, %19 : vector<32x32xf32>
    %cst_11 = arith.constant 9.99999974E-6 : f32
    %21 = vector.broadcast %cst_11 : f32 to vector<32x1xf32>
    %22 = arith.addf %18, %21 : vector<32x1xf32>
    %23 = math.rsqrt %22 : vector<32x1xf32>
    %24 = vector.broadcast %23 : vector<32x1xf32> to vector<32x32xf32>
    %25 = arith.mulf %20, %24 : vector<32x32xf32>
    %26 = vector.broadcast %6 : vector<1x32xf32> to vector<32x32xf32>
    %27 = arith.mulf %25, %26 : vector<32x32xf32>
    %28 = vector.broadcast %7 : vector<1x32xf32> to vector<32x32xf32>
    %29 = arith.addf %27, %28 : vector<32x32xf32>
    %30 = arith.truncf %29 : vector<32x32xf32> to vector<32x32xbf16>
    %c0_12 = arith.constant 0 : index
    %c0_13 = arith.constant 0 : index
    %31 = vector.load %arg5[%c0_12, %c0_13] : memref<32x96xbf16, #tpu.memory_space<vmem>>, vector<32x96xbf16>
    %cst_14 = arith.constant dense<0.000000e+00> : vector<32x96xf32>
    %32 = tpu.matmul %30, %31, %cst_14 {dimension_numbers = #tpu.dot_dimension_numbers<[1], [0], [0], [1], [0, 0, 1, 1], [], []>} : vector<32x32xbf16>, vector<32x96xbf16>, vector<32x96xf32> -> vector<32x96xf32>
    %c0_15 = arith.constant 0 : index
    %c0_16 = arith.constant 0 : index
    %33 = vector.load %arg6[%c0_15, %c0_16] : memref<1x96xf32, #tpu.memory_space<vmem>>, vector<1x96xf32>
    %34 = vector.broadcast %33 : vector<1x96xf32> to vector<32x96xf32>
    %35 = arith.addf %32, %34 : vector<32x96xf32>
    %36 = vector.shape_cast %35 : vector<32x96xf32> to vector<32x12x8xf32>
    %37 = tpu.transpose %36, [1, 0, 2] : vector<32x12x8xf32> -> vector<12x32x8xf32>
    %38 = vector.extract_strided_slice %37 {offsets = [0, 0, 0], sizes = [4, 32, 8], strides = [1, 1, 1]} : vector<12x32x8xf32> to vector<4x32x8xf32>
    %39 = vector.shape_cast %38 : vector<4x32x8xf32> to vector<16x8x8xf32>
    %40 = vector.extract_strided_slice %37 {offsets = [4, 0, 0], sizes = [4, 32, 8], strides = [1, 1, 1]} : vector<12x32x8xf32> to vector<4x32x8xf32>
    %41 = vector.shape_cast %40 : vector<4x32x8xf32> to vector<16x8x8xf32>
    %42 = vector.extract_strided_slice %37 {offsets = [8, 0, 0], sizes = [4, 32, 8], strides = [1, 1, 1]} : vector<12x32x8xf32> to vector<4x32x8xf32>
    %43 = vector.shape_cast %42 : vector<4x32x8xf32> to vector<16x8x8xf32>
    %44 = tpu.iota {dimensions = array<i32: 0>} : vector<8x8xi32>
    %45 = tpu.iota {dimensions = array<i32: 1>} : vector<8x8xi32>
    %46 = arith.cmpi sle, %45, %44 : vector<8x8xi32>
    %cst_17 = arith.constant 0.000000e+00 : f32
    %cst_18 = arith.constant -1.000000e+30 : f32
    %47 = vector.broadcast %cst_17 : f32 to vector<8x8xf32>
    %48 = vector.broadcast %cst_18 : f32 to vector<8x8xf32>
    %49 = arith.select %46, %47, %48 : vector<8x8xi1>, vector<8x8xf32>
    %50 = arith.truncf %39 : vector<16x8x8xf32> to vector<16x8x8xbf16>
    %51 = arith.truncf %41 : vector<16x8x8xf32> to vector<16x8x8xbf16>
    "tpu.trace_start"() <{level = 10 : i32, message = "bqd,bkd->bqk"}> : () -> ()
    %cst_19 = arith.constant dense<0.000000e+00> : vector<16x8x8xf32>
    %52 = tpu.matmul %50, %51, %cst_19 {dimension_numbers = #tpu.dot_dimension_numbers<[2], [2], [1], [1], [0, 0, 0, 1, 1, 1], [0], [0]>} : vector<16x8x8xbf16>, vector<16x8x8xbf16>, vector<16x8x8xf32> -> vector<16x8x8xf32>
    "tpu.trace_stop"() : () -> ()
    %cst_20 = arith.constant 0.353553385 : f32
    %53 = vector.broadcast %cst_20 : f32 to vector<16x8x8xf32>
    %54 = arith.mulf %52, %53 : vector<16x8x8xf32>
    %55 = vector.shape_cast %49 : vector<8x8xf32> to vector<1x8x8xf32>
    %56 = vector.broadcast %55 : vector<1x8x8xf32> to vector<16x8x8xf32>
    %57 = arith.addf %54, %56 : vector<16x8x8xf32>
    %cst_21 = arith.constant dense<0xFF800000> : vector<16x8xf32>
    %58 = vector.multi_reduction <maximumf>, %57, %cst_21 [2] : vector<16x8x8xf32> to vector<16x8xf32>
    %59 = vector.shape_cast %58 : vector<16x8xf32> to vector<16x8x1xf32>
    %60 = vector.broadcast %59 : vector<16x8x1xf32> to vector<16x8x8xf32>
    %61 = arith.subf %57, %60 : vector<16x8x8xf32>
    %62 = math.exp %61 : vector<16x8x8xf32>
    %cst_22 = arith.constant dense<0.000000e+00> : vector<16x8xf32>
    %63 = vector.multi_reduction <add>, %62, %cst_22 [2] : vector<16x8x8xf32> to vector<16x8xf32>
    %64 = vector.shape_cast %63 : vector<16x8xf32> to vector<16x8x1xf32>
    %65 = tpu.reciprocal %64 {approx = true} : vector<16x8x1xf32> -> vector<16x8x1xf32>
    %66 = vector.broadcast %65 : vector<16x8x1xf32> to vector<16x8x8xf32>
    %67 = arith.mulf %62, %66 : vector<16x8x8xf32>
    %68 = arith.truncf %67 : vector<16x8x8xf32> to vector<16x8x8xbf16>
    %69 = arith.truncf %43 : vector<16x8x8xf32> to vector<16x8x8xbf16>
    "tpu.trace_start"() <{level = 10 : i32, message = "bqk,bkd->bqd"}> : () -> ()
    %cst_23 = arith.constant dense<0.000000e+00> : vector<16x8x8xf32>
    %70 = tpu.matmul %68, %69, %cst_23 {dimension_numbers = #tpu.dot_dimension_numbers<[2], [1], [1], [2], [0, 0, 0, 1, 1, 2], [0], [0]>} : vector<16x8x8xbf16>, vector<16x8x8xbf16>, vector<16x8x8xf32> -> vector<16x8x8xf32>
    "tpu.trace_stop"() : () -> ()
    %71 = vector.shape_cast %70 : vector<16x8x8xf32> to vector<4x32x8xf32>
    %72 = arith.truncf %71 : vector<4x32x8xf32> to vector<4x32x8xbf16>
    %c0_24 = arith.constant 0 : index
    %c0_25 = arith.constant 0 : index
    %c0_26 = arith.constant 0 : index
    %73 = vector.load %arg7[%c0_24, %c0_25, %c0_26] : memref<4x8x32xbf16, #tpu.memory_space<vmem>>, vector<4x8x32xbf16>
    "tpu.trace_start"() <{level = 10 : i32, message = "hnd,hdw->hnw"}> : () -> ()
    %cst_27 = arith.constant dense<0.000000e+00> : vector<4x32x32xf32>
    %74 = tpu.matmul %72, %73, %cst_27 {dimension_numbers = #tpu.dot_dimension_numbers<[2], [1], [1], [2], [0, 0, 0, 1, 1, 2], [0], [0]>} : vector<4x32x8xbf16>, vector<4x8x32xbf16>, vector<4x32x32xf32> -> vector<4x32x32xf32>
    "tpu.trace_stop"() : () -> ()
    %cst_28 = arith.constant dense<0.000000e+00> : vector<32x32xf32>
    %75 = vector.multi_reduction <add>, %74, %cst_28 [0] : vector<4x32x32xf32> to vector<32x32xf32>
    %76 = arith.addf %5, %75 : vector<32x32xf32>
    %c0_29 = arith.constant 0 : index
    %c0_30 = arith.constant 0 : index
    %77 = vector.load %arg8[%c0_29, %c0_30] : memref<1x32xf32, #tpu.memory_space<vmem>>, vector<1x32xf32>
    %78 = vector.broadcast %77 : vector<1x32xf32> to vector<32x32xf32>
    %79 = arith.addf %76, %78 : vector<32x32xf32>
    %c0_31 = arith.constant 0 : index
    %c0_32 = arith.constant 0 : index
    %80 = vector.load %arg9[%c0_31, %c0_32] : memref<1x32xf32, #tpu.memory_space<vmem>>, vector<1x32xf32>
    %c0_33 = arith.constant 0 : index
    %c0_34 = arith.constant 0 : index
    %81 = vector.load %arg10[%c0_33, %c0_34] : memref<1x32xf32, #tpu.memory_space<vmem>>, vector<1x32xf32>
    %cst_35 = arith.constant dense<0.000000e+00> : vector<32xf32>
    %82 = vector.multi_reduction <add>, %79, %cst_35 [1] : vector<32x32xf32> to vector<32xf32>
    %83 = vector.shape_cast %82 : vector<32xf32> to vector<32x1xf32>
    %cst_36 = arith.constant 3.200000e+01 : f32
    %84 = vector.broadcast %cst_36 : f32 to vector<32x1xf32>
    %85 = arith.divf %83, %84 : vector<32x1xf32>
    %86 = vector.broadcast %85 : vector<32x1xf32> to vector<32x32xf32>
    %87 = arith.subf %79, %86 : vector<32x32xf32>
    %88 = arith.mulf %87, %87 : vector<32x32xf32>
    %cst_37 = arith.constant dense<0.000000e+00> : vector<32xf32>
    %89 = vector.multi_reduction <add>, %88, %cst_37 [1] : vector<32x32xf32> to vector<32xf32>
    %90 = vector.shape_cast %89 : vector<32xf32> to vector<32x1xf32>
    %cst_38 = arith.constant 3.200000e+01 : f32
    %91 = vector.broadcast %cst_38 : f32 to vector<32x1xf32>
    %92 = arith.divf %90, %91 : vector<32x1xf32>
    %93 = vector.broadcast %85 : vector<32x1xf32> to vector<32x32xf32>
    %94 = arith.subf %79, %93 : vector<32x32xf32>
    %cst_39 = arith.constant 9.99999974E-6 : f32
    %95 = vector.broadcast %cst_39 : f32 to vector<32x1xf32>
    %96 = arith.addf %92, %95 : vector<32x1xf32>
    %97 = math.rsqrt %96 : vector<32x1xf32>
    %98 = vector.broadcast %97 : vector<32x1xf32> to vector<32x32xf32>
    %99 = arith.mulf %94, %98 : vector<32x32xf32>
    %100 = vector.broadcast %80 : vector<1x32xf32> to vector<32x32xf32>
    %101 = arith.mulf %99, %100 : vector<32x32xf32>
    %102 = vector.broadcast %81 : vector<1x32xf32> to vector<32x32xf32>
    %103 = arith.addf %101, %102 : vector<32x32xf32>
    %104 = arith.truncf %103 : vector<32x32xf32> to vector<32x32xbf16>
    %c0_40 = arith.constant 0 : index
    %c0_41 = arith.constant 0 : index
    %105 = vector.load %arg11[%c0_40, %c0_41] : memref<32x128xbf16, #tpu.memory_space<vmem>>, vector<32x128xbf16>
    %cst_42 = arith.constant dense<0.000000e+00> : vector<32x128xf32>
    %106 = tpu.matmul %104, %105, %cst_42 {dimension_numbers = #tpu.dot_dimension_numbers<[1], [0], [0], [1], [0, 0, 1, 1], [], []>} : vector<32x32xbf16>, vector<32x128xbf16>, vector<32x128xf32> -> vector<32x128xf32>
    %c0_43 = arith.constant 0 : index
    %c0_44 = arith.constant 0 : index
    %107 = vector.load %arg12[%c0_43, %c0_44] : memref<1x128xf32, #tpu.memory_space<vmem>>, vector<1x128xf32>
    %108 = vector.broadcast %107 : vector<1x128xf32> to vector<32x128xf32>
    %109 = arith.addf %106, %108 : vector<32x128xf32>
    %cst_45 = arith.constant 1.702000e+00 : f32
    %110 = vector.broadcast %cst_45 : f32 to vector<32x128xf32>
    %111 = arith.mulf %110, %109 : vector<32x128xf32>
    %112 = arith.negf %111 : vector<32x128xf32>
    %113 = math.exp %112 : vector<32x128xf32>
    %cst_46 = arith.constant 1.000000e+00 : f32
    %114 = vector.broadcast %cst_46 : f32 to vector<32x128xf32>
    %115 = arith.addf %114, %113 : vector<32x128xf32>
    %116 = arith.divf %114, %115 : vector<32x128xf32>
    %117 = arith.mulf %109, %116 : vector<32x128xf32>
    %118 = arith.truncf %117 : vector<32x128xf32> to vector<32x128xbf16>
    %c0_47 = arith.constant 0 : index
    %c0_48 = arith.constant 0 : index
    %119 = vector.load %arg13[%c0_47, %c0_48] : memref<128x32xbf16, #tpu.memory_space<vmem>>, vector<128x32xbf16>
    %cst_49 = arith.constant dense<0.000000e+00> : vector<32x32xf32>
    %120 = tpu.matmul %118, %119, %cst_49 {dimension_numbers = #tpu.dot_dimension_numbers<[1], [0], [0], [1], [0, 0, 1, 1], [], []>} : vector<32x128xbf16>, vector<128x32xbf16>, vector<32x32xf32> -> vector<32x32xf32>
    %c0_50 = arith.constant 0 : index
    %c0_51 = arith.constant 0 : index
    %121 = vector.load %arg14[%c0_50, %c0_51] : memref<1x32xf32, #tpu.memory_space<vmem>>, vector<1x32xf32>
    %122 = vector.broadcast %121 : vector<1x32xf32> to vector<32x32xf32>
    %123 = arith.addf %120, %122 : vector<32x32xf32>
    %124 = arith.addf %79, %123 : vector<32x32xf32>
    %125 = vector.shape_cast %124 : vector<32x32xf32> to vector<4x8x32xf32>
    %c0_52 = arith.constant 0 : index
    %c0_53 = arith.constant 0 : index
    %c0_54 = arith.constant 0 : index
    %126 = vector.load %arg15[%c0_52, %c0_53, %c0_54] : memref<4x8x32xf32, #tpu.memory_space<vmem>>, vector<4x8x32xf32>
    tpu.vector_store %arg15[%c0_52, %c0_53, %c0_54], %125 {strides = array<i32>} : memref<4x8x32xf32, #tpu.memory_space<vmem>>, vector<4x8x32xf32>,
    return
  }
  func.func @transform_0(%arg0: i32) -> (i32, i32, i32) {
    %c0_i32 = arith.constant 0 : i32
    %c0_i32_0 = arith.constant 0 : i32
    %c0_i32_1 = arith.constant 0 : i32
    return %arg0, %c0_i32, %c0_i32_0 : i32, i32, i32
  }
  func.func @transform_1(%arg0: i32) -> (i32, i32) {
    %c0_i32 = arith.constant 0 : i32
    %c0_i32_0 = arith.constant 0 : i32
    %c0_i32_1 = arith.constant 0 : i32
    return %c0_i32, %c0_i32_0 : i32, i32
  }
  func.func @transform_2(%arg0: i32) -> (i32, i32) {
    %c0_i32 = arith.constant 0 : i32
    %c0_i32_0 = arith.constant 0 : i32
    %c0_i32_1 = arith.constant 0 : i32
    return %c0_i32, %c0_i32_0 : i32, i32
  }
  func.func @transform_3(%arg0: i32) -> (i32, i32) {
    %c0_i32 = arith.constant 0 : i32
    %c0_i32_0 = arith.constant 0 : i32
    %c0_i32_1 = arith.constant 0 : i32
    return %c0_i32, %c0_i32_0 : i32, i32
  }
  func.func @transform_4(%arg0: i32) -> (i32, i32) {
    %c0_i32 = arith.constant 0 : i32
    %c0_i32_0 = arith.constant 0 : i32
    %c0_i32_1 = arith.constant 0 : i32
    return %c0_i32, %c0_i32_0 : i32, i32
  }
  func.func @transform_5(%arg0: i32) -> (i32, i32) {
    %c0_i32 = arith.constant 0 : i32
    %c0_i32_0 = arith.constant 0 : i32
    %c0_i32_1 = arith.constant 0 : i32
    return %c0_i32, %c0_i32_0 : i32, i32
  }
  func.func @transform_6(%arg0: i32) -> (i32, i32, i32) {
    %c0_i32 = arith.constant 0 : i32
    %c0_i32_0 = arith.constant 0 : i32
    %c0_i32_1 = arith.constant 0 : i32
    %c0_i32_2 = arith.constant 0 : i32
    return %c0_i32, %c0_i32_0, %c0_i32_1 : i32, i32, i32
  }
  func.func @transform_7(%arg0: i32) -> (i32, i32) {
    %c0_i32 = arith.constant 0 : i32
    %c0_i32_0 = arith.constant 0 : i32
    %c0_i32_1 = arith.constant 0 : i32
    return %c0_i32, %c0_i32_0 : i32, i32
  }
  func.func @transform_8(%arg0: i32) -> (i32, i32) {
    %c0_i32 = arith.constant 0 : i32
    %c0_i32_0 = arith.constant 0 : i32
    %c0_i32_1 = arith.constant 0 : i32
    return %c0_i32, %c0_i32_0 : i32, i32
  }
  func.func @transform_9(%arg0: i32) -> (i32, i32) {
    %c0_i32 = arith.constant 0 : i32
    %c0_i32_0 = arith.constant 0 : i32
    %c0_i32_1 = arith.constant 0 : i32
    return %c0_i32, %c0_i32_0 : i32, i32
  }
  func.func @transform_10(%arg0: i32) -> (i32, i32) {
    %c0_i32 = arith.constant 0 : i32
    %c0_i32_0 = arith.constant 0 : i32
    %c0_i32_1 = arith.constant 0 : i32
    return %c0_i32, %c0_i32_0 : i32, i32
  }
  func.func @transform_11(%arg0: i32) -> (i32, i32) {
    %c0_i32 = arith.constant 0 : i32
    %c0_i32_0 = arith.constant 0 : i32
    %c0_i32_1 = arith.constant 0 : i32
    return %c0_i32, %c0_i32_0 : i32, i32
  }
  func.func @transform_12(%arg0: i32) -> (i32, i32) {
    %c0_i32 = arith.constant 0 : i32
    %c0_i32_0 = arith.constant 0 : i32
    %c0_i32_1 = arith.constant 0 : i32
    return %c0_i32, %c0_i32_0 : i32, i32
  }
  func.func @transform_13(%arg0: i32) -> (i32, i32) {
    %c0_i32 = arith.constant 0 : i32
    %c0_i32_0 = arith.constant 0 : i32
    %c0_i32_1 = arith.constant 0 : i32
    return %c0_i32, %c0_i32_0 : i32, i32
  }
  func.func @transform_14(%arg0: i32) -> (i32, i32, i32) {
    %c0_i32 = arith.constant 0 : i32
    %c0_i32_0 = arith.constant 0 : i32
    %c0_i32_1 = arith.constant 0 : i32
    return %arg0, %c0_i32, %c0_i32_0 : i32, i32, i32
  }
}

</mosaic_0001>

<llo_original>
// kernel: tpu_custom_call.1
$region0: #{tpu_custom_call.1}
  #allocation0 [shape = 'u32[]', space=smem, size = 0x4, offset = 0x4, fixed_abs, tag = 'smem constant byte address 0x4 - core index']
  #allocation1 [shape = 'u32[144,128]{1,0:T(1,128)}', space=vmem, size = 0x12000, scoped, tag = 'internal scratch']
  %s0 = inlined_call_operand.vmem [shape: f32[8,8,32], index: 0, kind: input, shape index: {}]
  %s1 = inlined_call_operand.hbm [shape: f32[8,32], index: 1, kind: input, shape index: {}]
  %s2 = inlined_call_operand.vmem [shape: f32[1,32], index: 2, kind: input, shape index: {}]
  %s3 = inlined_call_operand.vmem [shape: f32[1,32], index: 3, kind: input, shape index: {}]
  %s4 = inlined_call_operand.vmem [shape: bf16[32,96], index: 4, kind: input, shape index: {}]
  %s5 = inlined_call_operand.hbm [shape: f32[1,96], index: 5, kind: input, shape index: {}]
  %s6 = inlined_call_operand.hbm [shape: bf16[4,8,32], index: 6, kind: input, shape index: {}]
  %s7 = inlined_call_operand.hbm [shape: f32[1,32], index: 7, kind: input, shape index: {}]
  %s8 = inlined_call_operand.hbm [shape: f32[1,32], index: 8, kind: input, shape index: {}]
  %s9 = inlined_call_operand.hbm [shape: f32[1,32], index: 9, kind: input, shape index: {}]
  %s10 = inlined_call_operand.vmem [shape: bf16[32,128], index: 10, kind: input, shape index: {}]
  %s11 = inlined_call_operand.vmem [shape: f32[1,128], index: 11, kind: input, shape index: {}]
  %s12 = inlined_call_operand.vmem [shape: bf16[128,32], index: 12, kind: input, shape index: {}]
  %s13 = inlined_call_operand.vmem [shape: f32[1,32], index: 13, kind: input, shape index: {}]
  %s14 = inlined_call_operand.hbm [shape: f32[8,8,32], index: 14, kind: output, shape index: {}]
  %s15 = sld [smem:[#allocation0]]
  $region113: #{tpu_custom_call.1} parent=0
    _
  %s17 = ssub.s32 1, %s15
  %s18 = scalar_select 0, %s17, %s15
  $region1: #{tpu_custom_call.1} parent=0
    #allocation2 [shape = 'u8[4096]{0}', space=vmem, size = 0x1000, scoped, tag = 'input window, operand 1, single buffered']
    #allocation3 [shape = 's32[2]{0}', space=sflag, size = 0x8, scoped, tag = 'scoped memory for tpu_custom_call.1']
    #allocation4 [shape = 's32[2]{0}', space=sflag, size = 0x8, scoped, tag = 'scoped memory for tpu_custom_call.1']
    #allocation5 [shape = 'u8[512]{0}', space=vmem, size = 0x400, scoped, tag = 'input window, operand 5, single buffered']
    #allocation6 [shape = 's32[1]{0}', space=sflag, size = 0x4, scoped, tag = 'scoped memory for tpu_custom_call.1']
    #allocation7 [shape = 'u8[8192]{0}', space=vmem, size = 0x2000, scoped, tag = 'input window, operand 6, single buffered']
    #allocation8 [shape = 'u8[512]{0}', space=vmem, size = 0x400, scoped, tag = 'input window, operand 7, single buffered']
    #allocation9 [shape = 's32[1]{0}', space=sflag, size = 0x4, scoped, tag = 'scoped memory for tpu_custom_call.1']
    #allocation10 [shape = 'u8[512]{0}', space=vmem, size = 0x400, scoped, tag = 'input window, operand 8, single buffered']
    #allocation11 [shape = 'u8[512]{0}', space=vmem, size = 0x400, scoped, tag = 'input window, operand 9, single buffered']
    #allocation12 [shape = 's32[1]{0}', space=sflag, size = 0x4, scoped, tag = 'scoped memory for tpu_custom_call.1']
    #allocation13 [shape = 'u8[32768]{0}', space=vmem, size = 0x8000, scoped, tag = 'output window, operand 0']
    %19 = vsyncpa [#allocation3], 0
    %20 = vsyncpa [#allocation6], 0
    %21 = vsyncpa [#allocation9], 0
    %22 = vsyncpa [#allocation12], 0
    %23 = vsyncpa [#allocation4], 0
    %s24 = scalar_lea.sflag [#allocation4], 1
    %25 = vsyncpa %s24, 0
    loop: start=0, step=1, limit=4
    $region2: #{tpu_custom_call.1} parent=1 // loop_pre_header
      _
    $region3: #{tpu_custom_call.1} parent=1 // loop_header
      %s27 = sphi 0, %s31
      %p28 = scmp.ge.s32.totalorder %s27, 4
      %s37 = sphi 0, %s39
      %s40 = sphi 0, %s37
      %s41 = sphi 0, %s40
      %s57 = sphi 0, %s41
      %s61 = sphi 0, %s61
      %s63 = sphi 0, %s61
      %s64 = sphi 0, %s63
      %s78 = sphi 0, %s64
      %s82 = sphi 0, %s82
      %s84 = sphi 0, %s82
      %s85 = sphi 0, %s84
      %s99 = sphi 0, %s85
      %s103 = sphi 0, %s103
      %s105 = sphi 0, %s103
      %s106 = sphi 0, %s105
      %s120 = sphi 0, %s106
      %s124 = sphi 0, %s124
      %s126 = sphi 0, %s124
      %s127 = sphi 0, %s126
      %s141 = sphi 0, %s127
      %s145 = sphi 0, %s145
      %s147 = sphi 0, %s145
      %s148 = sphi 0, %s147
      %s162 = sphi 0, %s148
      %s166 = sphi 0, %s166
      %s168 = sphi 0, %s166
      %s169 = sphi 0, %s168
      %s183 = sphi 0, %s169
      %s187 = sphi 0, %s187
      %s189 = sphi 0, %s187
      %s190 = sphi 0, %s189
      %s204 = sphi 0, %s190
      %s208 = sphi 0, %s208
      %s210 = sphi 0, %s208
      %s211 = sphi 0, %s210
      %s225 = sphi 0, %s211
      %s229 = sphi 0, %s229
      %s231 = sphi 0, %s229
      %s232 = sphi 0, %s231
      %s246 = sphi 0, %s232
      %s250 = sphi 0, %s250
      %s252 = sphi 0, %s250
      %s253 = sphi 0, %s252
      %s267 = sphi 0, %s253
      %s271 = sphi 0, %s271
      %s273 = sphi 0, %s271
      %s274 = sphi 0, %s273
      %s288 = sphi 0, %s274
      %s292 = sphi 0, %s292
      %s294 = sphi 0, %s292
      %s295 = sphi 0, %s294
      %s309 = sphi 0, %s295
      %s313 = sphi 0, %s313
      %s315 = sphi 0, %s313
      %s316 = sphi 0, %s315
      %s330 = sphi 0, %s316
      %s336 = sphi 0, %s338
      %s339 = sphi 0, %s336
      %s340 = sphi 0, %s339
      %s356 = sphi 0, %s340
    $region4: #{tpu_custom_call.1} parent=1 // loop_header_branch
      %30 = sbr.rel (%p28) target = $region8
    $region5: #{tpu_custom_call.1} parent=1 // loop_body
      %s32 = ssub.s32 %s27, 1
      %s33 = ssub.s32 %s27, 2
      %s34 = sadd.s32 %s27, 1
      %s35 = ssub.s32 %s27, %s34
      %p36 = scmp.eq.s32.totalorder %s35, 0
      %s38 = sadd.s32 %s37, 1
      %s39 = scalar_select %p36, %s37, %s38
      %p42 = pneg %p36
      %p43 = scmp.eq.s32.totalorder %s27, 1
      %p44 = por %p42, %p43
      %p45 = scmp.ne.s32.totalorder %s37, %s40
      %p46 = scmp.eq.s32.totalorder %s27, 0
      %p47 = por %p45, %p46
      %p48 = scmp.ne.s32.totalorder %s37, %s40
      %p49 = scmp.eq.s32.totalorder %s32, 1
      %p50 = por %p48, %p49
      %p51 = scmp.ne.s32.totalorder %s40, %s41
      %p52 = scmp.eq.s32.totalorder %s32, 0
      %p53 = por %p51, %p52
      %p54 = scmp.ne.s32.totalorder %s40, %s41
      %p55 = scmp.eq.s32.totalorder %s33, 1
      %p56 = por %p54, %p55
      %p58 = scmp.ne.s32.totalorder %s41, %s57
      %p59 = scmp.eq.s32.totalorder %s33, 0
      %p60 = por %p58, %p59
      %s62 = sadd.s32 %s61, 1
      %p65 = scmp.eq.s32.totalorder %s27, 1
      %p66 = scmp.ne.s32.totalorder %s61, %s63
      %p67 = scmp.eq.s32.totalorder %s27, 0
      %p68 = por %p66, %p67
      %p69 = scmp.ne.s32.totalorder %s61, %s63
      %p70 = scmp.eq.s32.totalorder %s32, 1
      %p71 = por %p69, %p70
      %p72 = scmp.ne.s32.totalorder %s63, %s64
      %p73 = scmp.eq.s32.totalorder %s32, 0
      %p74 = por %p72, %p73
      %p75 = scmp.ne.s32.totalorder %s63, %s64
      %p76 = scmp.eq.s32.totalorder %s33, 1
      %p77 = por %p75, %p76
      %p79 = scmp.ne.s32.totalorder %s64, %s78
      %p80 = scmp.eq.s32.totalorder %s33, 0
      %p81 = por %p79, %p80
      %s83 = sadd.s32 %s82, 1
      %p86 = scmp.eq.s32.totalorder %s27, 1
      %p87 = scmp.ne.s32.totalorder %s82, %s84
      %p88 = scmp.eq.s32.totalorder %s27, 0
      %p89 = por %p87, %p88
      %p90 = scmp.ne.s32.totalorder %s82, %s84
      %p91 = scmp.eq.s32.totalorder %s32, 1
      %p92 = por %p90, %p91
      %p93 = scmp.ne.s32.totalorder %s84, %s85
      %p94 = scmp.eq.s32.totalorder %s32, 0
      %p95 = por %p93, %p94
      %p96 = scmp.ne.s32.totalorder %s84, %s85
      %p97 = scmp.eq.s32.totalorder %s33, 1
      %p98 = por %p96, %p97
      %p100 = scmp.ne.s32.totalorder %s85, %s99
      %p101 = scmp.eq.s32.totalorder %s33, 0
      %p102 = por %p100, %p101
      %s104 = sadd.s32 %s103, 1
      %p107 = scmp.eq.s32.totalorder %s27, 1
      %p108 = scmp.ne.s32.totalorder %s103, %s105
      %p109 = scmp.eq.s32.totalorder %s27, 0
      %p110 = por %p108, %p109
      %p111 = scmp.ne.s32.totalorder %s103, %s105
      %p112 = scmp.eq.s32.totalorder %s32, 1
      %p113 = por %p111, %p112
      %p114 = scmp.ne.s32.totalorder %s105, %s106
      %p115 = scmp.eq.s32.totalorder %s32, 0
      %p116 = por %p114, %p115
      %p117 = scmp.ne.s32.totalorder %s105, %s106
      %p118 = scmp.eq.s32.totalorder %s33, 1
      %p119 = por %p117, %p118
      %p121 = scmp.ne.s32.totalorder %s106, %s120
      %p122 = scmp.eq.s32.totalorder %s33, 0
      %p123 = por %p121, %p122
      %s125 = sadd.s32 %s124, 1
      %p128 = scmp.eq.s32.totalorder %s27, 1
      %p129 = scmp.ne.s32.totalorder %s124, %s126
      %p130 = scmp.eq.s32.totalorder %s27, 0
      %p131 = por %p129, %p130
      %p132 = scmp.ne.s32.totalorder %s124, %s126
      %p133 = scmp.eq.s32.totalorder %s32, 1
      %p134 = por %p132, %p133
      %p135 = scmp.ne.s32.totalorder %s126, %s127
      %p136 = scmp.eq.s32.totalorder %s32, 0
      %p137 = por %p135, %p136
      %p138 = scmp.ne.s32.totalorder %s126, %s127
      %p139 = scmp.eq.s32.totalorder %s33, 1
      %p140 = por %p138, %p139
      %p142 = scmp.ne.s32.totalorder %s127, %s141
      %p143 = scmp.eq.s32.totalorder %s33, 0
      %p144 = por %p142, %p143
      %s146 = sadd.s32 %s145, 1
      %p149 = scmp.eq.s32.totalorder %s27, 1
      %p150 = scmp.ne.s32.totalorder %s145, %s147
      %p151 = scmp.eq.s32.totalorder %s27, 0
      %p152 = por %p150, %p151
      %p153 = scmp.ne.s32.totalorder %s145, %s147
      %p154 = scmp.eq.s32.totalorder %s32, 1
      %p155 = por %p153, %p154
      %p156 = scmp.ne.s32.totalorder %s147, %s148
      %p157 = scmp.eq.s32.totalorder %s32, 0
      %p158 = por %p156, %p157
      %p159 = scmp.ne.s32.totalorder %s147, %s148
      %p160 = scmp.eq.s32.totalorder %s33, 1
      %p161 = por %p159, %p160
      %p163 = scmp.ne.s32.totalorder %s148, %s162
      %p164 = scmp.eq.s32.totalorder %s33, 0
      %p165 = por %p163, %p164
      %s167 = sadd.s32 %s166, 1
      %p170 = scmp.eq.s32.totalorder %s27, 1
      %p171 = scmp.ne.s32.totalorder %s166, %s168
      %p172 = scmp.eq.s32.totalorder %s27, 0
      %p173 = por %p171, %p172
      %p174 = scmp.ne.s32.totalorder %s166, %s168
      %p175 = scmp.eq.s32.totalorder %s32, 1
      %p176 = por %p174, %p175
      %p177 = scmp.ne.s32.totalorder %s168, %s169
      %p178 = scmp.eq.s32.totalorder %s32, 0
      %p179 = por %p177, %p178
      %p180 = scmp.ne.s32.totalorder %s168, %s169
      %p181 = scmp.eq.s32.totalorder %s33, 1
      %p182 = por %p180, %p181
      %p184 = scmp.ne.s32.totalorder %s169, %s183
      %p185 = scmp.eq.s32.totalorder %s33, 0
      %p186 = por %p184, %p185
      %s188 = sadd.s32 %s187, 1
      %p191 = scmp.eq.s32.totalorder %s27, 1
      %p192 = scmp.ne.s32.totalorder %s187, %s189
      %p193 = scmp.eq.s32.totalorder %s27, 0
      %p194 = por %p192, %p193
      %p195 = scmp.ne.s32.totalorder %s187, %s189
      %p196 = scmp.eq.s32.totalorder %s32, 1
      %p197 = por %p195, %p196
      %p198 = scmp.ne.s32.totalorder %s189, %s190
      %p199 = scmp.eq.s32.totalorder %s32, 0
      %p200 = por %p198, %p199
      %p201 = scmp.ne.s32.totalorder %s189, %s190
      %p202 = scmp.eq.s32.totalorder %s33, 1
      %p203 = por %p201, %p202
      %p205 = scmp.ne.s32.totalorder %s190, %s204
      %p206 = scmp.eq.s32.totalorder %s33, 0
      %p207 = por %p205, %p206
      %s209 = sadd.s32 %s208, 1
      %p212 = scmp.eq.s32.totalorder %s27, 1
      %p213 = scmp.ne.s32.totalorder %s208, %s210
      %p214 = scmp.eq.s32.totalorder %s27, 0
      %p215 = por %p213, %p214
      %p216 = scmp.ne.s32.totalorder %s208, %s210
      %p217 = scmp.eq.s32.totalorder %s32, 1
      %p218 = por %p216, %p217
      %p219 = scmp.ne.s32.totalorder %s210, %s211
      %p220 = scmp.eq.s32.totalorder %s32, 0
      %p221 = por %p219, %p220
      %p222 = scmp.ne.s32.totalorder %s210, %s211
      %p223 = scmp.eq.s32.totalorder %s33, 1
      %p224 = por %p222, %p223
      %p226 = scmp.ne.s32.totalorder %s211, %s225
      %p227 = scmp.eq.s32.totalorder %s33, 0
      %p228 = por %p226, %p227
      %s230 = sadd.s32 %s229, 1
      %p233 = scmp.eq.s32.totalorder %s27, 1
      %p234 = scmp.ne.s32.totalorder %s229, %s231
      %p235 = scmp.eq.s32.totalorder %s27, 0
      %p236 = por %p234, %p235
      %p237 = scmp.ne.s32.totalorder %s229, %s231
      %p238 = scmp.eq.s32.totalorder %s32, 1
      %p239 = por %p237, %p238
      %p240 = scmp.ne.s32.totalorder %s231, %s232
      %p241 = scmp.eq.s32.totalorder %s32, 0
      %p242 = por %p240, %p241
      %p243 = scmp.ne.s32.totalorder %s231, %s232
      %p244 = scmp.eq.s32.totalorder %s33, 1
      %p245 = por %p243, %p244
      %p247 = scmp.ne.s32.totalorder %s232, %s246
      %p248 = scmp.eq.s32.totalorder %s33, 0
      %p249 = por %p247, %p248
      %s251 = sadd.s32 %s250, 1
      %p254 = scmp.eq.s32.totalorder %s27, 1
      %p255 = scmp.ne.s32.totalorder %s250, %s252
      %p256 = scmp.eq.s32.totalorder %s27, 0
      %p257 = por %p255, %p256
      %p258 = scmp.ne.s32.totalorder %s250, %s252
      %p259 = scmp.eq.s32.totalorder %s32, 1
      %p260 = por %p258, %p259
      %p261 = scmp.ne.s32.totalorder %s252, %s253
      %p262 = scmp.eq.s32.totalorder %s32, 0
      %p263 = por %p261, %p262
      %p264 = scmp.ne.s32.totalorder %s252, %s253
      %p265 = scmp.eq.s32.totalorder %s33, 1
      %p266 = por %p264, %p265
      %p268 = scmp.ne.s32.totalorder %s253, %s267
      %p269 = scmp.eq.s32.totalorder %s33, 0
      %p270 = por %p268, %p269
      %s272 = sadd.s32 %s271, 1
      %p275 = scmp.eq.s32.totalorder %s27, 1
      %p276 = scmp.ne.s32.totalorder %s271, %s273
      %p277 = scmp.eq.s32.totalorder %s27, 0
      %p278 = por %p276, %p277
      %p279 = scmp.ne.s32.totalorder %s271, %s273
      %p280 = scmp.eq.s32.totalorder %s32, 1
      %p281 = por %p279, %p280
      %p282 = scmp.ne.s32.totalorder %s273, %s274
      %p283 = scmp.eq.s32.totalorder %s32, 0
      %p284 = por %p282, %p283
      %p285 = scmp.ne.s32.totalorder %s273, %s274
      %p286 = scmp.eq.s32.totalorder %s33, 1
      %p287 = por %p285, %p286
      %p289 = scmp.ne.s32.totalorder %s274, %s288
      %p290 = scmp.eq.s32.totalorder %s33, 0
      %p291 = por %p289, %p290
      %s293 = sadd.s32 %s292, 1
      %p296 = scmp.eq.s32.totalorder %s27, 1
      %p297 = scmp.ne.s32.totalorder %s292, %s294
      %p298 = scmp.eq.s32.totalorder %s27, 0
      %p299 = por %p297, %p298
      %p300 = scmp.ne.s32.totalorder %s292, %s294
      %p301 = scmp.eq.s32.totalorder %s32, 1
      %p302 = por %p300, %p301
      %p303 = scmp.ne.s32.totalorder %s294, %s295
      %p304 = scmp.eq.s32.totalorder %s32, 0
      %p305 = por %p303, %p304
      %p306 = scmp.ne.s32.totalorder %s294, %s295
      %p307 = scmp.eq.s32.totalorder %s33, 1
      %p308 = por %p306, %p307
      %p310 = scmp.ne.s32.totalorder %s295, %s309
      %p311 = scmp.eq.s32.totalorder %s33, 0
      %p312 = por %p310, %p311
      %s314 = sadd.s32 %s313, 1
      %p317 = scmp.eq.s32.totalorder %s27, 1
      %p318 = scmp.ne.s32.totalorder %s313, %s315
      %p319 = scmp.eq.s32.totalorder %s27, 0
      %p320 = por %p318, %p319
      %p321 = scmp.ne.s32.totalorder %s313, %s315
      %p322 = scmp.eq.s32.totalorder %s32, 1
      %p323 = por %p321, %p322
      %p324 = scmp.ne.s32.totalorder %s315, %s316
      %p325 = scmp.eq.s32.totalorder %s32, 0
      %p326 = por %p324, %p325
      %p327 = scmp.ne.s32.totalorder %s315, %s316
      %p328 = scmp.eq.s32.totalorder %s33, 1
      %p329 = por %p327, %p328
      %p331 = scmp.ne.s32.totalorder %s316, %s330
      %p332 = scmp.eq.s32.totalorder %s33, 0
      %p333 = por %p331, %p332
      %s334 = ssub.s32 %s27, %s34
      %p335 = scmp.eq.s32.totalorder %s334, 0
      %s337 = sadd.s32 %s336, 1
      %s338 = scalar_select %p335, %s336, %s337
      %p341 = pneg %p335
      %p342 = scmp.eq.s32.totalorder %s27, 1
      %p343 = por %p341, %p342
      %p344 = scmp.ne.s32.totalorder %s336, %s339
      %p345 = scmp.eq.s32.totalorder %s27, 0
      %p346 = por %p344, %p345
      %p347 = scmp.ne.s32.totalorder %s336, %s339
      %p348 = scmp.eq.s32.totalorder %s32, 1
      %p349 = por %p347, %p348
      %p350 = scmp.ne.s32.totalorder %s339, %s340
      %p351 = scmp.eq.s32.totalorder %s32, 0
      %p352 = por %p350, %p351
      %p353 = scmp.ne.s32.totalorder %s339, %s340
      %p354 = scmp.eq.s32.totalorder %s33, 1
      %p355 = por %p353, %p354
      %p357 = scmp.ne.s32.totalorder %s340, %s356
      %p358 = scmp.eq.s32.totalorder %s33, 0
      %p359 = por %p357, %p358
      %p360 = scmp.le.s32.totalorder 1, %s27
      %p361 = scmp.lt.s32.totalorder %s27, 3
      %p362 = pnand %p360, %p361
      %p363 = pneg %p362
      // Predicated region
      $region9: #{tpu_custom_call.1} parent=5 // pred_check
        _
      $region10: #{tpu_custom_call.1} parent=5 // pred_check_branch
        %365 = sbr.rel (%p362) target = $region12
      $region11: #{tpu_custom_call.1} parent=5 // pred_region
        %s366 = ssub.s32 %s27, 1
        // Predicated region
        $region13: #{tpu_custom_call.1} parent=11 // pred_check
          %p367 = pneg %p74
        $region14: #{tpu_custom_call.1} parent=11 // pred_check_branch
          %369 = sbr.rel (%p367) target = $region16
        $region15: #{tpu_custom_call.1} parent=11 // pred_region
          %s371 = ssub.s32 128, 128
          %372 = vsyncadd [#allocation3], %s371
          %s374 = sshll.u32 [#allocation2], 4
          %s375 = int_to_ptr.vmem [resolvable:$true] %s374
          %377 = dma.hbm_to_vmem [thread:$0]  %s1, 128, %s375, [#allocation3]
        $region16: #{tpu_custom_call.1} parent=11 // pred_fallthru
          _
        // Predicated region
        $region17: #{tpu_custom_call.1} parent=11 // pred_check
          %p378 = pneg %p95
        $region18: #{tpu_custom_call.1} parent=11 // pred_check_branch
          %380 = sbr.rel (%p378) target = $region20
        $region19: #{tpu_custom_call.1} parent=11 // pred_region
          _
        $region20: #{tpu_custom_call.1} parent=11 // pred_fallthru
          _
        // Predicated region
        $region21: #{tpu_custom_call.1} parent=11 // pred_check
          %p381 = pneg %p116
        $region22: #{tpu_custom_call.1} parent=11 // pred_check_branch
          %383 = sbr.rel (%p381) target = $region24
        $region23: #{tpu_custom_call.1} parent=11 // pred_region
          _
        $region24: #{tpu_custom_call.1} parent=11 // pred_fallthru
          _
        // Predicated region
        $region25: #{tpu_custom_call.1} parent=11 // pred_check
          %p384 = pneg %p137
        $region26: #{tpu_custom_call.1} parent=11 // pred_check_branch
          %386 = sbr.rel (%p384) target = $region28
        $region27: #{tpu_custom_call.1} parent=11 // pred_region
          _
        $region28: #{tpu_custom_call.1} parent=11 // pred_fallthru
          _
        // Predicated region
        $region29: #{tpu_custom_call.1} parent=11 // pred_check
          %p387 = pneg %p158
        $region30: #{tpu_custom_call.1} parent=11 // pred_check_branch
          %389 = sbr.rel (%p387) target = $region32
        $region31: #{tpu_custom_call.1} parent=11 // pred_region
          %s391 = ssub.s32 16, 16
          %392 = vsyncadd [#allocation6], %s391
          %s394 = sshll.u32 [#allocation5], 4
          %s395 = int_to_ptr.vmem [resolvable:$true] %s394
          %397 = dma.hbm_to_vmem [thread:$0]  %s5, 16, %s395, [#allocation6]
        $region32: #{tpu_custom_call.1} parent=11 // pred_fallthru
          _
        // Predicated region
        $region33: #{tpu_custom_call.1} parent=11 // pred_check
          %p398 = pneg %p179
        $region34: #{tpu_custom_call.1} parent=11 // pred_check_branch
          %400 = sbr.rel (%p398) target = $region36
        $region35: #{tpu_custom_call.1} parent=11 // pred_region
          %s402 = ssub.s32 256, 256
          %403 = vsyncadd [#allocation6], %s402
          %s404 = sshll.u32 [#allocation7], 4
          %s405 = int_to_ptr.vmem [resolvable:$true] %s404
          %410 = dma.hbm_to_vmem [thread:$0]  %s6, 256, %s405, [#allocation6], 64, 64, 4
        $region36: #{tpu_custom_call.1} parent=11 // pred_fallthru
          _
        // Predicated region
        $region37: #{tpu_custom_call.1} parent=11 // pred_check
          %p411 = pneg %p200
        $region38: #{tpu_custom_call.1} parent=11 // pred_check_branch
          %413 = sbr.rel (%p411) target = $region40
        $region39: #{tpu_custom_call.1} parent=11 // pred_region
          %s415 = ssub.s32 16, 16
          %416 = vsyncadd [#allocation9], %s415
          %s418 = sshll.u32 [#allocation8], 4
          %s419 = int_to_ptr.vmem [resolvable:$true] %s418
          %421 = dma.hbm_to_vmem [thread:$0]  %s7, 16, %s419, [#allocation9]
        $region40: #{tpu_custom_call.1} parent=11 // pred_fallthru
          _
        // Predicated region
        $region41: #{tpu_custom_call.1} parent=11 // pred_check
          %p422 = pneg %p221
        $region42: #{tpu_custom_call.1} parent=11 // pred_check_branch
          %424 = sbr.rel (%p422) target = $region44
        $region43: #{tpu_custom_call.1} parent=11 // pred_region
          %s426 = ssub.s32 16, 16
          %427 = vsyncadd [#allocation9], %s426
          %s429 = sshll.u32 [#allocation10], 4
          %s430 = int_to_ptr.vmem [resolvable:$true] %s429
          %432 = dma.hbm_to_vmem [thread:$0]  %s8, 16, %s430, [#allocation9]
        $region44: #{tpu_custom_call.1} parent=11 // pred_fallthru
          _
        // Predicated region
        $region45: #{tpu_custom_call.1} parent=11 // pred_check
          %p433 = pneg %p242
        $region46: #{tpu_custom_call.1} parent=11 // pred_check_branch
          %435 = sbr.rel (%p433) target = $region48
        $region47: #{tpu_custom_call.1} parent=11 // pred_region
          %s437 = ssub.s32 16, 16
          %438 = vsyncadd [#allocation12], %s437
          %s440 = sshll.u32 [#allocation11], 4
          %s441 = int_to_ptr.vmem [resolvable:$true] %s440
          %443 = dma.hbm_to_vmem [thread:$0]  %s9, 16, %s441, [#allocation12]
        $region48: #{tpu_custom_call.1} parent=11 // pred_fallthru
          _
        // Predicated region
        $region49: #{tpu_custom_call.1} parent=11 // pred_check
          %p444 = pneg %p263
        $region50: #{tpu_custom_call.1} parent=11 // pred_check_branch
          %446 = sbr.rel (%p444) target = $region52
        $region51: #{tpu_custom_call.1} parent=11 // pred_region
          _
        $region52: #{tpu_custom_call.1} parent=11 // pred_fallthru
          _
        // Predicated region
        $region53: #{tpu_custom_call.1} parent=11 // pred_check
          %p447 = pneg %p284
        $region54: #{tpu_custom_call.1} parent=11 // pred_check_branch
          %449 = sbr.rel (%p447) target = $region56
        $region55: #{tpu_custom_call.1} parent=11 // pred_region
          _
        $region56: #{tpu_custom_call.1} parent=11 // pred_fallthru
          _
        // Predicated region
        $region57: #{tpu_custom_call.1} parent=11 // pred_check
          %p450 = pneg %p305
        $region58: #{tpu_custom_call.1} parent=11 // pred_check_branch
          %452 = sbr.rel (%p450) target = $region60
        $region59: #{tpu_custom_call.1} parent=11 // pred_region
          _
        $region60: #{tpu_custom_call.1} parent=11 // pred_fallthru
          _
        // Predicated region
        $region61: #{tpu_custom_call.1} parent=11 // pred_check
          %p453 = pneg %p326
        $region62: #{tpu_custom_call.1} parent=11 // pred_check_branch
          %455 = sbr.rel (%p453) target = $region64
        $region63: #{tpu_custom_call.1} parent=11 // pred_region
          _
        $region64: #{tpu_custom_call.1} parent=11 // pred_fallthru
          _
      $region12: #{tpu_custom_call.1} parent=5 // pred_fallthru
        _
      %p456 = scmp.lt.s32.totalorder %s27, 2
      // Predicated region
      $region65: #{tpu_custom_call.1} parent=5 // pred_check
        %p457 = pneg %p456
      $region66: #{tpu_custom_call.1} parent=5 // pred_check_branch
        %459 = sbr.rel (%p457) target = $region68
      $region67: #{tpu_custom_call.1} parent=5 // pred_region
        // Predicated region
        $region69: #{tpu_custom_call.1} parent=67 // pred_check
          %p460 = pneg %p47
        $region70: #{tpu_custom_call.1} parent=67 // pred_check_branch
          %462 = sbr.rel (%p460) target = $region72
        $region71: #{tpu_custom_call.1} parent=67 // pred_region
          %s463 = smul.u32 4, %s27
          %p464 = scmp.lt.s32.totalorder %s463, 7
          %s465 = scalar_select %p464, %s463, 7
          %s466 = smul.addr %s465, 8
          %s467 = scalar_lea.vmem %s0, %s466
          %s468 = smul.u32 4, %s27
        $region72: #{tpu_custom_call.1} parent=67 // pred_fallthru
          _
      $region68: #{tpu_custom_call.1} parent=5 // pred_fallthru
        _
      %p469 = scmp.le.s32.totalorder 1, %s27
      %p470 = scmp.lt.s32.totalorder %s27, 3
      %p471 = pnand %p469, %p470
      %p472 = pneg %p471
      // Predicated region
      $region73: #{tpu_custom_call.1} parent=5 // pred_check
        _
      $region74: #{tpu_custom_call.1} parent=5 // pred_check_branch
        %474 = sbr.rel (%p471) target = $region76
      $region75: #{tpu_custom_call.1} parent=5 // pred_region
        %s475 = ssub.s32 %s27, 1
        // Predicated region
        $region77: #{tpu_custom_call.1} parent=75 // pred_check
          %p476 = pneg %p74
        $region78: #{tpu_custom_call.1} parent=75 // pred_check_branch
          %478 = sbr.rel (%p476) target = $region80
        $region79: #{tpu_custom_call.1} parent=75 // pred_region
          %479 = dma.done [#allocation3], 128
        $region80: #{tpu_custom_call.1} parent=75 // pred_fallthru
          _
        // Predicated region
        $region81: #{tpu_custom_call.1} parent=75 // pred_check
          %p480 = pneg %p158
        $region82: #{tpu_custom_call.1} parent=75 // pred_check_branch
          %482 = sbr.rel (%p480) target = $region84
        $region83: #{tpu_custom_call.1} parent=75 // pred_region
          %483 = dma.done [#allocation6], 16
        $region84: #{tpu_custom_call.1} parent=75 // pred_fallthru
          _
        // Predicated region
        $region85: #{tpu_custom_call.1} parent=75 // pred_check
          %p484 = pneg %p179
        $region86: #{tpu_custom_call.1} parent=75 // pred_check_branch
          %486 = sbr.rel (%p484) target = $region88
        $region87: #{tpu_custom_call.1} parent=75 // pred_region
          %487 = dma.done [#allocation6], 256
        $region88: #{tpu_custom_call.1} parent=75 // pred_fallthru
          _
        // Predicated region
        $region89: #{tpu_custom_call.1} parent=75 // pred_check
          %p488 = pneg %p200
        $region90: #{tpu_custom_call.1} parent=75 // pred_check_branch
          %490 = sbr.rel (%p488) target = $region92
        $region91: #{tpu_custom_call.1} parent=75 // pred_region
          %491 = dma.done [#allocation9], 16
        $region92: #{tpu_custom_call.1} parent=75 // pred_fallthru
          _
        // Predicated region
        $region93: #{tpu_custom_call.1} parent=75 // pred_check
          %p492 = pneg %p221
        $region94: #{tpu_custom_call.1} parent=75 // pred_check_branch
          %494 = sbr.rel (%p492) target = $region96
        $region95: #{tpu_custom_call.1} parent=75 // pred_region
          %495 = dma.done [#allocation9], 16
        $region96: #{tpu_custom_call.1} parent=75 // pred_fallthru
          _
        // Predicated region
        $region97: #{tpu_custom_call.1} parent=75 // pred_check
          %p496 = pneg %p242
        $region98: #{tpu_custom_call.1} parent=75 // pred_check_branch
          %498 = sbr.rel (%p496) target = $region100
        $region99: #{tpu_custom_call.1} parent=75 // pred_region
          %499 = dma.done [#allocation12], 16
        $region100: #{tpu_custom_call.1} parent=75 // pred_fallthru
          _
        %s500 = smul.u32 4, %s32
        %p501 = scmp.lt.s32.totalorder %s500, 7
        %s502 = scalar_select %p501, %s500, 7
        %s503 = smul.addr %s502, 8
        %s504 = scalar_lea.vmem %s0, %s503
        %p505 = pneg %p53
        %p506 = pneg %p50
        %p507 = pneg %p74
        %p508 = pneg %p71
        %p509 = pneg %p95
        %p510 = pneg %p92
        %p511 = pneg %p116
        %p512 = pneg %p113
        %p513 = pneg %p137
        %p514 = pneg %p134
        %p515 = pneg %p158
        %p516 = pneg %p155
        %p517 = pneg %p179
        %p518 = pneg %p176
        %p519 = pneg %p200
        %p520 = pneg %p197
        %p521 = pneg %p221
        %p522 = pneg %p218
        %p523 = pneg %p242
        %p524 = pneg %p239
        %p525 = pneg %p263
        %p526 = pneg %p260
        %p527 = pneg %p284
        %p528 = pneg %p281
        %p529 = pneg %p305
        %p530 = pneg %p302
        %p531 = pneg %p326
        %p532 = pneg %p323
        %p533 = pneg %p352
        %p534 = pneg %p349
        %s535 = sand.u32 %s339, 1
        %s536 = scalar_lea.sflag [#allocation4], %s535
        %s537 = sand.u32 %s339, 1
        %s538 = smul.addr %s537, 32
        %s539 = scalar_lea.vmem [#allocation13], %s538
        %s540 = smul.u32 4, %s32
        %p541 = scmp.lt.s32.totalorder %s540, 7
        %s542 = scalar_select %p541, %s540, 7
        %s543 = smul.addr %s542, 8
        %s544 = scalar_lea.vmem %s0, %s543
        %s545 = smul.u32 4, %s32
        %s546 = smul.u32 4, %s32
        %v548 = vld [vmem:[%s544] sm:$0xff]
        %v549 = vld [vmem:[%s544 + $0x8] sm:$0xff]
        %v550 = vld [vmem:[%s544 + $0x10] sm:$0xff]
        %v551 = vld [vmem:[%s544 + $0x18] sm:$0xff]
        %v552 = vld [vmem:[#allocation2] sm:$0xff]
        %v553 = vadd.f32 %v548, %v552
        %v554 = vadd.f32 %v549, %v552
        %v555 = vadd.f32 %v550, %v552
        %v556 = vadd.f32 %v551, %v552
        %v557 = vld [vmem:[%s2] sm:$0x1]
        %v558 = vld [vmem:[%s3] sm:$0x1]
        %vm559 = vcmask 261120
        %v560 = vsel %vm559, %v553, 0.0
        %561 = vadd.xlane.f32.xlu0 %v560
        %v562 = vpop.xlane.xlu0 %561
        %v563 = vsel %vm559, %v554, 0.0
        %564 = vadd.xlane.f32.xlu0 %v563
        %v565 = vpop.xlane.xlu0 %564
        %v566 = vsel %vm559, %v555, 0.0
        %567 = vadd.xlane.f32.xlu0 %v566
        %v568 = vpop.xlane.xlu0 %567
        %v569 = vsel %vm559, %v556, 0.0
        %570 = vadd.xlane.f32.xlu0 %v569
        %v571 = vpop.xlane.xlu0 %570
        %v572 = vrcp.pop 32.0
        %v573 = vmul.f32 %v562, %v572
        %v574 = vmul.f32 %v565, %v572
        %v575 = vmul.f32 %v568, %v572
        %v576 = vmul.f32 %v571, %v572
        %v577 = vsub.f32 %v553, %v573
        %v578 = vsub.f32 %v554, %v574
        %v579 = vsub.f32 %v555, %v575
        %v580 = vsub.f32 %v556, %v576
        %v581 = vmul.f32 %v577, %v577
        %v582 = vmul.f32 %v578, %v578
        %v583 = vmul.f32 %v579, %v579
        %v584 = vmul.f32 %v580, %v580
        %v585 = vsel %vm559, %v581, 0.0
        %586 = vadd.xlane.f32.xlu0 %v585
        %v587 = vpop.xlane.xlu0 %586
        %v588 = vsel %vm559, %v582, 0.0
        %589 = vadd.xlane.f32.xlu0 %v588
        %v590 = vpop.xlane.xlu0 %589
        %v591 = vsel %vm559, %v583, 0.0
        %592 = vadd.xlane.f32.xlu0 %v591
        %v593 = vpop.xlane.xlu0 %592
        %v594 = vsel %vm559, %v584, 0.0
        %595 = vadd.xlane.f32.xlu0 %v594
        %v596 = vpop.xlane.xlu0 %595
        %v597 = vmul.f32 %v587, %v572
        %v598 = vmul.f32 %v590, %v572
        %v599 = vmul.f32 %v593, %v572
        %v600 = vmul.f32 %v596, %v572
        %v601 = vadd.f32 %v597, 1e-05
        %v602 = vadd.f32 %v598, 1e-05
        %v603 = vadd.f32 %v599, 1e-05
        %v604 = vadd.f32 %v600, 1e-05
        %v605 = vrsqrt.pop %v601
        %v606 = vrsqrt.pop %v602
        %v607 = vrsqrt.pop %v603
        %v608 = vrsqrt.pop %v604
        %v609 = vmul.f32 %v577, %v605
        %v610 = vmul.f32 %v578, %v606
        %v611 = vmul.f32 %v579, %v607
        %v612 = vmul.f32 %v580, %v608
        %v614 = vlaneseq
        %v615 = vshrl.u32 %v614, 7
        %v616 = vsub.s32 0, %v615
        %v617 = vrot.slane %v557, %v616
        %v619 = vmul.f32 %v609, %v617
        %v620 = vmul.f32 %v610, %v617
        %v621 = vmul.f32 %v611, %v617
        %v622 = vmul.f32 %v612, %v617
        %v624 = vlaneseq
        %v625 = vshrl.u32 %v624, 7
        %v626 = vsub.s32 0, %v625
        %v627 = vrot.slane %v558, %v626
        %v629 = vadd.f32 %v619, %v627
        %v630 = vadd.f32 %v620, %v627
        %v631 = vadd.f32 %v621, %v627
        %v632 = vadd.f32 %v622, %v627
        %v633 = vpack.c.bf16 %v630, %v629
        %v634 = vpack.c.bf16 %v632, %v631
        %v635 = vld [vmem:[%s4] sm:$0xf]
        %v636 = vld [vmem:[%s4 + $0x4] sm:$0xf]
        %v637 = vld [vmem:[%s4 + $0x8] sm:$0xf]
        %v638 = vld [vmem:[%s4 + $0xc] sm:$0xf]
        %v639 = vld [vmem:[#allocation5] sm:$0x1]
        %v641 = vlaneseq
        %v642 = vshrl.u32 %v641, 7
        %v643 = vsub.s32 0, %v642
        %v644 = vrot.slane %v639, %v643
        %v650 = vunpack.c.l.b16 %v635
        %v651 = vunpack.c.l.b16 %v636
        %v652 = vunpack.c.l.b16 %v637
        %v653 = vunpack.c.l.b16 %v638
        %v654 = vpack.c.b16 %v651, %v650
        %v655 = vpack.c.b16 %v653, %v652
        %v659 = vsel %vm559, %v633, 0
        %v662 = vsel %vm559, %v634, 0
        %664 = vmatprep.subr.bf16.mxu0 0
        %665 = vmatpush1.bf16.msra.mxu0 %v654
        %666 = vmatprep.subr.bf16.mxu0 0
        %667 = vmatpush1.bf16.msra.mxu0 %v655
        %668 = vmatprep.subr.bf16.mxu0 0
        %669 = vmatpush1.bf16.msra.mxu0 0
        %670 = vmatprep.subr.bf16.mxu0 0
        %671 = vmatpush1.bf16.msra.mxu0 0
        %672 = vmatprep.subr.bf16.mxu0 0
        %673 = vmatpush1.bf16.msra.mxu0 0
        %674 = vmatprep.subr.bf16.mxu0 0
        %675 = vmatpush1.bf16.msra.mxu0 0
        %676 = vmatprep.subr.bf16.mxu0 0
        %677 = vmatpush1.bf16.msra.mxu0 0
        %678 = vmatprep.subr.bf16.mxu0 0
        %679 = vmatpush1.bf16.msra.mxu0 0
        %680 = vmatprep.subr.bf16.mxu0 0
        %681 = vmatpush1.bf16.msra.mxu0 0
        %682 = vmatprep.subr.bf16.mxu0 0
        %683 = vmatpush1.bf16.msra.mxu0 0
        %684 = vmatprep.subr.bf16.mxu0 0
        %685 = vmatpush1.bf16.msra.mxu0 0
        %686 = vmatprep.subr.bf16.mxu0 0
        %687 = vmatpush1.bf16.msra.mxu0 0
        %688 = vmatprep.subr.bf16.mxu0 0
        %689 = vmatpush1.bf16.msra.mxu0 0
        %690 = vmatprep.subr.bf16.mxu0 0
        %691 = vmatpush1.bf16.msra.mxu0 0
        %692 = vmatprep.subr.bf16.mxu0 0
        %693 = vmatpush1.bf16.msra.mxu0 0
        %694 = vmatprep.subr.bf16.mxu0 0
        %695 = vmatpush1.bf16.msra.mxu0 0
        %696 = vmatprep.mubr.bf16.mxu0 0
        %697 = vmatmul.mubr.bf16.gmra.mrb[0].mxu0 %v659
        %v698 = vpop.f32.mrb[0].mxu0
        %v699 = vadd.f32 %v644, %v698
        %v700 = vpop.f32.mrb[0].mxu0
        %v701 = vpop.f32.mrb[0].mxu0
        %v702 = vadd.f32 %v644, %v701
        %v703 = vpop.f32.mrb[0].mxu0
        %704 = vmatprep.mubr.bf16.mxu0 0
        %705 = vmatmul.mubr.bf16.gmra.mrb[0].mxu0 %v662
        %v706 = vpop.f32.mrb[0].mxu0
        %v707 = vadd.f32 %v644, %v706
        %v708 = vpop.f32.mrb[0].mxu0
        %v709 = vpop.f32.mrb[0].mxu0
        %v710 = vadd.f32 %v644, %v709
        %v711 = vpop.f32.mrb[0].mxu0
        %712 = vdwg.mxu0
        %717 = vrot.lane.b32.xlu0 %v699, 120
        %v718 = vpop.permute.xlu0 %717
        %719 = vrot.lane.b32.xlu0 %v702, 120
        %v720 = vpop.permute.xlu0 %719
        %721 = vrot.lane.b32.xlu0 %v707, 120
        %v722 = vpop.permute.xlu0 %721
        %723 = vrot.lane.b32.xlu0 %v710, 120
        %v724 = vpop.permute.xlu0 %723
        %729 = vrot.lane.b32.xlu0 %v699, 112
        %v730 = vpop.permute.xlu0 %729
        %731 = vrot.lane.b32.xlu0 %v702, 112
        %v732 = vpop.permute.xlu0 %731
        %733 = vrot.lane.b32.xlu0 %v707, 112
        %v734 = vpop.permute.xlu0 %733
        %735 = vrot.lane.b32.xlu0 %v710, 112
        %v736 = vpop.permute.xlu0 %735
        %741 = vrot.lane.b32.xlu0 %v699, 104
        %v742 = vpop.permute.xlu0 %741
        %743 = vrot.lane.b32.xlu0 %v702, 104
        %v744 = vpop.permute.xlu0 %743
        %745 = vrot.lane.b32.xlu0 %v707, 104
        %v746 = vpop.permute.xlu0 %745
        %747 = vrot.lane.b32.xlu0 %v710, 104
        %v748 = vpop.permute.xlu0 %747
        %753 = vrot.lane.b32.xlu0 %v699, 96
        %v754 = vpop.permute.xlu0 %753
        %755 = vrot.lane.b32.xlu0 %v702, 96
        %v756 = vpop.permute.xlu0 %755
        %757 = vrot.lane.b32.xlu0 %v707, 96
        %v758 = vpop.permute.xlu0 %757
        %759 = vrot.lane.b32.xlu0 %v710, 96
        %v760 = vpop.permute.xlu0 %759
        %765 = vrot.lane.b32.xlu0 %v699, 88
        %v766 = vpop.permute.xlu0 %765
        %767 = vrot.lane.b32.xlu0 %v702, 88
        %v768 = vpop.permute.xlu0 %767
        %769 = vrot.lane.b32.xlu0 %v707, 88
        %v770 = vpop.permute.xlu0 %769
        %771 = vrot.lane.b32.xlu0 %v710, 88
        %v772 = vpop.permute.xlu0 %771
        %777 = vrot.lane.b32.xlu0 %v699, 80
        %v778 = vpop.permute.xlu0 %777
        %779 = vrot.lane.b32.xlu0 %v702, 80
        %v780 = vpop.permute.xlu0 %779
        %781 = vrot.lane.b32.xlu0 %v707, 80
        %v782 = vpop.permute.xlu0 %781
        %783 = vrot.lane.b32.xlu0 %v710, 80
        %v784 = vpop.permute.xlu0 %783
        %789 = vrot.lane.b32.xlu0 %v699, 72
        %v790 = vpop.permute.xlu0 %789
        %791 = vrot.lane.b32.xlu0 %v702, 72
        %v792 = vpop.permute.xlu0 %791
        %793 = vrot.lane.b32.xlu0 %v707, 72
        %v794 = vpop.permute.xlu0 %793
        %795 = vrot.lane.b32.xlu0 %v710, 72
        %v796 = vpop.permute.xlu0 %795
        %801 = vrot.lane.b32.xlu0 %v699, 64
        %v802 = vpop.permute.xlu0 %801
        %803 = vrot.lane.b32.xlu0 %v702, 64
        %v804 = vpop.permute.xlu0 %803
        %805 = vrot.lane.b32.xlu0 %v707, 64
        %v806 = vpop.permute.xlu0 %805
        %807 = vrot.lane.b32.xlu0 %v710, 64
        %v808 = vpop.permute.xlu0 %807
        %813 = vrot.lane.b32.xlu0 %v699, 56
        %v814 = vpop.permute.xlu0 %813
        %815 = vrot.lane.b32.xlu0 %v702, 56
        %v816 = vpop.permute.xlu0 %815
        %817 = vrot.lane.b32.xlu0 %v707, 56
        %v818 = vpop.permute.xlu0 %817
        %819 = vrot.lane.b32.xlu0 %v710, 56
        %v820 = vpop.permute.xlu0 %819
        %825 = vrot.lane.b32.xlu0 %v699, 48
        %v826 = vpop.permute.xlu0 %825
        %827 = vrot.lane.b32.xlu0 %v702, 48
        %v828 = vpop.permute.xlu0 %827
        %829 = vrot.lane.b32.xlu0 %v707, 48
        %v830 = vpop.permute.xlu0 %829
        %831 = vrot.lane.b32.xlu0 %v710, 48
        %v832 = vpop.permute.xlu0 %831
        %837 = vrot.lane.b32.xlu0 %v699, 40
        %v838 = vpop.permute.xlu0 %837
        %839 = vrot.lane.b32.xlu0 %v702, 40
        %v840 = vpop.permute.xlu0 %839
        %841 = vrot.lane.b32.xlu0 %v707, 40
        %v842 = vpop.permute.xlu0 %841
        %843 = vrot.lane.b32.xlu0 %v710, 40
        %v844 = vpop.permute.xlu0 %843
        %v849 = vcombine.low %v699, %v730
        %v850 = vcombine.high %v699, %v730
        %v852 = vunpack.c.l.s4 1983009808
        %v853 = vunpack.c.0.s8 %v852
        %v854 = vlaneseq
        %v855 = vshrl.u32 %v854, 7
        %v856 = vsub.s32 %v853, %v855
        %v857 = vrot.slane %v849, %v856
        %v859 = vunpack.c.l.s4 1983009808
        %v860 = vunpack.c.0.s8 %v859
        %v861 = vlaneseq
        %v862 = vshrl.u32 %v861, 7
        %v863 = vsub.s32 %v860, %v862
        %v864 = vrot.slane %v850, %v863
        %v865 = vcombine.low %v718, %v742
        %v866 = vcombine.high %v718, %v742
        %v868 = vunpack.c.l.s4 1983009808
        %v869 = vunpack.c.0.s8 %v868
        %v870 = vlaneseq
        %v871 = vshrl.u32 %v870, 7
        %v872 = vsub.s32 %v869, %v871
        %v873 = vrot.slane %v865, %v872
        %v875 = vunpack.c.l.s4 1983009808
        %v876 = vunpack.c.0.s8 %v875
        %v877 = vlaneseq
        %v878 = vshrl.u32 %v877, 7
        %v879 = vsub.s32 %v876, %v878
        %v880 = vrot.slane %v866, %v879
        %v881 = vcombine.low %v754, %v778
        %v882 = vcombine.high %v754, %v778
        %v884 = vunpack.c.l.s4 1983009808
        %v885 = vunpack.c.0.s8 %v884
        %v886 = vlaneseq
        %v887 = vshrl.u32 %v886, 7
        %v888 = vsub.s32 %v885, %v887
        %v889 = vrot.slane %v881, %v888
        %v891 = vunpack.c.l.s4 1983009808
        %v892 = vunpack.c.0.s8 %v891
        %v893 = vlaneseq
        %v894 = vshrl.u32 %v893, 7
        %v895 = vsub.s32 %v892, %v894
        %v896 = vrot.slane %v882, %v895
        %v897 = vcombine.low %v766, %v790
        %v898 = vcombine.high %v766, %v790
        %v900 = vunpack.c.l.s4 1983009808
        %v901 = vunpack.c.0.s8 %v900
        %v902 = vlaneseq
        %v903 = vshrl.u32 %v902, 7
        %v904 = vsub.s32 %v901, %v903
        %v905 = vrot.slane %v897, %v904
        %v907 = vunpack.c.l.s4 1983009808
        %v908 = vunpack.c.0.s8 %v907
        %v909 = vlaneseq
        %v910 = vshrl.u32 %v909, 7
        %v911 = vsub.s32 %v908, %v910
        %v912 = vrot.slane %v898, %v911
        %v913 = vcombine.low %v857, %v873
        %v914 = vcombine.high %v857, %v873
        %v916 = vunpack.c.l.s4 1934713408
        %v917 = vunpack.c.0.s8 %v916
        %v918 = vlaneseq
        %v919 = vshrl.u32 %v918, 7
        %v920 = vsub.s32 %v917, %v919
        %v921 = vrot.slane %v913, %v920
        %v923 = vunpack.c.l.s4 1934713408
        %v924 = vunpack.c.0.s8 %v923
        %v925 = vlaneseq
        %v926 = vshrl.u32 %v925, 7
        %v927 = vsub.s32 %v924, %v926
        %v928 = vrot.slane %v914, %v927
        %v929 = vcombine.low %v864, %v880
        %v930 = vcombine.high %v864, %v880
        %v932 = vunpack.c.l.s4 1934713408
        %v933 = vunpack.c.0.s8 %v932
        %v934 = vlaneseq
        %v935 = vshrl.u32 %v934, 7
        %v936 = vsub.s32 %v933, %v935
        %v937 = vrot.slane %v929, %v936
        %v939 = vunpack.c.l.s4 1934713408
        %v940 = vunpack.c.0.s8 %v939
        %v941 = vlaneseq
        %v942 = vshrl.u32 %v941, 7
        %v943 = vsub.s32 %v940, %v942
        %v944 = vrot.slane %v930, %v943
        %v945 = vcombine.low %v889, %v905
        %v946 = vcombine.high %v889, %v905
        %v948 = vunpack.c.l.s4 1934713408
        %v949 = vunpack.c.0.s8 %v948
        %v950 = vlaneseq
        %v951 = vshrl.u32 %v950, 7
        %v952 = vsub.s32 %v949, %v951
        %v953 = vrot.slane %v945, %v952
        %v955 = vunpack.c.l.s4 1934713408
        %v956 = vunpack.c.0.s8 %v955
        %v957 = vlaneseq
        %v958 = vshrl.u32 %v957, 7
        %v959 = vsub.s32 %v956, %v958
        %v960 = vrot.slane %v946, %v959
        %v961 = vcombine.low %v896, %v912
        %v962 = vcombine.high %v896, %v912
        %v964 = vunpack.c.l.s4 1934713408
        %v965 = vunpack.c.0.s8 %v964
        %v966 = vlaneseq
        %v967 = vshrl.u32 %v966, 7
        %v968 = vsub.s32 %v965, %v967
        %v969 = vrot.slane %v961, %v968
        %v971 = vunpack.c.l.s4 1934713408
        %v972 = vunpack.c.0.s8 %v971
        %v973 = vlaneseq
        %v974 = vshrl.u32 %v973, 7
        %v975 = vsub.s32 %v972, %v974
        %v976 = vrot.slane %v962, %v975
        %v977 = vcombine.low %v921, %v953
        %v978 = vcombine.high %v921, %v953
        %v979 = vcombine.low %v928, %v960
        %v980 = vcombine.high %v928, %v960
        %v981 = vcombine.low %v937, %v969
        %v982 = vcombine.high %v937, %v969
        %v983 = vcombine.low %v944, %v976
        %v984 = vcombine.high %v944, %v976
        %v985 = vcombine.low %v802, %v826
        %v986 = vcombine.high %v802, %v826
        %v988 = vunpack.c.l.s4 1983009808
        %v989 = vunpack.c.0.s8 %v988
        %v990 = vlaneseq
        %v991 = vshrl.u32 %v990, 7
        %v992 = vsub.s32 %v989, %v991
        %v993 = vrot.slane %v985, %v992
        %v995 = vunpack.c.l.s4 1983009808
        %v996 = vunpack.c.0.s8 %v995
        %v997 = vlaneseq
        %v998 = vshrl.u32 %v997, 7
        %v999 = vsub.s32 %v996, %v998
        %v1000 = vrot.slane %v986, %v999
        %v1001 = vcombine.low %v814, %v838
        %v1002 = vcombine.high %v814, %v838
        %v1004 = vunpack.c.l.s4 1983009808
        %v1005 = vunpack.c.0.s8 %v1004
        %v1006 = vlaneseq
        %v1007 = vshrl.u32 %v1006, 7
        %v1008 = vsub.s32 %v1005, %v1007
        %v1009 = vrot.slane %v1001, %v1008
        %v1011 = vunpack.c.l.s4 1983009808
        %v1012 = vunpack.c.0.s8 %v1011
        %v1013 = vlaneseq
        %v1014 = vshrl.u32 %v1013, 7
        %v1015 = vsub.s32 %v1012, %v1014
        %v1016 = vrot.slane %v1002, %v1015
        %v1017 = vcombine.low %v993, %v1009
        %v1018 = vcombine.high %v993, %v1009
        %v1020 = vunpack.c.l.s4 1934713408
        %v1021 = vunpack.c.0.s8 %v1020
        %v1022 = vlaneseq
        %v1023 = vshrl.u32 %v1022, 7
        %v1024 = vsub.s32 %v1021, %v1023
        %v1025 = vrot.slane %v1017, %v1024
        %v1027 = vunpack.c.l.s4 1934713408
        %v1028 = vunpack.c.0.s8 %v1027
        %v1029 = vlaneseq
        %v1030 = vshrl.u32 %v1029, 7
        %v1031 = vsub.s32 %v1028, %v1030
        %v1032 = vrot.slane %v1018, %v1031
        %v1033 = vcombine.low %v1000, %v1016
        %v1034 = vcombine.high %v1000, %v1016
        %v1036 = vunpack.c.l.s4 1934713408
        %v1037 = vunpack.c.0.s8 %v1036
        %v1038 = vlaneseq
        %v1039 = vshrl.u32 %v1038, 7
        %v1040 = vsub.s32 %v1037, %v1039
        %v1041 = vrot.slane %v1033, %v1040
        %v1043 = vunpack.c.l.s4 1934713408
        %v1044 = vunpack.c.0.s8 %v1043
        %v1045 = vlaneseq
        %v1046 = vshrl.u32 %v1045, 7
        %v1047 = vsub.s32 %v1044, %v1046
        %v1048 = vrot.slane %v1034, %v1047
        %v1049 = vcombine.high %v1025, 0.0
        %v1050 = vcombine.high %v1032, 0.0
        %v1051 = vcombine.high %v1041, 0.0
        %v1052 = vcombine.high %v1048, 0.0
        %v1053 = vcombine.low %v702, %v732
        %v1054 = vcombine.high %v702, %v732
        %v1056 = vunpack.c.l.s4 1983009808
        %v1057 = vunpack.c.0.s8 %v1056
        %v1058 = vlaneseq
        %v1059 = vshrl.u32 %v1058, 7
        %v1060 = vsub.s32 %v1057, %v1059
        %v1061 = vrot.slane %v1053, %v1060
        %v1063 = vunpack.c.l.s4 1983009808
        %v1064 = vunpack.c.0.s8 %v1063
        %v1065 = vlaneseq
        %v1066 = vshrl.u32 %v1065, 7
        %v1067 = vsub.s32 %v1064, %v1066
        %v1068 = vrot.slane %v1054, %v1067
        %v1069 = vcombine.low %v720, %v744
        %v1070 = vcombine.high %v720, %v744
        %v1072 = vunpack.c.l.s4 1983009808
        %v1073 = vunpack.c.0.s8 %v1072
        %v1074 = vlaneseq
        %v1075 = vshrl.u32 %v1074, 7
        %v1076 = vsub.s32 %v1073, %v1075
        %v1077 = vrot.slane %v1069, %v1076
        %v1079 = vunpack.c.l.s4 1983009808
        %v1080 = vunpack.c.0.s8 %v1079
        %v1081 = vlaneseq
        %v1082 = vshrl.u32 %v1081, 7
        %v1083 = vsub.s32 %v1080, %v1082
        %v1084 = vrot.slane %v1070, %v1083
        %v1085 = vcombine.low %v756, %v780
        %v1086 = vcombine.high %v756, %v780
        %v1088 = vunpack.c.l.s4 1983009808
        %v1089 = vunpack.c.0.s8 %v1088
        %v1090 = vlaneseq
        %v1091 = vshrl.u32 %v1090, 7
        %v1092 = vsub.s32 %v1089, %v1091
        %v1093 = vrot.slane %v1085, %v1092
        %v1095 = vunpack.c.l.s4 1983009808
        %v1096 = vunpack.c.0.s8 %v1095
        %v1097 = vlaneseq
        %v1098 = vshrl.u32 %v1097, 7
        %v1099 = vsub.s32 %v1096, %v1098
        %v1100 = vrot.slane %v1086, %v1099
        %v1101 = vcombine.low %v768, %v792
        %v1102 = vcombine.high %v768, %v792
        %v1104 = vunpack.c.l.s4 1983009808
        %v1105 = vunpack.c.0.s8 %v1104
        %v1106 = vlaneseq
        %v1107 = vshrl.u32 %v1106, 7
        %v1108 = vsub.s32 %v1105, %v1107
        %v1109 = vrot.slane %v1101, %v1108
        %v1111 = vunpack.c.l.s4 1983009808
        %v1112 = vunpack.c.0.s8 %v1111
        %v1113 = vlaneseq
        %v1114 = vshrl.u32 %v1113, 7
        %v1115 = vsub.s32 %v1112, %v1114
        %v1116 = vrot.slane %v1102, %v1115
        %v1117 = vcombine.low %v1061, %v1077
        %v1118 = vcombine.high %v1061, %v1077
        %v1120 = vunpack.c.l.s4 1934713408
        %v1121 = vunpack.c.0.s8 %v1120
        %v1122 = vlaneseq
        %v1123 = vshrl.u32 %v1122, 7
        %v1124 = vsub.s32 %v1121, %v1123
        %v1125 = vrot.slane %v1117, %v1124
        %v1127 = vunpack.c.l.s4 1934713408
        %v1128 = vunpack.c.0.s8 %v1127
        %v1129 = vlaneseq
        %v1130 = vshrl.u32 %v1129, 7
        %v1131 = vsub.s32 %v1128, %v1130
        %v1132 = vrot.slane %v1118, %v1131
        %v1133 = vcombine.low %v1068, %v1084
        %v1134 = vcombine.high %v1068, %v1084
        %v1136 = vunpack.c.l.s4 1934713408
        %v1137 = vunpack.c.0.s8 %v1136
        %v1138 = vlaneseq
        %v1139 = vshrl.u32 %v1138, 7
        %v1140 = vsub.s32 %v1137, %v1139
        %v1141 = vrot.slane %v1133, %v1140
        %v1143 = vunpack.c.l.s4 1934713408
        %v1144 = vunpack.c.0.s8 %v1143
        %v1145 = vlaneseq
        %v1146 = vshrl.u32 %v1145, 7
        %v1147 = vsub.s32 %v1144, %v1146
        %v1148 = vrot.slane %v1134, %v1147
        %v1149 = vcombine.low %v1093, %v1109
        %v1150 = vcombine.high %v1093, %v1109
        %v1152 = vunpack.c.l.s4 1934713408
        %v1153 = vunpack.c.0.s8 %v1152
        %v1154 = vlaneseq
        %v1155 = vshrl.u32 %v1154, 7
        %v1156 = vsub.s32 %v1153, %v1155
        %v1157 = vrot.slane %v1149, %v1156
        %v1159 = vunpack.c.l.s4 1934713408
        %v1160 = vunpack.c.0.s8 %v1159
        %v1161 = vlaneseq
        %v1162 = vshrl.u32 %v1161, 7
        %v1163 = vsub.s32 %v1160, %v1162
        %v1164 = vrot.slane %v1150, %v1163
        %v1165 = vcombine.low %v1100, %v1116
        %v1166 = vcombine.high %v1100, %v1116
        %v1168 = vunpack.c.l.s4 1934713408
        %v1169 = vunpack.c.0.s8 %v1168
        %v1170 = vlaneseq
        %v1171 = vshrl.u32 %v1170, 7
        %v1172 = vsub.s32 %v1169, %v1171
        %v1173 = vrot.slane %v1165, %v1172
        %v1175 = vunpack.c.l.s4 1934713408
        %v1176 = vunpack.c.0.s8 %v1175
        %v1177 = vlaneseq
        %v1178 = vshrl.u32 %v1177, 7
        %v1179 = vsub.s32 %v1176, %v1178
        %v1180 = vrot.slane %v1166, %v1179
        %v1181 = vcombine.low %v1125, %v1157
        %v1182 = vcombine.high %v1125, %v1157
        %v1183 = vcombine.low %v1132, %v1164
        %v1184 = vcombine.high %v1132, %v1164
        %v1185 = vcombine.low %v1141, %v1173
        %v1186 = vcombine.high %v1141, %v1173
        %v1187 = vcombine.low %v1148, %v1180
        %v1188 = vcombine.high %v1148, %v1180
        %v1189 = vcombine.low %v804, %v828
        %v1190 = vcombine.high %v804, %v828
        %v1192 = vunpack.c.l.s4 1983009808
        %v1193 = vunpack.c.0.s8 %v1192
        %v1194 = vlaneseq
        %v1195 = vshrl.u32 %v1194, 7
        %v1196 = vsub.s32 %v1193, %v1195
        %v1197 = vrot.slane %v1189, %v1196
        %v1199 = vunpack.c.l.s4 1983009808
        %v1200 = vunpack.c.0.s8 %v1199
        %v1201 = vlaneseq
        %v1202 = vshrl.u32 %v1201, 7
        %v1203 = vsub.s32 %v1200, %v1202
        %v1204 = vrot.slane %v1190, %v1203
        %v1205 = vcombine.low %v816, %v840
        %v1206 = vcombine.high %v816, %v840
        %v1208 = vunpack.c.l.s4 1983009808
        %v1209 = vunpack.c.0.s8 %v1208
        %v1210 = vlaneseq
        %v1211 = vshrl.u32 %v1210, 7
        %v1212 = vsub.s32 %v1209, %v1211
        %v1213 = vrot.slane %v1205, %v1212
        %v1215 = vunpack.c.l.s4 1983009808
        %v1216 = vunpack.c.0.s8 %v1215
        %v1217 = vlaneseq
        %v1218 = vshrl.u32 %v1217, 7
        %v1219 = vsub.s32 %v1216, %v1218
        %v1220 = vrot.slane %v1206, %v1219
        %v1221 = vcombine.low %v1197, %v1213
        %v1222 = vcombine.high %v1197, %v1213
        %v1224 = vunpack.c.l.s4 1934713408
        %v1225 = vunpack.c.0.s8 %v1224
        %v1226 = vlaneseq
        %v1227 = vshrl.u32 %v1226, 7
        %v1228 = vsub.s32 %v1225, %v1227
        %v1229 = vrot.slane %v1221, %v1228
        %v1231 = vunpack.c.l.s4 1934713408
        %v1232 = vunpack.c.0.s8 %v1231
        %v1233 = vlaneseq
        %v1234 = vshrl.u32 %v1233, 7
        %v1235 = vsub.s32 %v1232, %v1234
        %v1236 = vrot.slane %v1222, %v1235
        %v1237 = vcombine.low %v1204, %v1220
        %v1238 = vcombine.high %v1204, %v1220
        %v1240 = vunpack.c.l.s4 1934713408
        %v1241 = vunpack.c.0.s8 %v1240
        %v1242 = vlaneseq
        %v1243 = vshrl.u32 %v1242, 7
        %v1244 = vsub.s32 %v1241, %v1243
        %v1245 = vrot.slane %v1237, %v1244
        %v1247 = vunpack.c.l.s4 1934713408
        %v1248 = vunpack.c.0.s8 %v1247
        %v1249 = vlaneseq
        %v1250 = vshrl.u32 %v1249, 7
        %v1251 = vsub.s32 %v1248, %v1250
        %v1252 = vrot.slane %v1238, %v1251
        %v1253 = vcombine.high %v1229, 0.0
        %v1254 = vcombine.high %v1236, 0.0
        %v1255 = vcombine.high %v1245, 0.0
        %v1256 = vcombine.high %v1252, 0.0
        %v1257 = vcombine.low %v707, %v734
        %v1258 = vcombine.high %v707, %v734
        %v1260 = vunpack.c.l.s4 1983009808
        %v1261 = vunpack.c.0.s8 %v1260
        %v1262 = vlaneseq
        %v1263 = vshrl.u32 %v1262, 7
        %v1264 = vsub.s32 %v1261, %v1263
        %v1265 = vrot.slane %v1257, %v1264
        %v1267 = vunpack.c.l.s4 1983009808
        %v1268 = vunpack.c.0.s8 %v1267
        %v1269 = vlaneseq
        %v1270 = vshrl.u32 %v1269, 7
        %v1271 = vsub.s32 %v1268, %v1270
        %v1272 = vrot.slane %v1258, %v1271
        %v1273 = vcombine.low %v722, %v746
        %v1274 = vcombine.high %v722, %v746
        %v1276 = vunpack.c.l.s4 1983009808
        %v1277 = vunpack.c.0.s8 %v1276
        %v1278 = vlaneseq
        %v1279 = vshrl.u32 %v1278, 7
        %v1280 = vsub.s32 %v1277, %v1279
        %v1281 = vrot.slane %v1273, %v1280
        %v1283 = vunpack.c.l.s4 1983009808
        %v1284 = vunpack.c.0.s8 %v1283
        %v1285 = vlaneseq
        %v1286 = vshrl.u32 %v1285, 7
        %v1287 = vsub.s32 %v1284, %v1286
        %v1288 = vrot.slane %v1274, %v1287
        %v1289 = vcombine.low %v758, %v782
        %v1290 = vcombine.high %v758, %v782
        %v1292 = vunpack.c.l.s4 1983009808
        %v1293 = vunpack.c.0.s8 %v1292
        %v1294 = vlaneseq
        %v1295 = vshrl.u32 %v1294, 7
        %v1296 = vsub.s32 %v1293, %v1295
        %v1297 = vrot.slane %v1289, %v1296
        %v1299 = vunpack.c.l.s4 1983009808
        %v1300 = vunpack.c.0.s8 %v1299
        %v1301 = vlaneseq
        %v1302 = vshrl.u32 %v1301, 7
        %v1303 = vsub.s32 %v1300, %v1302
        %v1304 = vrot.slane %v1290, %v1303
        %v1305 = vcombine.low %v770, %v794
        %v1306 = vcombine.high %v770, %v794
        %v1308 = vunpack.c.l.s4 1983009808
        %v1309 = vunpack.c.0.s8 %v1308
        %v1310 = vlaneseq
        %v1311 = vshrl.u32 %v1310, 7
        %v1312 = vsub.s32 %v1309, %v1311
        %v1313 = vrot.slane %v1305, %v1312
        %v1315 = vunpack.c.l.s4 1983009808
        %v1316 = vunpack.c.0.s8 %v1315
        %v1317 = vlaneseq
        %v1318 = vshrl.u32 %v1317, 7
        %v1319 = vsub.s32 %v1316, %v1318
        %v1320 = vrot.slane %v1306, %v1319
        %v1321 = vcombine.low %v1265, %v1281
        %v1322 = vcombine.high %v1265, %v1281
        %v1324 = vunpack.c.l.s4 1934713408
        %v1325 = vunpack.c.0.s8 %v1324
        %v1326 = vlaneseq
        %v1327 = vshrl.u32 %v1326, 7
        %v1328 = vsub.s32 %v1325, %v1327
        %v1329 = vrot.slane %v1321, %v1328
        %v1331 = vunpack.c.l.s4 1934713408
        %v1332 = vunpack.c.0.s8 %v1331
        %v1333 = vlaneseq
        %v1334 = vshrl.u32 %v1333, 7
        %v1335 = vsub.s32 %v1332, %v1334
        %v1336 = vrot.slane %v1322, %v1335
        %v1337 = vcombine.low %v1272, %v1288
        %v1338 = vcombine.high %v1272, %v1288
        %v1340 = vunpack.c.l.s4 1934713408
        %v1341 = vunpack.c.0.s8 %v1340
        %v1342 = vlaneseq
        %v1343 = vshrl.u32 %v1342, 7
        %v1344 = vsub.s32 %v1341, %v1343
        %v1345 = vrot.slane %v1337, %v1344
        %v1347 = vunpack.c.l.s4 1934713408
        %v1348 = vunpack.c.0.s8 %v1347
        %v1349 = vlaneseq
        %v1350 = vshrl.u32 %v1349, 7
        %v1351 = vsub.s32 %v1348, %v1350
        %v1352 = vrot.slane %v1338, %v1351
        %v1353 = vcombine.low %v1297, %v1313
        %v1354 = vcombine.high %v1297, %v1313
        %v1356 = vunpack.c.l.s4 1934713408
        %v1357 = vunpack.c.0.s8 %v1356
        %v1358 = vlaneseq
        %v1359 = vshrl.u32 %v1358, 7
        %v1360 = vsub.s32 %v1357, %v1359
        %v1361 = vrot.slane %v1353, %v1360
        %v1363 = vunpack.c.l.s4 1934713408
        %v1364 = vunpack.c.0.s8 %v1363
        %v1365 = vlaneseq
        %v1366 = vshrl.u32 %v1365, 7
        %v1367 = vsub.s32 %v1364, %v1366
        %v1368 = vrot.slane %v1354, %v1367
        %v1369 = vcombine.low %v1304, %v1320
        %v1370 = vcombine.high %v1304, %v1320
        %v1372 = vunpack.c.l.s4 1934713408
        %v1373 = vunpack.c.0.s8 %v1372
        %v1374 = vlaneseq
        %v1375 = vshrl.u32 %v1374, 7
        %v1376 = vsub.s32 %v1373, %v1375
        %v1377 = vrot.slane %v1369, %v1376
        %v1379 = vunpack.c.l.s4 1934713408
        %v1380 = vunpack.c.0.s8 %v1379
        %v1381 = vlaneseq
        %v1382 = vshrl.u32 %v1381, 7
        %v1383 = vsub.s32 %v1380, %v1382
        %v1384 = vrot.slane %v1370, %v1383
        %v1385 = vcombine.low %v1329, %v1361
        %v1386 = vcombine.high %v1329, %v1361
        %v1387 = vcombine.low %v1336, %v1368
        %v1388 = vcombine.high %v1336, %v1368
        %v1389 = vcombine.low %v1345, %v1377
        %v1390 = vcombine.high %v1345, %v1377
        %v1391 = vcombine.low %v1352, %v1384
        %v1392 = vcombine.high %v1352, %v1384
        %v1393 = vcombine.low %v806, %v830
        %v1394 = vcombine.high %v806, %v830
        %v1396 = vunpack.c.l.s4 1983009808
        %v1397 = vunpack.c.0.s8 %v1396
        %v1398 = vlaneseq
        %v1399 = vshrl.u32 %v1398, 7
        %v1400 = vsub.s32 %v1397, %v1399
        %v1401 = vrot.slane %v1393, %v1400
        %v1403 = vunpack.c.l.s4 1983009808
        %v1404 = vunpack.c.0.s8 %v1403
        %v1405 = vlaneseq
        %v1406 = vshrl.u32 %v1405, 7
        %v1407 = vsub.s32 %v1404, %v1406
        %v1408 = vrot.slane %v1394, %v1407
        %v1409 = vcombine.low %v818, %v842
        %v1410 = vcombine.high %v818, %v842
        %v1412 = vunpack.c.l.s4 1983009808
        %v1413 = vunpack.c.0.s8 %v1412
        %v1414 = vlaneseq
        %v1415 = vshrl.u32 %v1414, 7
        %v1416 = vsub.s32 %v1413, %v1415
        %v1417 = vrot.slane %v1409, %v1416
        %v1419 = vunpack.c.l.s4 1983009808
        %v1420 = vunpack.c.0.s8 %v1419
        %v1421 = vlaneseq
        %v1422 = vshrl.u32 %v1421, 7
        %v1423 = vsub.s32 %v1420, %v1422
        %v1424 = vrot.slane %v1410, %v1423
        %v1425 = vcombine.low %v1401, %v1417
        %v1426 = vcombine.high %v1401, %v1417
        %v1428 = vunpack.c.l.s4 1934713408
        %v1429 = vunpack.c.0.s8 %v1428
        %v1430 = vlaneseq
        %v1431 = vshrl.u32 %v1430, 7
        %v1432 = vsub.s32 %v1429, %v1431
        %v1433 = vrot.slane %v1425, %v1432
        %v1435 = vunpack.c.l.s4 1934713408
        %v1436 = vunpack.c.0.s8 %v1435
        %v1437 = vlaneseq
        %v1438 = vshrl.u32 %v1437, 7
        %v1439 = vsub.s32 %v1436, %v1438
        %v1440 = vrot.slane %v1426, %v1439
        %v1441 = vcombine.low %v1408, %v1424
        %v1442 = vcombine.high %v1408, %v1424
        %v1444 = vunpack.c.l.s4 1934713408
        %v1445 = vunpack.c.0.s8 %v1444
        %v1446 = vlaneseq
        %v1447 = vshrl.u32 %v1446, 7
        %v1448 = vsub.s32 %v1445, %v1447
        %v1449 = vrot.slane %v1441, %v1448
        %v1451 = vunpack.c.l.s4 1934713408
        %v1452 = vunpack.c.0.s8 %v1451
        %v1453 = vlaneseq
        %v1454 = vshrl.u32 %v1453, 7
        %v1455 = vsub.s32 %v1452, %v1454
        %v1456 = vrot.slane %v1442, %v1455
        %v1457 = vcombine.high %v1433, 0.0
        %v1458 = vcombine.high %v1440, 0.0
        %v1459 = vcombine.high %v1449, 0.0
        %v1460 = vcombine.high %v1456, 0.0
        %v1461 = vcombine.low %v710, %v736
        %v1462 = vcombine.high %v710, %v736
        %v1464 = vunpack.c.l.s4 1983009808
        %v1465 = vunpack.c.0.s8 %v1464
        %v1466 = vlaneseq
        %v1467 = vshrl.u32 %v1466, 7
        %v1468 = vsub.s32 %v1465, %v1467
        %v1469 = vrot.slane %v1461, %v1468
        %v1471 = vunpack.c.l.s4 1983009808
        %v1472 = vunpack.c.0.s8 %v1471
        %v1473 = vlaneseq
        %v1474 = vshrl.u32 %v1473, 7
        %v1475 = vsub.s32 %v1472, %v1474
        %v1476 = vrot.slane %v1462, %v1475
        %v1477 = vcombine.low %v724, %v748
        %v1478 = vcombine.high %v724, %v748
        %v1480 = vunpack.c.l.s4 1983009808
        %v1481 = vunpack.c.0.s8 %v1480
        %v1482 = vlaneseq
        %v1483 = vshrl.u32 %v1482, 7
        %v1484 = vsub.s32 %v1481, %v1483
        %v1485 = vrot.slane %v1477, %v1484
        %v1487 = vunpack.c.l.s4 1983009808
        %v1488 = vunpack.c.0.s8 %v1487
        %v1489 = vlaneseq
        %v1490 = vshrl.u32 %v1489, 7
        %v1491 = vsub.s32 %v1488, %v1490
        %v1492 = vrot.slane %v1478, %v1491
        %v1493 = vcombine.low %v760, %v784
        %v1494 = vcombine.high %v760, %v784
        %v1496 = vunpack.c.l.s4 1983009808
        %v1497 = vunpack.c.0.s8 %v1496
        %v1498 = vlaneseq
        %v1499 = vshrl.u32 %v1498, 7
        %v1500 = vsub.s32 %v1497, %v1499
        %v1501 = vrot.slane %v1493, %v1500
        %v1503 = vunpack.c.l.s4 1983009808
        %v1504 = vunpack.c.0.s8 %v1503
        %v1505 = vlaneseq
        %v1506 = vshrl.u32 %v1505, 7
        %v1507 = vsub.s32 %v1504, %v1506
        %v1508 = vrot.slane %v1494, %v1507
        %v1509 = vcombine.low %v772, %v796
        %v1510 = vcombine.high %v772, %v796
        %v1512 = vunpack.c.l.s4 1983009808
        %v1513 = vunpack.c.0.s8 %v1512
        %v1514 = vlaneseq
        %v1515 = vshrl.u32 %v1514, 7
        %v1516 = vsub.s32 %v1513, %v1515
        %v1517 = vrot.slane %v1509, %v1516
        %v1519 = vunpack.c.l.s4 1983009808
        %v1520 = vunpack.c.0.s8 %v1519
        %v1521 = vlaneseq
        %v1522 = vshrl.u32 %v1521, 7
        %v1523 = vsub.s32 %v1520, %v1522
        %v1524 = vrot.slane %v1510, %v1523
        %v1525 = vcombine.low %v1469, %v1485
        %v1526 = vcombine.high %v1469, %v1485
        %v1528 = vunpack.c.l.s4 1934713408
        %v1529 = vunpack.c.0.s8 %v1528
        %v1530 = vlaneseq
        %v1531 = vshrl.u32 %v1530, 7
        %v1532 = vsub.s32 %v1529, %v1531
        %v1533 = vrot.slane %v1525, %v1532
        %v1535 = vunpack.c.l.s4 1934713408
        %v1536 = vunpack.c.0.s8 %v1535
        %v1537 = vlaneseq
        %v1538 = vshrl.u32 %v1537, 7
        %v1539 = vsub.s32 %v1536, %v1538
        %v1540 = vrot.slane %v1526, %v1539
        %v1541 = vcombine.low %v1476, %v1492
        %v1542 = vcombine.high %v1476, %v1492
        %v1544 = vunpack.c.l.s4 1934713408
        %v1545 = vunpack.c.0.s8 %v1544
        %v1546 = vlaneseq
        %v1547 = vshrl.u32 %v1546, 7
        %v1548 = vsub.s32 %v1545, %v1547
        %v1549 = vrot.slane %v1541, %v1548
        %v1551 = vunpack.c.l.s4 1934713408
        %v1552 = vunpack.c.0.s8 %v1551
        %v1553 = vlaneseq
        %v1554 = vshrl.u32 %v1553, 7
        %v1555 = vsub.s32 %v1552, %v1554
        %v1556 = vrot.slane %v1542, %v1555
        %v1557 = vcombine.low %v1501, %v1517
        %v1558 = vcombine.high %v1501, %v1517
        %v1560 = vunpack.c.l.s4 1934713408
        %v1561 = vunpack.c.0.s8 %v1560
        %v1562 = vlaneseq
        %v1563 = vshrl.u32 %v1562, 7
        %v1564 = vsub.s32 %v1561, %v1563
        %v1565 = vrot.slane %v1557, %v1564
        %v1567 = vunpack.c.l.s4 1934713408
        %v1568 = vunpack.c.0.s8 %v1567
        %v1569 = vlaneseq
        %v1570 = vshrl.u32 %v1569, 7
        %v1571 = vsub.s32 %v1568, %v1570
        %v1572 = vrot.slane %v1558, %v1571
        %v1573 = vcombine.low %v1508, %v1524
        %v1574 = vcombine.high %v1508, %v1524
        %v1576 = vunpack.c.l.s4 1934713408
        %v1577 = vunpack.c.0.s8 %v1576
        %v1578 = vlaneseq
        %v1579 = vshrl.u32 %v1578, 7
        %v1580 = vsub.s32 %v1577, %v1579
        %v1581 = vrot.slane %v1573, %v1580
        %v1583 = vunpack.c.l.s4 1934713408
        %v1584 = vunpack.c.0.s8 %v1583
        %v1585 = vlaneseq
        %v1586 = vshrl.u32 %v1585, 7
        %v1587 = vsub.s32 %v1584, %v1586
        %v1588 = vrot.slane %v1574, %v1587
        %v1589 = vcombine.low %v1533, %v1565
        %v1590 = vcombine.high %v1533, %v1565
        %v1591 = vcombine.low %v1540, %v1572
        %v1592 = vcombine.high %v1540, %v1572
        %v1593 = vcombine.low %v1549, %v1581
        %v1594 = vcombine.high %v1549, %v1581
        %v1595 = vcombine.low %v1556, %v1588
        %v1596 = vcombine.high %v1556, %v1588
        %v1597 = vcombine.low %v808, %v832
        %v1598 = vcombine.high %v808, %v832
        %v1600 = vunpack.c.l.s4 1983009808
        %v1601 = vunpack.c.0.s8 %v1600
        %v1602 = vlaneseq
        %v1603 = vshrl.u32 %v1602, 7
        %v1604 = vsub.s32 %v1601, %v1603
        %v1605 = vrot.slane %v1597, %v1604
        %v1607 = vunpack.c.l.s4 1983009808
        %v1608 = vunpack.c.0.s8 %v1607
        %v1609 = vlaneseq
        %v1610 = vshrl.u32 %v1609, 7
        %v1611 = vsub.s32 %v1608, %v1610
        %v1612 = vrot.slane %v1598, %v1611
        %v1613 = vcombine.low %v820, %v844
        %v1614 = vcombine.high %v820, %v844
        %v1616 = vunpack.c.l.s4 1983009808
        %v1617 = vunpack.c.0.s8 %v1616
        %v1618 = vlaneseq
        %v1619 = vshrl.u32 %v1618, 7
        %v1620 = vsub.s32 %v1617, %v1619
        %v1621 = vrot.slane %v1613, %v1620
        %v1623 = vunpack.c.l.s4 1983009808
        %v1624 = vunpack.c.0.s8 %v1623
        %v1625 = vlaneseq
        %v1626 = vshrl.u32 %v1625, 7
        %v1627 = vsub.s32 %v1624, %v1626
        %v1628 = vrot.slane %v1614, %v1627
        %v1629 = vcombine.low %v1605, %v1621
        %v1630 = vcombine.high %v1605, %v1621
        %v1632 = vunpack.c.l.s4 1934713408
        %v1633 = vunpack.c.0.s8 %v1632
        %v1634 = vlaneseq
        %v1635 = vshrl.u32 %v1634, 7
        %v1636 = vsub.s32 %v1633, %v1635
        %v1637 = vrot.slane %v1629, %v1636
        %v1639 = vunpack.c.l.s4 1934713408
        %v1640 = vunpack.c.0.s8 %v1639
        %v1641 = vlaneseq
        %v1642 = vshrl.u32 %v1641, 7
        %v1643 = vsub.s32 %v1640, %v1642
        %v1644 = vrot.slane %v1630, %v1643
        %v1645 = vcombine.low %v1612, %v1628
        %v1646 = vcombine.high %v1612, %v1628
        %v1648 = vunpack.c.l.s4 1934713408
        %v1649 = vunpack.c.0.s8 %v1648
        %v1650 = vlaneseq
        %v1651 = vshrl.u32 %v1650, 7
        %v1652 = vsub.s32 %v1649, %v1651
        %v1653 = vrot.slane %v1645, %v1652
        %v1655 = vunpack.c.l.s4 1934713408
        %v1656 = vunpack.c.0.s8 %v1655
        %v1657 = vlaneseq
        %v1658 = vshrl.u32 %v1657, 7
        %v1659 = vsub.s32 %v1656, %v1658
        %v1660 = vrot.slane %v1646, %v1659
        %v1661 = vcombine.high %v1637, 0.0
        %v1662 = vcombine.high %v1644, 0.0
        %v1663 = vcombine.high %v1653, 0.0
        %v1664 = vcombine.high %v1660, 0.0
        %v1665 = vcombine.low %v977, %v979
        %v1666 = vcombine.high %v977, %v979
        %v1668 = vunpack.c.l.s4 1983009808
        %v1669 = vunpack.c.0.s8 %v1668
        %v1670 = vlaneseq
        %v1671 = vshrl.u32 %v1670, 7
        %v1672 = vsub.s32 %v1669, %v1671
        %v1673 = vrot.slane %v1665, %v1672
        %v1675 = vunpack.c.l.s4 1983009808
        %v1676 = vunpack.c.0.s8 %v1675
        %v1677 = vlaneseq
        %v1678 = vshrl.u32 %v1677, 7
        %v1679 = vsub.s32 %v1676, %v1678
        %v1680 = vrot.slane %v1666, %v1679
        %v1681 = vcombine.low %v978, %v980
        %v1682 = vcombine.high %v978, %v980
        %v1684 = vunpack.c.l.s4 1983009808
        %v1685 = vunpack.c.0.s8 %v1684
        %v1686 = vlaneseq
        %v1687 = vshrl.u32 %v1686, 7
        %v1688 = vsub.s32 %v1685, %v1687
        %v1689 = vrot.slane %v1681, %v1688
        %v1691 = vunpack.c.l.s4 1983009808
        %v1692 = vunpack.c.0.s8 %v1691
        %v1693 = vlaneseq
        %v1694 = vshrl.u32 %v1693, 7
        %v1695 = vsub.s32 %v1692, %v1694
        %v1696 = vrot.slane %v1682, %v1695
        %v1697 = vcombine.low %v981, %v983
        %v1698 = vcombine.high %v981, %v983
        %v1700 = vunpack.c.l.s4 1983009808
        %v1701 = vunpack.c.0.s8 %v1700
        %v1702 = vlaneseq
        %v1703 = vshrl.u32 %v1702, 7
        %v1704 = vsub.s32 %v1701, %v1703
        %v1705 = vrot.slane %v1697, %v1704
        %v1707 = vunpack.c.l.s4 1983009808
        %v1708 = vunpack.c.0.s8 %v1707
        %v1709 = vlaneseq
        %v1710 = vshrl.u32 %v1709, 7
        %v1711 = vsub.s32 %v1708, %v1710
        %v1712 = vrot.slane %v1698, %v1711
        %v1713 = vcombine.low %v982, %v984
        %v1714 = vcombine.high %v982, %v984
        %v1716 = vunpack.c.l.s4 1983009808
        %v1717 = vunpack.c.0.s8 %v1716
        %v1718 = vlaneseq
        %v1719 = vshrl.u32 %v1718, 7
        %v1720 = vsub.s32 %v1717, %v1719
        %v1721 = vrot.slane %v1713, %v1720
        %v1723 = vunpack.c.l.s4 1983009808
        %v1724 = vunpack.c.0.s8 %v1723
        %v1725 = vlaneseq
        %v1726 = vshrl.u32 %v1725, 7
        %v1727 = vsub.s32 %v1724, %v1726
        %v1728 = vrot.slane %v1714, %v1727
        %v1729 = vcombine.low %v1673, %v1689
        %v1730 = vcombine.high %v1673, %v1689
        %v1732 = vunpack.c.l.s4 1934713408
        %v1733 = vunpack.c.0.s8 %v1732
        %v1734 = vlaneseq
        %v1735 = vshrl.u32 %v1734, 7
        %v1736 = vsub.s32 %v1733, %v1735
        %v1737 = vrot.slane %v1729, %v1736
        %v1739 = vunpack.c.l.s4 1934713408
        %v1740 = vunpack.c.0.s8 %v1739
        %v1741 = vlaneseq
        %v1742 = vshrl.u32 %v1741, 7
        %v1743 = vsub.s32 %v1740, %v1742
        %v1744 = vrot.slane %v1730, %v1743
        %v1745 = vcombine.low %v1680, %v1696
        %v1746 = vcombine.high %v1680, %v1696
        %v1748 = vunpack.c.l.s4 1934713408
        %v1749 = vunpack.c.0.s8 %v1748
        %v1750 = vlaneseq
        %v1751 = vshrl.u32 %v1750, 7
        %v1752 = vsub.s32 %v1749, %v1751
        %v1753 = vrot.slane %v1745, %v1752
        %v1755 = vunpack.c.l.s4 1934713408
        %v1756 = vunpack.c.0.s8 %v1755
        %v1757 = vlaneseq
        %v1758 = vshrl.u32 %v1757, 7
        %v1759 = vsub.s32 %v1756, %v1758
        %v1760 = vrot.slane %v1746, %v1759
        %v1761 = vcombine.low %v1705, %v1721
        %v1762 = vcombine.high %v1705, %v1721
        %v1764 = vunpack.c.l.s4 1934713408
        %v1765 = vunpack.c.0.s8 %v1764
        %v1766 = vlaneseq
        %v1767 = vshrl.u32 %v1766, 7
        %v1768 = vsub.s32 %v1765, %v1767
        %v1769 = vrot.slane %v1761, %v1768
        %v1771 = vunpack.c.l.s4 1934713408
        %v1772 = vunpack.c.0.s8 %v1771
        %v1773 = vlaneseq
        %v1774 = vshrl.u32 %v1773, 7
        %v1775 = vsub.s32 %v1772, %v1774
        %v1776 = vrot.slane %v1762, %v1775
        %v1777 = vcombine.low %v1712, %v1728
        %v1778 = vcombine.high %v1712, %v1728
        %v1780 = vunpack.c.l.s4 1934713408
        %v1781 = vunpack.c.0.s8 %v1780
        %v1782 = vlaneseq
        %v1783 = vshrl.u32 %v1782, 7
        %v1784 = vsub.s32 %v1781, %v1783
        %v1785 = vrot.slane %v1777, %v1784
        %v1787 = vunpack.c.l.s4 1934713408
        %v1788 = vunpack.c.0.s8 %v1787
        %v1789 = vlaneseq
        %v1790 = vshrl.u32 %v1789, 7
        %v1791 = vsub.s32 %v1788, %v1790
        %v1792 = vrot.slane %v1778, %v1791
        %v1793 = vcombine.low %v1737, %v1769
        %v1794 = vcombine.high %v1737, %v1769
        %v1795 = vcombine.low %v1744, %v1776
        %v1796 = vcombine.high %v1744, %v1776
        %v1797 = vcombine.low %v1753, %v1785
        %v1798 = vcombine.high %v1753, %v1785
        %v1799 = vcombine.low %v1760, %v1792
        %v1800 = vcombine.high %v1760, %v1792
        %v1801 = vcombine.low %v1181, %v1183
        %v1802 = vcombine.high %v1181, %v1183
        %v1804 = vunpack.c.l.s4 1983009808
        %v1805 = vunpack.c.0.s8 %v1804
        %v1806 = vlaneseq
        %v1807 = vshrl.u32 %v1806, 7
        %v1808 = vsub.s32 %v1805, %v1807
        %v1809 = vrot.slane %v1801, %v1808
        %v1811 = vunpack.c.l.s4 1983009808
        %v1812 = vunpack.c.0.s8 %v1811
        %v1813 = vlaneseq
        %v1814 = vshrl.u32 %v1813, 7
        %v1815 = vsub.s32 %v1812, %v1814
        %v1816 = vrot.slane %v1802, %v1815
        %v1817 = vcombine.low %v1182, %v1184
        %v1818 = vcombine.high %v1182, %v1184
        %v1820 = vunpack.c.l.s4 1983009808
        %v1821 = vunpack.c.0.s8 %v1820
        %v1822 = vlaneseq
        %v1823 = vshrl.u32 %v1822, 7
        %v1824 = vsub.s32 %v1821, %v1823
        %v1825 = vrot.slane %v1817, %v1824
        %v1827 = vunpack.c.l.s4 1983009808
        %v1828 = vunpack.c.0.s8 %v1827
        %v1829 = vlaneseq
        %v1830 = vshrl.u32 %v1829, 7
        %v1831 = vsub.s32 %v1828, %v1830
        %v1832 = vrot.slane %v1818, %v1831
        %v1833 = vcombine.low %v1185, %v1187
        %v1834 = vcombine.high %v1185, %v1187
        %v1836 = vunpack.c.l.s4 1983009808
        %v1837 = vunpack.c.0.s8 %v1836
        %v1838 = vlaneseq
        %v1839 = vshrl.u32 %v1838, 7
        %v1840 = vsub.s32 %v1837, %v1839
        %v1841 = vrot.slane %v1833, %v1840
        %v1843 = vunpack.c.l.s4 1983009808
        %v1844 = vunpack.c.0.s8 %v1843
        %v1845 = vlaneseq
        %v1846 = vshrl.u32 %v1845, 7
        %v1847 = vsub.s32 %v1844, %v1846
        %v1848 = vrot.slane %v1834, %v1847
        %v1849 = vcombine.low %v1186, %v1188
        %v1850 = vcombine.high %v1186, %v1188
        %v1852 = vunpack.c.l.s4 1983009808
        %v1853 = vunpack.c.0.s8 %v1852
        %v1854 = vlaneseq
        %v1855 = vshrl.u32 %v1854, 7
        %v1856 = vsub.s32 %v1853, %v1855
        %v1857 = vrot.slane %v1849, %v1856
        %v1859 = vunpack.c.l.s4 1983009808
        %v1860 = vunpack.c.0.s8 %v1859
        %v1861 = vlaneseq
        %v1862 = vshrl.u32 %v1861, 7
        %v1863 = vsub.s32 %v1860, %v1862
        %v1864 = vrot.slane %v1850, %v1863
        %v1865 = vcombine.low %v1809, %v1825
        %v1866 = vcombine.high %v1809, %v1825
        %v1868 = vunpack.c.l.s4 1934713408
        %v1869 = vunpack.c.0.s8 %v1868
        %v1870 = vlaneseq
        %v1871 = vshrl.u32 %v1870, 7
        %v1872 = vsub.s32 %v1869, %v1871
        %v1873 = vrot.slane %v1865, %v1872
        %v1875 = vunpack.c.l.s4 1934713408
        %v1876 = vunpack.c.0.s8 %v1875
        %v1877 = vlaneseq
        %v1878 = vshrl.u32 %v1877, 7
        %v1879 = vsub.s32 %v1876, %v1878
        %v1880 = vrot.slane %v1866, %v1879
        %v1881 = vcombine.low %v1816, %v1832
        %v1882 = vcombine.high %v1816, %v1832
        %v1884 = vunpack.c.l.s4 1934713408
        %v1885 = vunpack.c.0.s8 %v1884
        %v1886 = vlaneseq
        %v1887 = vshrl.u32 %v1886, 7
        %v1888 = vsub.s32 %v1885, %v1887
        %v1889 = vrot.slane %v1881, %v1888
        %v1891 = vunpack.c.l.s4 1934713408
        %v1892 = vunpack.c.0.s8 %v1891
        %v1893 = vlaneseq
        %v1894 = vshrl.u32 %v1893, 7
        %v1895 = vsub.s32 %v1892, %v1894
        %v1896 = vrot.slane %v1882, %v1895
        %v1897 = vcombine.low %v1841, %v1857
        %v1898 = vcombine.high %v1841, %v1857
        %v1900 = vunpack.c.l.s4 1934713408
        %v1901 = vunpack.c.0.s8 %v1900
        %v1902 = vlaneseq
        %v1903 = vshrl.u32 %v1902, 7
        %v1904 = vsub.s32 %v1901, %v1903
        %v1905 = vrot.slane %v1897, %v1904
        %v1907 = vunpack.c.l.s4 1934713408
        %v1908 = vunpack.c.0.s8 %v1907
        %v1909 = vlaneseq
        %v1910 = vshrl.u32 %v1909, 7
        %v1911 = vsub.s32 %v1908, %v1910
        %v1912 = vrot.slane %v1898, %v1911
        %v1913 = vcombine.low %v1848, %v1864
        %v1914 = vcombine.high %v1848, %v1864
        %v1916 = vunpack.c.l.s4 1934713408
        %v1917 = vunpack.c.0.s8 %v1916
        %v1918 = vlaneseq
        %v1919 = vshrl.u32 %v1918, 7
        %v1920 = vsub.s32 %v1917, %v1919
        %v1921 = vrot.slane %v1913, %v1920
        %v1923 = vunpack.c.l.s4 1934713408
        %v1924 = vunpack.c.0.s8 %v1923
        %v1925 = vlaneseq
        %v1926 = vshrl.u32 %v1925, 7
        %v1927 = vsub.s32 %v1924, %v1926
        %v1928 = vrot.slane %v1914, %v1927
        %v1929 = vcombine.low %v1873, %v1905
        %v1930 = vcombine.high %v1873, %v1905
        %v1931 = vcombine.low %v1880, %v1912
        %v1932 = vcombine.high %v1880, %v1912
        %v1933 = vcombine.low %v1889, %v1921
        %v1934 = vcombine.high %v1889, %v1921
        %v1935 = vcombine.low %v1896, %v1928
        %v1936 = vcombine.high %v1896, %v1928
        %v1937 = vcombine.low %v1385, %v1387
        %v1938 = vcombine.high %v1385, %v1387
        %v1940 = vunpack.c.l.s4 1983009808
        %v1941 = vunpack.c.0.s8 %v1940
        %v1942 = vlaneseq
        %v1943 = vshrl.u32 %v1942, 7
        %v1944 = vsub.s32 %v1941, %v1943
        %v1945 = vrot.slane %v1937, %v1944
        %v1947 = vunpack.c.l.s4 1983009808
        %v1948 = vunpack.c.0.s8 %v1947
        %v1949 = vlaneseq
        %v1950 = vshrl.u32 %v1949, 7
        %v1951 = vsub.s32 %v1948, %v1950
        %v1952 = vrot.slane %v1938, %v1951
        %v1953 = vcombine.low %v1386, %v1388
        %v1954 = vcombine.high %v1386, %v1388
        %v1956 = vunpack.c.l.s4 1983009808
        %v1957 = vunpack.c.0.s8 %v1956
        %v1958 = vlaneseq
        %v1959 = vshrl.u32 %v1958, 7
        %v1960 = vsub.s32 %v1957, %v1959
        %v1961 = vrot.slane %v1953, %v1960
        %v1963 = vunpack.c.l.s4 1983009808
        %v1964 = vunpack.c.0.s8 %v1963
        %v1965 = vlaneseq
        %v1966 = vshrl.u32 %v1965, 7
        %v1967 = vsub.s32 %v1964, %v1966
        %v1968 = vrot.slane %v1954, %v1967
        %v1969 = vcombine.low %v1389, %v1391
        %v1970 = vcombine.high %v1389, %v1391
        %v1972 = vunpack.c.l.s4 1983009808
        %v1973 = vunpack.c.0.s8 %v1972
        %v1974 = vlaneseq
        %v1975 = vshrl.u32 %v1974, 7
        %v1976 = vsub.s32 %v1973, %v1975
        %v1977 = vrot.slane %v1969, %v1976
        %v1979 = vunpack.c.l.s4 1983009808
        %v1980 = vunpack.c.0.s8 %v1979
        %v1981 = vlaneseq
        %v1982 = vshrl.u32 %v1981, 7
        %v1983 = vsub.s32 %v1980, %v1982
        %v1984 = vrot.slane %v1970, %v1983
        %v1985 = vcombine.low %v1390, %v1392
        %v1986 = vcombine.high %v1390, %v1392
        %v1988 = vunpack.c.l.s4 1983009808
        %v1989 = vunpack.c.0.s8 %v1988
        %v1990 = vlaneseq
        %v1991 = vshrl.u32 %v1990, 7
        %v1992 = vsub.s32 %v1989, %v1991
        %v1993 = vrot.slane %v1985, %v1992
        %v1995 = vunpack.c.l.s4 1983009808
        %v1996 = vunpack.c.0.s8 %v1995
        %v1997 = vlaneseq
        %v1998 = vshrl.u32 %v1997, 7
        %v1999 = vsub.s32 %v1996, %v1998
        %v2000 = vrot.slane %v1986, %v1999
        %v2001 = vcombine.low %v1945, %v1961
        %v2002 = vcombine.high %v1945, %v1961
        %v2004 = vunpack.c.l.s4 1934713408
        %v2005 = vunpack.c.0.s8 %v2004
        %v2006 = vlaneseq
        %v2007 = vshrl.u32 %v2006, 7
        %v2008 = vsub.s32 %v2005, %v2007
        %v2009 = vrot.slane %v2001, %v2008
        %v2011 = vunpack.c.l.s4 1934713408
        %v2012 = vunpack.c.0.s8 %v2011
        %v2013 = vlaneseq
        %v2014 = vshrl.u32 %v2013, 7
        %v2015 = vsub.s32 %v2012, %v2014
        %v2016 = vrot.slane %v2002, %v2015
        %v2017 = vcombine.low %v1952, %v1968
        %v2018 = vcombine.high %v1952, %v1968
        %v2020 = vunpack.c.l.s4 1934713408
        %v2021 = vunpack.c.0.s8 %v2020
        %v2022 = vlaneseq
        %v2023 = vshrl.u32 %v2022, 7
        %v2024 = vsub.s32 %v2021, %v2023
        %v2025 = vrot.slane %v2017, %v2024
        %v2027 = vunpack.c.l.s4 1934713408
        %v2028 = vunpack.c.0.s8 %v2027
        %v2029 = vlaneseq
        %v2030 = vshrl.u32 %v2029, 7
        %v2031 = vsub.s32 %v2028, %v2030
        %v2032 = vrot.slane %v2018, %v2031
        %v2033 = vcombine.low %v1977, %v1993
        %v2034 = vcombine.high %v1977, %v1993
        %v2036 = vunpack.c.l.s4 1934713408
        %v2037 = vunpack.c.0.s8 %v2036
        %v2038 = vlaneseq
        %v2039 = vshrl.u32 %v2038, 7
        %v2040 = vsub.s32 %v2037, %v2039
        %v2041 = vrot.slane %v2033, %v2040
        %v2043 = vunpack.c.l.s4 1934713408
        %v2044 = vunpack.c.0.s8 %v2043
        %v2045 = vlaneseq
        %v2046 = vshrl.u32 %v2045, 7
        %v2047 = vsub.s32 %v2044, %v2046
        %v2048 = vrot.slane %v2034, %v2047
        %v2049 = vcombine.low %v1984, %v2000
        %v2050 = vcombine.high %v1984, %v2000
        %v2052 = vunpack.c.l.s4 1934713408
        %v2053 = vunpack.c.0.s8 %v2052
        %v2054 = vlaneseq
        %v2055 = vshrl.u32 %v2054, 7
        %v2056 = vsub.s32 %v2053, %v2055
        %v2057 = vrot.slane %v2049, %v2056
        %v2059 = vunpack.c.l.s4 1934713408
        %v2060 = vunpack.c.0.s8 %v2059
        %v2061 = vlaneseq
        %v2062 = vshrl.u32 %v2061, 7
        %v2063 = vsub.s32 %v2060, %v2062
        %v2064 = vrot.slane %v2050, %v2063
        %v2065 = vcombine.low %v2009, %v2041
        %v2066 = vcombine.high %v2009, %v2041
        %v2067 = vcombine.low %v2016, %v2048
        %v2068 = vcombine.high %v2016, %v2048
        %v2069 = vcombine.low %v2025, %v2057
        %v2070 = vcombine.high %v2025, %v2057
        %v2071 = vcombine.low %v2032, %v2064
        %v2072 = vcombine.high %v2032, %v2064
        %v2073 = vcombine.low %v1589, %v1591
        %v2074 = vcombine.high %v1589, %v1591
        %v2076 = vunpack.c.l.s4 1983009808
        %v2077 = vunpack.c.0.s8 %v2076
        %v2078 = vlaneseq
        %v2079 = vshrl.u32 %v2078, 7
        %v2080 = vsub.s32 %v2077, %v2079
        %v2081 = vrot.slane %v2073, %v2080
        %v2083 = vunpack.c.l.s4 1983009808
        %v2084 = vunpack.c.0.s8 %v2083
        %v2085 = vlaneseq
        %v2086 = vshrl.u32 %v2085, 7
        %v2087 = vsub.s32 %v2084, %v2086
        %v2088 = vrot.slane %v2074, %v2087
        %v2089 = vcombine.low %v1590, %v1592
        %v2090 = vcombine.high %v1590, %v1592
        %v2092 = vunpack.c.l.s4 1983009808
        %v2093 = vunpack.c.0.s8 %v2092
        %v2094 = vlaneseq
        %v2095 = vshrl.u32 %v2094, 7
        %v2096 = vsub.s32 %v2093, %v2095
        %v2097 = vrot.slane %v2089, %v2096
        %v2099 = vunpack.c.l.s4 1983009808
        %v2100 = vunpack.c.0.s8 %v2099
        %v2101 = vlaneseq
        %v2102 = vshrl.u32 %v2101, 7
        %v2103 = vsub.s32 %v2100, %v2102
        %v2104 = vrot.slane %v2090, %v2103
        %v2105 = vcombine.low %v1593, %v1595
        %v2106 = vcombine.high %v1593, %v1595
        %v2108 = vunpack.c.l.s4 1983009808
        %v2109 = vunpack.c.0.s8 %v2108
        %v2110 = vlaneseq
        %v2111 = vshrl.u32 %v2110, 7
        %v2112 = vsub.s32 %v2109, %v2111
        %v2113 = vrot.slane %v2105, %v2112
        %v2115 = vunpack.c.l.s4 1983009808
        %v2116 = vunpack.c.0.s8 %v2115
        %v2117 = vlaneseq
        %v2118 = vshrl.u32 %v2117, 7
        %v2119 = vsub.s32 %v2116, %v2118
        %v2120 = vrot.slane %v2106, %v2119
        %v2121 = vcombine.low %v1594, %v1596
        %v2122 = vcombine.high %v1594, %v1596
        %v2124 = vunpack.c.l.s4 1983009808
        %v2125 = vunpack.c.0.s8 %v2124
        %v2126 = vlaneseq
        %v2127 = vshrl.u32 %v2126, 7
        %v2128 = vsub.s32 %v2125, %v2127
        %v2129 = vrot.slane %v2121, %v2128
        %v2131 = vunpack.c.l.s4 1983009808
        %v2132 = vunpack.c.0.s8 %v2131
        %v2133 = vlaneseq
        %v2134 = vshrl.u32 %v2133, 7
        %v2135 = vsub.s32 %v2132, %v2134
        %v2136 = vrot.slane %v2122, %v2135
        %v2137 = vcombine.low %v2081, %v2097
        %v2138 = vcombine.high %v2081, %v2097
        %v2140 = vunpack.c.l.s4 1934713408
        %v2141 = vunpack.c.0.s8 %v2140
        %v2142 = vlaneseq
        %v2143 = vshrl.u32 %v2142, 7
        %v2144 = vsub.s32 %v2141, %v2143
        %v2145 = vrot.slane %v2137, %v2144
        %v2147 = vunpack.c.l.s4 1934713408
        %v2148 = vunpack.c.0.s8 %v2147
        %v2149 = vlaneseq
        %v2150 = vshrl.u32 %v2149, 7
        %v2151 = vsub.s32 %v2148, %v2150
        %v2152 = vrot.slane %v2138, %v2151
        %v2153 = vcombine.low %v2088, %v2104
        %v2154 = vcombine.high %v2088, %v2104
        %v2156 = vunpack.c.l.s4 1934713408
        %v2157 = vunpack.c.0.s8 %v2156
        %v2158 = vlaneseq
        %v2159 = vshrl.u32 %v2158, 7
        %v2160 = vsub.s32 %v2157, %v2159
        %v2161 = vrot.slane %v2153, %v2160
        %v2163 = vunpack.c.l.s4 1934713408
        %v2164 = vunpack.c.0.s8 %v2163
        %v2165 = vlaneseq
        %v2166 = vshrl.u32 %v2165, 7
        %v2167 = vsub.s32 %v2164, %v2166
        %v2168 = vrot.slane %v2154, %v2167
        %v2169 = vcombine.low %v2113, %v2129
        %v2170 = vcombine.high %v2113, %v2129
        %v2172 = vunpack.c.l.s4 1934713408
        %v2173 = vunpack.c.0.s8 %v2172
        %v2174 = vlaneseq
        %v2175 = vshrl.u32 %v2174, 7
        %v2176 = vsub.s32 %v2173, %v2175
        %v2177 = vrot.slane %v2169, %v2176
        %v2179 = vunpack.c.l.s4 1934713408
        %v2180 = vunpack.c.0.s8 %v2179
        %v2181 = vlaneseq
        %v2182 = vshrl.u32 %v2181, 7
        %v2183 = vsub.s32 %v2180, %v2182
        %v2184 = vrot.slane %v2170, %v2183
        %v2185 = vcombine.low %v2120, %v2136
        %v2186 = vcombine.high %v2120, %v2136
        %v2188 = vunpack.c.l.s4 1934713408
        %v2189 = vunpack.c.0.s8 %v2188
        %v2190 = vlaneseq
        %v2191 = vshrl.u32 %v2190, 7
        %v2192 = vsub.s32 %v2189, %v2191
        %v2193 = vrot.slane %v2185, %v2192
        %v2195 = vunpack.c.l.s4 1934713408
        %v2196 = vunpack.c.0.s8 %v2195
        %v2197 = vlaneseq
        %v2198 = vshrl.u32 %v2197, 7
        %v2199 = vsub.s32 %v2196, %v2198
        %v2200 = vrot.slane %v2186, %v2199
        %v2201 = vcombine.low %v2145, %v2177
        %v2202 = vcombine.high %v2145, %v2177
        %v2203 = vcombine.low %v2152, %v2184
        %v2204 = vcombine.high %v2152, %v2184
        %v2205 = vcombine.low %v2161, %v2193
        %v2206 = vcombine.high %v2161, %v2193
        %v2207 = vcombine.low %v2168, %v2200
        %v2208 = vcombine.high %v2168, %v2200
        %v2209 = vcombine.low %v1025, %v1032
        %v2211 = vunpack.c.l.s4 1983009808
        %v2212 = vunpack.c.0.s8 %v2211
        %v2213 = vlaneseq
        %v2214 = vshrl.u32 %v2213, 7
        %v2215 = vsub.s32 %v2212, %v2214
        %v2216 = vrot.slane %v2209, %v2215
        %v2217 = vcombine.low %v1049, %v1050
        %v2219 = vunpack.c.l.s4 1983009808
        %v2220 = vunpack.c.0.s8 %v2219
        %v2221 = vlaneseq
        %v2222 = vshrl.u32 %v2221, 7
        %v2223 = vsub.s32 %v2220, %v2222
        %v2224 = vrot.slane %v2217, %v2223
        %v2225 = vcombine.low %v1041, %v1048
        %v2227 = vunpack.c.l.s4 1983009808
        %v2228 = vunpack.c.0.s8 %v2227
        %v2229 = vlaneseq
        %v2230 = vshrl.u32 %v2229, 7
        %v2231 = vsub.s32 %v2228, %v2230
        %v2232 = vrot.slane %v2225, %v2231
        %v2233 = vcombine.low %v1051, %v1052
        %v2235 = vunpack.c.l.s4 1983009808
        %v2236 = vunpack.c.0.s8 %v2235
        %v2237 = vlaneseq
        %v2238 = vshrl.u32 %v2237, 7
        %v2239 = vsub.s32 %v2236, %v2238
        %v2240 = vrot.slane %v2233, %v2239
        %v2241 = vcombine.low %v2216, %v2224
        %v2242 = vcombine.high %v2216, %v2224
        %v2244 = vunpack.c.l.s4 1934713408
        %v2245 = vunpack.c.0.s8 %v2244
        %v2246 = vlaneseq
        %v2247 = vshrl.u32 %v2246, 7
        %v2248 = vsub.s32 %v2245, %v2247
        %v2249 = vrot.slane %v2241, %v2248
        %v2251 = vunpack.c.l.s4 1934713408
        %v2252 = vunpack.c.0.s8 %v2251
        %v2253 = vlaneseq
        %v2254 = vshrl.u32 %v2253, 7
        %v2255 = vsub.s32 %v2252, %v2254
        %v2256 = vrot.slane %v2242, %v2255
        %v2257 = vcombine.low %v2232, %v2240
        %v2258 = vcombine.high %v2232, %v2240
        %v2260 = vunpack.c.l.s4 1934713408
        %v2261 = vunpack.c.0.s8 %v2260
        %v2262 = vlaneseq
        %v2263 = vshrl.u32 %v2262, 7
        %v2264 = vsub.s32 %v2261, %v2263
        %v2265 = vrot.slane %v2257, %v2264
        %v2267 = vunpack.c.l.s4 1934713408
        %v2268 = vunpack.c.0.s8 %v2267
        %v2269 = vlaneseq
        %v2270 = vshrl.u32 %v2269, 7
        %v2271 = vsub.s32 %v2268, %v2270
        %v2272 = vrot.slane %v2258, %v2271
        %v2273 = vcombine.low %v2249, %v2265
        %v2274 = vcombine.high %v2249, %v2265
        %v2275 = vcombine.low %v2256, %v2272
        %v2276 = vcombine.high %v2256, %v2272
        %v2277 = vcombine.low %v1229, %v1236
        %v2279 = vunpack.c.l.s4 1983009808
        %v2280 = vunpack.c.0.s8 %v2279
        %v2281 = vlaneseq
        %v2282 = vshrl.u32 %v2281, 7
        %v2283 = vsub.s32 %v2280, %v2282
        %v2284 = vrot.slane %v2277, %v2283
        %v2285 = vcombine.low %v1253, %v1254
        %v2287 = vunpack.c.l.s4 1983009808
        %v2288 = vunpack.c.0.s8 %v2287
        %v2289 = vlaneseq
        %v2290 = vshrl.u32 %v2289, 7
        %v2291 = vsub.s32 %v2288, %v2290
        %v2292 = vrot.slane %v2285, %v2291
        %v2293 = vcombine.low %v1245, %v1252
        %v2295 = vunpack.c.l.s4 1983009808
        %v2296 = vunpack.c.0.s8 %v2295
        %v2297 = vlaneseq
        %v2298 = vshrl.u32 %v2297, 7
        %v2299 = vsub.s32 %v2296, %v2298
        %v2300 = vrot.slane %v2293, %v2299
        %v2301 = vcombine.low %v1255, %v1256
        %v2303 = vunpack.c.l.s4 1983009808
        %v2304 = vunpack.c.0.s8 %v2303
        %v2305 = vlaneseq
        %v2306 = vshrl.u32 %v2305, 7
        %v2307 = vsub.s32 %v2304, %v2306
        %v2308 = vrot.slane %v2301, %v2307
        %v2309 = vcombine.low %v2284, %v2292
        %v2310 = vcombine.high %v2284, %v2292
        %v2312 = vunpack.c.l.s4 1934713408
        %v2313 = vunpack.c.0.s8 %v2312
        %v2314 = vlaneseq
        %v2315 = vshrl.u32 %v2314, 7
        %v2316 = vsub.s32 %v2313, %v2315
        %v2317 = vrot.slane %v2309, %v2316
        %v2319 = vunpack.c.l.s4 1934713408
        %v2320 = vunpack.c.0.s8 %v2319
        %v2321 = vlaneseq
        %v2322 = vshrl.u32 %v2321, 7
        %v2323 = vsub.s32 %v2320, %v2322
        %v2324 = vrot.slane %v2310, %v2323
        %v2325 = vcombine.low %v2300, %v2308
        %v2326 = vcombine.high %v2300, %v2308
        %v2328 = vunpack.c.l.s4 1934713408
        %v2329 = vunpack.c.0.s8 %v2328
        %v2330 = vlaneseq
        %v2331 = vshrl.u32 %v2330, 7
        %v2332 = vsub.s32 %v2329, %v2331
        %v2333 = vrot.slane %v2325, %v2332
        %v2335 = vunpack.c.l.s4 1934713408
        %v2336 = vunpack.c.0.s8 %v2335
        %v2337 = vlaneseq
        %v2338 = vshrl.u32 %v2337, 7
        %v2339 = vsub.s32 %v2336, %v2338
        %v2340 = vrot.slane %v2326, %v2339
        %v2341 = vcombine.low %v2317, %v2333
        %v2342 = vcombine.high %v2317, %v2333
        %v2343 = vcombine.low %v2324, %v2340
        %v2344 = vcombine.high %v2324, %v2340
        %v2345 = vcombine.low %v1433, %v1440
        %v2347 = vunpack.c.l.s4 1983009808
        %v2348 = vunpack.c.0.s8 %v2347
        %v2349 = vlaneseq
        %v2350 = vshrl.u32 %v2349, 7
        %v2351 = vsub.s32 %v2348, %v2350
        %v2352 = vrot.slane %v2345, %v2351
        %v2353 = vcombine.low %v1457, %v1458
        %v2355 = vunpack.c.l.s4 1983009808
        %v2356 = vunpack.c.0.s8 %v2355
        %v2357 = vlaneseq
        %v2358 = vshrl.u32 %v2357, 7
        %v2359 = vsub.s32 %v2356, %v2358
        %v2360 = vrot.slane %v2353, %v2359
        %v2361 = vcombine.low %v1449, %v1456
        %v2363 = vunpack.c.l.s4 1983009808
        %v2364 = vunpack.c.0.s8 %v2363
        %v2365 = vlaneseq
        %v2366 = vshrl.u32 %v2365, 7
        %v2367 = vsub.s32 %v2364, %v2366
        %v2368 = vrot.slane %v2361, %v2367
        %v2369 = vcombine.low %v1459, %v1460
        %v2371 = vunpack.c.l.s4 1983009808
        %v2372 = vunpack.c.0.s8 %v2371
        %v2373 = vlaneseq
        %v2374 = vshrl.u32 %v2373, 7
        %v2375 = vsub.s32 %v2372, %v2374
        %v2376 = vrot.slane %v2369, %v2375
        %v2377 = vcombine.low %v2352, %v2360
        %v2378 = vcombine.high %v2352, %v2360
        %v2380 = vunpack.c.l.s4 1934713408
        %v2381 = vunpack.c.0.s8 %v2380
        %v2382 = vlaneseq
        %v2383 = vshrl.u32 %v2382, 7
        %v2384 = vsub.s32 %v2381, %v2383
        %v2385 = vrot.slane %v2377, %v2384
        %v2387 = vunpack.c.l.s4 1934713408
        %v2388 = vunpack.c.0.s8 %v2387
        %v2389 = vlaneseq
        %v2390 = vshrl.u32 %v2389, 7
        %v2391 = vsub.s32 %v2388, %v2390
        %v2392 = vrot.slane %v2378, %v2391
        %v2393 = vcombine.low %v2368, %v2376
        %v2394 = vcombine.high %v2368, %v2376
        %v2396 = vunpack.c.l.s4 1934713408
        %v2397 = vunpack.c.0.s8 %v2396
        %v2398 = vlaneseq
        %v2399 = vshrl.u32 %v2398, 7
        %v2400 = vsub.s32 %v2397, %v2399
        %v2401 = vrot.slane %v2393, %v2400
        %v2403 = vunpack.c.l.s4 1934713408
        %v2404 = vunpack.c.0.s8 %v2403
        %v2405 = vlaneseq
        %v2406 = vshrl.u32 %v2405, 7
        %v2407 = vsub.s32 %v2404, %v2406
        %v2408 = vrot.slane %v2394, %v2407
        %v2409 = vcombine.low %v2385, %v2401
        %v2410 = vcombine.high %v2385, %v2401
        %v2411 = vcombine.low %v2392, %v2408
        %v2412 = vcombine.high %v2392, %v2408
        %v2413 = vcombine.low %v1637, %v1644
        %v2415 = vunpack.c.l.s4 1983009808
        %v2416 = vunpack.c.0.s8 %v2415
        %v2417 = vlaneseq
        %v2418 = vshrl.u32 %v2417, 7
        %v2419 = vsub.s32 %v2416, %v2418
        %v2420 = vrot.slane %v2413, %v2419
        %v2421 = vcombine.low %v1661, %v1662
        %v2423 = vunpack.c.l.s4 1983009808
        %v2424 = vunpack.c.0.s8 %v2423
        %v2425 = vlaneseq
        %v2426 = vshrl.u32 %v2425, 7
        %v2427 = vsub.s32 %v2424, %v2426
        %v2428 = vrot.slane %v2421, %v2427
        %v2429 = vcombine.low %v1653, %v1660
        %v2431 = vunpack.c.l.s4 1983009808
        %v2432 = vunpack.c.0.s8 %v2431
        %v2433 = vlaneseq
        %v2434 = vshrl.u32 %v2433, 7
        %v2435 = vsub.s32 %v2432, %v2434
        %v2436 = vrot.slane %v2429, %v2435
        %v2437 = vcombine.low %v1663, %v1664
        %v2439 = vunpack.c.l.s4 1983009808
        %v2440 = vunpack.c.0.s8 %v2439
        %v2441 = vlaneseq
        %v2442 = vshrl.u32 %v2441, 7
        %v2443 = vsub.s32 %v2440, %v2442
        %v2444 = vrot.slane %v2437, %v2443
        %v2445 = vcombine.low %v2420, %v2428
        %v2446 = vcombine.high %v2420, %v2428
        %v2448 = vunpack.c.l.s4 1934713408
        %v2449 = vunpack.c.0.s8 %v2448
        %v2450 = vlaneseq
        %v2451 = vshrl.u32 %v2450, 7
        %v2452 = vsub.s32 %v2449, %v2451
        %v2453 = vrot.slane %v2445, %v2452
        %v2455 = vunpack.c.l.s4 1934713408
        %v2456 = vunpack.c.0.s8 %v2455
        %v2457 = vlaneseq
        %v2458 = vshrl.u32 %v2457, 7
        %v2459 = vsub.s32 %v2456, %v2458
        %v2460 = vrot.slane %v2446, %v2459
        %v2461 = vcombine.low %v2436, %v2444
        %v2462 = vcombine.high %v2436, %v2444
        %v2464 = vunpack.c.l.s4 1934713408
        %v2465 = vunpack.c.0.s8 %v2464
        %v2466 = vlaneseq
        %v2467 = vshrl.u32 %v2466, 7
        %v2468 = vsub.s32 %v2465, %v2467
        %v2469 = vrot.slane %v2461, %v2468
        %v2471 = vunpack.c.l.s4 1934713408
        %v2472 = vunpack.c.0.s8 %v2471
        %v2473 = vlaneseq
        %v2474 = vshrl.u32 %v2473, 7
        %v2475 = vsub.s32 %v2472, %v2474
        %v2476 = vrot.slane %v2462, %v2475
        %v2477 = vcombine.low %v2453, %v2469
        %v2478 = vcombine.high %v2453, %v2469
        %v2479 = vcombine.low %v2460, %v2476
        %v2480 = vcombine.high %v2460, %v2476
        %v2481 = vlaneseq
        %v2482 = vshrl.u32 %v2481, 7
        %v2483 = vlaneseq
        %v2484 = vand.u32 %v2483, 127
        %vm2485 = vcmp.le.s32.totalorder %v2484, %v2482
        %v2486 = vsel %vm2485, 0.0, -1e+30
        %v2487 = vpack.c.bf16 %v1793, %v1793
        %v2488 = vpack.c.bf16 %v1929, %v1929
        %v2489 = vpack.c.bf16 %v2065, %v2065
        %v2490 = vpack.c.bf16 %v2201, %v2201
        %v2491 = vpack.c.bf16 %v1794, %v1794
        %v2492 = vpack.c.bf16 %v1930, %v1930
        %v2493 = vpack.c.bf16 %v2066, %v2066
        %v2494 = vpack.c.bf16 %v2202, %v2202
        %v2495 = vpack.c.bf16 %v1795, %v1795
        %v2496 = vpack.c.bf16 %v1931, %v1931
        %v2497 = vpack.c.bf16 %v2067, %v2067
        %v2498 = vpack.c.bf16 %v2203, %v2203
        %v2499 = vpack.c.bf16 %v1796, %v1796
        %v2500 = vpack.c.bf16 %v1932, %v1932
        %v2501 = vpack.c.bf16 %v2068, %v2068
        %v2502 = vpack.c.bf16 %v2204, %v2204
        %v2503 = vpack.c.bf16 %v1797, %v1797
        %v2504 = vpack.c.bf16 %v1933, %v1933
        %v2505 = vpack.c.bf16 %v2069, %v2069
        %v2506 = vpack.c.bf16 %v2205, %v2205
        %v2507 = vpack.c.bf16 %v1798, %v1798
        %v2508 = vpack.c.bf16 %v1934, %v1934
        %v2509 = vpack.c.bf16 %v2070, %v2070
        %v2510 = vpack.c.bf16 %v2206, %v2206
        %v2511 = vpack.c.bf16 %v1799, %v1799
        %v2512 = vpack.c.bf16 %v1935, %v1935
        %v2513 = vpack.c.bf16 %v2071, %v2071
        %v2514 = vpack.c.bf16 %v2207, %v2207
        %v2515 = vpack.c.bf16 %v1800, %v1800
        %v2516 = vpack.c.bf16 %v1936, %v1936
        %v2517 = vpack.c.bf16 %v2072, %v2072
        %v2518 = vpack.c.bf16 %v2208, %v2208
        %vm2519 = vcmask 64512
        %v2521 = vsel %vm2519, %v2487, 0
        %v2524 = vsel %vm2519, %v2503, 0
        %2526 = vmatprep.subr.bf16.mxu0 0
        %2527 = vmatpush1.bf16.xpose.msra.mxu0 %v2524
        %2528 = vmatprep.subr.bf16.mxu0 0
        %2529 = vmatpush1.bf16.xpose.msra.mxu0 0
        %2530 = vmatprep.subr.bf16.mxu0 0
        %2531 = vmatpush1.bf16.xpose.msra.mxu0 0
        %2532 = vmatprep.subr.bf16.mxu0 0
        %2533 = vmatpush1.bf16.xpose.msra.mxu0 0
        %2534 = vmatprep.subr.bf16.mxu0 0
        %2535 = vmatpush1.bf16.xpose.msra.mxu0 0
        %2536 = vmatprep.subr.bf16.mxu0 0
        %2537 = vmatpush1.bf16.xpose.msra.mxu0 0
        %2538 = vmatprep.subr.bf16.mxu0 0
        %2539 = vmatpush1.bf16.xpose.msra.mxu0 0
        %2540 = vmatprep.subr.bf16.mxu0 0
        %2541 = vmatpush1.bf16.xpose.msra.mxu0 0
        %2542 = vmatprep.subr.bf16.mxu0 0
        %2543 = vmatpush1.bf16.xpose.msra.mxu0 0
        %2544 = vmatprep.subr.bf16.mxu0 0
        %2545 = vmatpush1.bf16.xpose.msra.mxu0 0
        %2546 = vmatprep.subr.bf16.mxu0 0
        %2547 = vmatpush1.bf16.xpose.msra.mxu0 0
        %2548 = vmatprep.subr.bf16.mxu0 0
        %2549 = vmatpush1.bf16.xpose.msra.mxu0 0
        %2550 = vmatprep.subr.bf16.mxu0 0
        %2551 = vmatpush1.bf16.xpose.msra.mxu0 0
        %2552 = vmatprep.subr.bf16.mxu0 0
        %2553 = vmatpush1.bf16.xpose.msra.mxu0 0
        %2554 = vmatprep.subr.bf16.mxu0 0
        %2555 = vmatpush1.bf16.xpose.msra.mxu0 0
        %2556 = vmatprep.subr.bf16.mxu0 0
        %2557 = vmatpush1.bf16.xpose.msra.mxu0 0
        %2558 = vmatprep.mubr.bf16.mxu0 0
        %2559 = vmatmul.mubr.bf16.gmra.mrb[0].mxu0 %v2521
        %v2560 = vpop.f32.mrb[0].mxu0
        %v2561 = vadd.f32 0.0, %v2560
        %v2562 = vpop.f32.mrb[0].mxu0
        %v2563 = vpop.f32.mrb[0].mxu0
        %v2564 = vpop.f32.mrb[0].mxu0
        %2565 = vdwg.mxu0
        %v2567 = vsel %vm2519, %v2488, 0
        %v2570 = vsel %vm2519, %v2504, 0
        %2572 = vmatprep.subr.bf16.mxu0 0
        %2573 = vmatpush1.bf16.xpose.msra.mxu0 %v2570
        %2574 = vmatprep.subr.bf16.mxu0 0
        %2575 = vmatpush1.bf16.xpose.msra.mxu0 0
        %2576 = vmatprep.subr.bf16.mxu0 0
        %2577 = vmatpush1.bf16.xpose.msra.mxu0 0
        %2578 = vmatprep.subr.bf16.mxu0 0
        %2579 = vmatpush1.bf16.xpose.msra.mxu0 0
        %2580 = vmatprep.subr.bf16.mxu0 0
        %2581 = vmatpush1.bf16.xpose.msra.mxu0 0
        %2582 = vmatprep.subr.bf16.mxu0 0
        %2583 = vmatpush1.bf16.xpose.msra.mxu0 0
        %2584 = vmatprep.subr.bf16.mxu0 0
        %2585 = vmatpush1.bf16.xpose.msra.mxu0 0
        %2586 = vmatprep.subr.bf16.mxu0 0
        %2587 = vmatpush1.bf16.xpose.msra.mxu0 0
        %2588 = vmatprep.subr.bf16.mxu0 0
        %2589 = vmatpush1.bf16.xpose.msra.mxu0 0
        %2590 = vmatprep.subr.bf16.mxu0 0
        %2591 = vmatpush1.bf16.xpose.msra.mxu0 0
        %2592 = vmatprep.subr.bf16.mxu0 0
        %2593 = vmatpush1.bf16.xpose.msra.mxu0 0
        %2594 = vmatprep.subr.bf16.mxu0 0
        %2595 = vmatpush1.bf16.xpose.msra.mxu0 0
        %2596 = vmatprep.subr.bf16.mxu0 0
        %2597 = vmatpush1.bf16.xpose.msra.mxu0 0
        %2598 = vmatprep.subr.bf16.mxu0 0
        %2599 = vmatpush1.bf16.xpose.msra.mxu0 0
        %2600 = vmatprep.subr.bf16.mxu0 0
        %2601 = vmatpush1.bf16.xpose.msra.mxu0 0
        %2602 = vmatprep.subr.bf16.mxu0 0
        %2603 = vmatpush1.bf16.xpose.msra.mxu0 0
        %2604 = vmatprep.mubr.bf16.mxu0 0
        %2605 = vmatmul.mubr.bf16.gmra.mrb[0].mxu0 %v2567
        %v2606 = vpop.f32.mrb[0].mxu0
        %v2607 = vadd.f32 0.0, %v2606
        %v2608 = vpop.f32.mrb[0].mxu0
        %v2609 = vpop.f32.mrb[0].mxu0
        %v2610 = vpop.f32.mrb[0].mxu0
        %2611 = vdwg.mxu0
        %v2613 = vsel %vm2519, %v2489, 0
        %v2616 = vsel %vm2519, %v2505, 0
        %2618 = vmatprep.subr.bf16.mxu0 0
        %2619 = vmatpush1.bf16.xpose.msra.mxu0 %v2616
        %2620 = vmatprep.subr.bf16.mxu0 0
        %2621 = vmatpush1.bf16.xpose.msra.mxu0 0
        %2622 = vmatprep.subr.bf16.mxu0 0
        %2623 = vmatpush1.bf16.xpose.msra.mxu0 0
        %2624 = vmatprep.subr.bf16.mxu0 0
        %2625 = vmatpush1.bf16.xpose.msra.mxu0 0
        %2626 = vmatprep.subr.bf16.mxu0 0
        %2627 = vmatpush1.bf16.xpose.msra.mxu0 0
        %2628 = vmatprep.subr.bf16.mxu0 0
        %2629 = vmatpush1.bf16.xpose.msra.mxu0 0
        %2630 = vmatprep.subr.bf16.mxu0 0
        %2631 = vmatpush1.bf16.xpose.msra.mxu0 0
        %2632 = vmatprep.subr.bf16.mxu0 0
        %2633 = vmatpush1.bf16.xpose.msra.mxu0 0
        %2634 = vmatprep.subr.bf16.mxu0 0
        %2635 = vmatpush1.bf16.xpose.msra.mxu0 0
        %2636 = vmatprep.subr.bf16.mxu0 0
        %2637 = vmatpush1.bf16.xpose.msra.mxu0 0
        %2638 = vmatprep.subr.bf16.mxu0 0
        %2639 = vmatpush1.bf16.xpose.msra.mxu0 0
        %2640 = vmatprep.subr.bf16.mxu0 0
        %2641 = vmatpush1.bf16.xpose.msra.mxu0 0
        %2642 = vmatprep.subr.bf16.mxu0 0
        %2643 = vmatpush1.bf16.xpose.msra.mxu0 0
        %2644 = vmatprep.subr.bf16.mxu0 0
        %2645 = vmatpush1.bf16.xpose.msra.mxu0 0
        %2646 = vmatprep.subr.bf16.mxu0 0
        %2647 = vmatpush1.bf16.xpose.msra.mxu0 0
        %2648 = vmatprep.subr.bf16.mxu0 0
        %2649 = vmatpush1.bf16.xpose.msra.mxu0 0
        %2650 = vmatprep.mubr.bf16.mxu0 0
        %2651 = vmatmul.mubr.bf16.gmra.mrb[0].mxu0 %v2613
        %v2652 = vpop.f32.mrb[0].mxu0
        %v2653 = vadd.f32 0.0, %v2652
        %v2654 = vpop.f32.mrb[0].mxu0
        %v2655 = vpop.f32.mrb[0].mxu0
        %v2656 = vpop.f32.mrb[0].mxu0
        %2657 = vdwg.mxu0
        %v2659 = vsel %vm2519, %v2490, 0
        %v2662 = vsel %vm2519, %v2506, 0
        %2664 = vmatprep.subr.bf16.mxu0 0
        %2665 = vmatpush1.bf16.xpose.msra.mxu0 %v2662
        %2666 = vmatprep.subr.bf16.mxu0 0
        %2667 = vmatpush1.bf16.xpose.msra.mxu0 0
        %2668 = vmatprep.subr.bf16.mxu0 0
        %2669 = vmatpush1.bf16.xpose.msra.mxu0 0
        %2670 = vmatprep.subr.bf16.mxu0 0
        %2671 = vmatpush1.bf16.xpose.msra.mxu0 0
        %2672 = vmatprep.subr.bf16.mxu0 0
        %2673 = vmatpush1.bf16.xpose.msra.mxu0 0
        %2674 = vmatprep.subr.bf16.mxu0 0
        %2675 = vmatpush1.bf16.xpose.msra.mxu0 0
        %2676 = vmatprep.subr.bf16.mxu0 0
        %2677 = vmatpush1.bf16.xpose.msra.mxu0 0
        %2678 = vmatprep.subr.bf16.mxu0 0
        %2679 = vmatpush1.bf16.xpose.msra.mxu0 0
        %2680 = vmatprep.subr.bf16.mxu0 0
        %2681 = vmatpush1.bf16.xpose.msra.mxu0 0
        %2682 = vmatprep.subr.bf16.mxu0 0
        %2683 = vmatpush1.bf16.xpose.msra.mxu0 0
        %2684 = vmatprep.subr.bf16.mxu0 0
        %2685 = vmatpush1.bf16.xpose.msra.mxu0 0
        %2686 = vmatprep.subr.bf16.mxu0 0
        %2687 = vmatpush1.bf16.xpose.msra.mxu0 0
        %2688 = vmatprep.subr.bf16.mxu0 0
        %2689 = vmatpush1.bf16.xpose.msra.mxu0 0
        %2690 = vmatprep.subr.bf16.mxu0 0
        %2691 = vmatpush1.bf16.xpose.msra.mxu0 0
        %2692 = vmatprep.subr.bf16.mxu0 0
        %2693 = vmatpush1.bf16.xpose.msra.mxu0 0
        %2694 = vmatprep.subr.bf16.mxu0 0
        %2695 = vmatpush1.bf16.xpose.msra.mxu0 0
        %2696 = vmatprep.mubr.bf16.mxu0 0
        %2697 = vmatmul.mubr.bf16.gmra.mrb[0].mxu0 %v2659
        %v2698 = vpop.f32.mrb[0].mxu0
        %v2699 = vadd.f32 0.0, %v2698
        %v2700 = vpop.f32.mrb[0].mxu0
        %v2701 = vpop.f32.mrb[0].mxu0
        %v2702 = vpop.f32.mrb[0].mxu0
        %2703 = vdwg.mxu0
        %v2705 = vsel %vm2519, %v2491, 0
        %v2708 = vsel %vm2519, %v2507, 0
        %2710 = vmatprep.subr.bf16.mxu0 0
        %2711 = vmatpush1.bf16.xpose.msra.mxu0 %v2708
        %2712 = vmatprep.subr.bf16.mxu0 0
        %2713 = vmatpush1.bf16.xpose.msra.mxu0 0
        %2714 = vmatprep.subr.bf16.mxu0 0
        %2715 = vmatpush1.bf16.xpose.msra.mxu0 0
        %2716 = vmatprep.subr.bf16.mxu0 0
        %2717 = vmatpush1.bf16.xpose.msra.mxu0 0
        %2718 = vmatprep.subr.bf16.mxu0 0
        %2719 = vmatpush1.bf16.xpose.msra.mxu0 0
        %2720 = vmatprep.subr.bf16.mxu0 0
        %2721 = vmatpush1.bf16.xpose.msra.mxu0 0
        %2722 = vmatprep.subr.bf16.mxu0 0
        %2723 = vmatpush1.bf16.xpose.msra.mxu0 0
        %2724 = vmatprep.subr.bf16.mxu0 0
        %2725 = vmatpush1.bf16.xpose.msra.mxu0 0
        %2726 = vmatprep.subr.bf16.mxu0 0
        %2727 = vmatpush1.bf16.xpose.msra.mxu0 0
        %2728 = vmatprep.subr.bf16.mxu0 0
        %2729 = vmatpush1.bf16.xpose.msra.mxu0 0
        %2730 = vmatprep.subr.bf16.mxu0 0
        %2731 = vmatpush1.bf16.xpose.msra.mxu0 0
        %2732 = vmatprep.subr.bf16.mxu0 0
        %2733 = vmatpush1.bf16.xpose.msra.mxu0 0
        %2734 = vmatprep.subr.bf16.mxu0 0
        %2735 = vmatpush1.bf16.xpose.msra.mxu0 0
        %2736 = vmatprep.subr.bf16.mxu0 0
        %2737 = vmatpush1.bf16.xpose.msra.mxu0 0
        %2738 = vmatprep.subr.bf16.mxu0 0
        %2739 = vmatpush1.bf16.xpose.msra.mxu0 0
        %2740 = vmatprep.subr.bf16.mxu0 0
        %2741 = vmatpush1.bf16.xpose.msra.mxu0 0
        %2742 = vmatprep.mubr.bf16.mxu0 0
        %2743 = vmatmul.mubr.bf16.gmra.mrb[0].mxu0 %v2705
        %v2744 = vpop.f32.mrb[0].mxu0
        %v2745 = vadd.f32 0.0, %v2744
        %v2746 = vpop.f32.mrb[0].mxu0
        %v2747 = vpop.f32.mrb[0].mxu0
        %v2748 = vpop.f32.mrb[0].mxu0
        %2749 = vdwg.mxu0
        %v2751 = vsel %vm2519, %v2492, 0
        %v2754 = vsel %vm2519, %v2508, 0
        %2756 = vmatprep.subr.bf16.mxu0 0
        %2757 = vmatpush1.bf16.xpose.msra.mxu0 %v2754
        %2758 = vmatprep.subr.bf16.mxu0 0
        %2759 = vmatpush1.bf16.xpose.msra.mxu0 0
        %2760 = vmatprep.subr.bf16.mxu0 0
        %2761 = vmatpush1.bf16.xpose.msra.mxu0 0
        %2762 = vmatprep.subr.bf16.mxu0 0
        %2763 = vmatpush1.bf16.xpose.msra.mxu0 0
        %2764 = vmatprep.subr.bf16.mxu0 0
        %2765 = vmatpush1.bf16.xpose.msra.mxu0 0
        %2766 = vmatprep.subr.bf16.mxu0 0
        %2767 = vmatpush1.bf16.xpose.msra.mxu0 0
        %2768 = vmatprep.subr.bf16.mxu0 0
        %2769 = vmatpush1.bf16.xpose.msra.mxu0 0
        %2770 = vmatprep.subr.bf16.mxu0 0
        %2771 = vmatpush1.bf16.xpose.msra.mxu0 0
        %2772 = vmatprep.subr.bf16.mxu0 0
        %2773 = vmatpush1.bf16.xpose.msra.mxu0 0
        %2774 = vmatprep.subr.bf16.mxu0 0
        %2775 = vmatpush1.bf16.xpose.msra.mxu0 0
        %2776 = vmatprep.subr.bf16.mxu0 0
        %2777 = vmatpush1.bf16.xpose.msra.mxu0 0
        %2778 = vmatprep.subr.bf16.mxu0 0
        %2779 = vmatpush1.bf16.xpose.msra.mxu0 0
        %2780 = vmatprep.subr.bf16.mxu0 0
        %2781 = vmatpush1.bf16.xpose.msra.mxu0 0
        %2782 = vmatprep.subr.bf16.mxu0 0
        %2783 = vmatpush1.bf16.xpose.msra.mxu0 0
        %2784 = vmatprep.subr.bf16.mxu0 0
        %2785 = vmatpush1.bf16.xpose.msra.mxu0 0
        %2786 = vmatprep.subr.bf16.mxu0 0
        %2787 = vmatpush1.bf16.xpose.msra.mxu0 0
        %2788 = vmatprep.mubr.bf16.mxu0 0
        %2789 = vmatmul.mubr.bf16.gmra.mrb[0].mxu0 %v2751
        %v2790 = vpop.f32.mrb[0].mxu0
        %v2791 = vadd.f32 0.0, %v2790
        %v2792 = vpop.f32.mrb[0].mxu0
        %v2793 = vpop.f32.mrb[0].mxu0
        %v2794 = vpop.f32.mrb[0].mxu0
        %2795 = vdwg.mxu0
        %v2797 = vsel %vm2519, %v2493, 0
        %v2800 = vsel %vm2519, %v2509, 0
        %2802 = vmatprep.subr.bf16.mxu0 0
        %2803 = vmatpush1.bf16.xpose.msra.mxu0 %v2800
        %2804 = vmatprep.subr.bf16.mxu0 0
        %2805 = vmatpush1.bf16.xpose.msra.mxu0 0
        %2806 = vmatprep.subr.bf16.mxu0 0
        %2807 = vmatpush1.bf16.xpose.msra.mxu0 0
        %2808 = vmatprep.subr.bf16.mxu0 0
        %2809 = vmatpush1.bf16.xpose.msra.mxu0 0
        %2810 = vmatprep.subr.bf16.mxu0 0
        %2811 = vmatpush1.bf16.xpose.msra.mxu0 0
        %2812 = vmatprep.subr.bf16.mxu0 0
        %2813 = vmatpush1.bf16.xpose.msra.mxu0 0
        %2814 = vmatprep.subr.bf16.mxu0 0
        %2815 = vmatpush1.bf16.xpose.msra.mxu0 0
        %2816 = vmatprep.subr.bf16.mxu0 0
        %2817 = vmatpush1.bf16.xpose.msra.mxu0 0
        %2818 = vmatprep.subr.bf16.mxu0 0
        %2819 = vmatpush1.bf16.xpose.msra.mxu0 0
        %2820 = vmatprep.subr.bf16.mxu0 0
        %2821 = vmatpush1.bf16.xpose.msra.mxu0 0
        %2822 = vmatprep.subr.bf16.mxu0 0
        %2823 = vmatpush1.bf16.xpose.msra.mxu0 0
        %2824 = vmatprep.subr.bf16.mxu0 0
        %2825 = vmatpush1.bf16.xpose.msra.mxu0 0
        %2826 = vmatprep.subr.bf16.mxu0 0
        %2827 = vmatpush1.bf16.xpose.msra.mxu0 0
        %2828 = vmatprep.subr.bf16.mxu0 0
        %2829 = vmatpush1.bf16.xpose.msra.mxu0 0
        %2830 = vmatprep.subr.bf16.mxu0 0
        %2831 = vmatpush1.bf16.xpose.msra.mxu0 0
        %2832 = vmatprep.subr.bf16.mxu0 0
        %2833 = vmatpush1.bf16.xpose.msra.mxu0 0
        %2834 = vmatprep.mubr.bf16.mxu0 0
        %2835 = vmatmul.mubr.bf16.gmra.mrb[0].mxu0 %v2797
        %v2836 = vpop.f32.mrb[0].mxu0
        %v2837 = vadd.f32 0.0, %v2836
        %v2838 = vpop.f32.mrb[0].mxu0
        %v2839 = vpop.f32.mrb[0].mxu0
        %v2840 = vpop.f32.mrb[0].mxu0
        %2841 = vdwg.mxu0
        %v2843 = vsel %vm2519, %v2494, 0
        %v2846 = vsel %vm2519, %v2510, 0
        %2848 = vmatprep.subr.bf16.mxu0 0
        %2849 = vmatpush1.bf16.xpose.msra.mxu0 %v2846
        %2850 = vmatprep.subr.bf16.mxu0 0
        %2851 = vmatpush1.bf16.xpose.msra.mxu0 0
        %2852 = vmatprep.subr.bf16.mxu0 0
        %2853 = vmatpush1.bf16.xpose.msra.mxu0 0
        %2854 = vmatprep.subr.bf16.mxu0 0
        %2855 = vmatpush1.bf16.xpose.msra.mxu0 0
        %2856 = vmatprep.subr.bf16.mxu0 0
        %2857 = vmatpush1.bf16.xpose.msra.mxu0 0
        %2858 = vmatprep.subr.bf16.mxu0 0
        %2859 = vmatpush1.bf16.xpose.msra.mxu0 0
        %2860 = vmatprep.subr.bf16.mxu0 0
        %2861 = vmatpush1.bf16.xpose.msra.mxu0 0
        %2862 = vmatprep.subr.bf16.mxu0 0
        %2863 = vmatpush1.bf16.xpose.msra.mxu0 0
        %2864 = vmatprep.subr.bf16.mxu0 0
        %2865 = vmatpush1.bf16.xpose.msra.mxu0 0
        %2866 = vmatprep.subr.bf16.mxu0 0
        %2867 = vmatpush1.bf16.xpose.msra.mxu0 0
        %2868 = vmatprep.subr.bf16.mxu0 0
        %2869 = vmatpush1.bf16.xpose.msra.mxu0 0
        %2870 = vmatprep.subr.bf16.mxu0 0
        %2871 = vmatpush1.bf16.xpose.msra.mxu0 0
        %2872 = vmatprep.subr.bf16.mxu0 0
        %2873 = vmatpush1.bf16.xpose.msra.mxu0 0
        %2874 = vmatprep.subr.bf16.mxu0 0
        %2875 = vmatpush1.bf16.xpose.msra.mxu0 0
        %2876 = vmatprep.subr.bf16.mxu0 0
        %2877 = vmatpush1.bf16.xpose.msra.mxu0 0
        %2878 = vmatprep.subr.bf16.mxu0 0
        %2879 = vmatpush1.bf16.xpose.msra.mxu0 0
        %2880 = vmatprep.mubr.bf16.mxu0 0
        %2881 = vmatmul.mubr.bf16.gmra.mrb[0].mxu0 %v2843
        %v2882 = vpop.f32.mrb[0].mxu0
        %v2883 = vadd.f32 0.0, %v2882
        %v2884 = vpop.f32.mrb[0].mxu0
        %v2885 = vpop.f32.mrb[0].mxu0
        %v2886 = vpop.f32.mrb[0].mxu0
        %2887 = vdwg.mxu0
        %v2889 = vsel %vm2519, %v2495, 0
        %v2892 = vsel %vm2519, %v2511, 0
        %2894 = vmatprep.subr.bf16.mxu0 0
        %2895 = vmatpush1.bf16.xpose.msra.mxu0 %v2892
        %2896 = vmatprep.subr.bf16.mxu0 0
        %2897 = vmatpush1.bf16.xpose.msra.mxu0 0
        %2898 = vmatprep.subr.bf16.mxu0 0
        %2899 = vmatpush1.bf16.xpose.msra.mxu0 0
        %2900 = vmatprep.subr.bf16.mxu0 0
        %2901 = vmatpush1.bf16.xpose.msra.mxu0 0
        %2902 = vmatprep.subr.bf16.mxu0 0
        %2903 = vmatpush1.bf16.xpose.msra.mxu0 0
        %2904 = vmatprep.subr.bf16.mxu0 0
        %2905 = vmatpush1.bf16.xpose.msra.mxu0 0
        %2906 = vmatprep.subr.bf16.mxu0 0
        %2907 = vmatpush1.bf16.xpose.msra.mxu0 0
        %2908 = vmatprep.subr.bf16.mxu0 0
        %2909 = vmatpush1.bf16.xpose.msra.mxu0 0
        %2910 = vmatprep.subr.bf16.mxu0 0
        %2911 = vmatpush1.bf16.xpose.msra.mxu0 0
        %2912 = vmatprep.subr.bf16.mxu0 0
        %2913 = vmatpush1.bf16.xpose.msra.mxu0 0
        %2914 = vmatprep.subr.bf16.mxu0 0
        %2915 = vmatpush1.bf16.xpose.msra.mxu0 0
        %2916 = vmatprep.subr.bf16.mxu0 0
        %2917 = vmatpush1.bf16.xpose.msra.mxu0 0
        %2918 = vmatprep.subr.bf16.mxu0 0
        %2919 = vmatpush1.bf16.xpose.msra.mxu0 0
        %2920 = vmatprep.subr.bf16.mxu0 0
        %2921 = vmatpush1.bf16.xpose.msra.mxu0 0
        %2922 = vmatprep.subr.bf16.mxu0 0
        %2923 = vmatpush1.bf16.xpose.msra.mxu0 0
        %2924 = vmatprep.subr.bf16.mxu0 0
        %2925 = vmatpush1.bf16.xpose.msra.mxu0 0
        %2926 = vmatprep.mubr.bf16.mxu0 0
        %2927 = vmatmul.mubr.bf16.gmra.mrb[0].mxu0 %v2889
        %v2928 = vpop.f32.mrb[0].mxu0
        %v2929 = vadd.f32 0.0, %v2928
        %v2930 = vpop.f32.mrb[0].mxu0
        %v2931 = vpop.f32.mrb[0].mxu0
        %v2932 = vpop.f32.mrb[0].mxu0
        %2933 = vdwg.mxu0
        %v2935 = vsel %vm2519, %v2496, 0
        %v2938 = vsel %vm2519, %v2512, 0
        %2940 = vmatprep.subr.bf16.mxu0 0
        %2941 = vmatpush1.bf16.xpose.msra.mxu0 %v2938
        %2942 = vmatprep.subr.bf16.mxu0 0
        %2943 = vmatpush1.bf16.xpose.msra.mxu0 0
        %2944 = vmatprep.subr.bf16.mxu0 0
        %2945 = vmatpush1.bf16.xpose.msra.mxu0 0
        %2946 = vmatprep.subr.bf16.mxu0 0
        %2947 = vmatpush1.bf16.xpose.msra.mxu0 0
        %2948 = vmatprep.subr.bf16.mxu0 0
        %2949 = vmatpush1.bf16.xpose.msra.mxu0 0
        %2950 = vmatprep.subr.bf16.mxu0 0
        %2951 = vmatpush1.bf16.xpose.msra.mxu0 0
        %2952 = vmatprep.subr.bf16.mxu0 0
        %2953 = vmatpush1.bf16.xpose.msra.mxu0 0
        %2954 = vmatprep.subr.bf16.mxu0 0
        %2955 = vmatpush1.bf16.xpose.msra.mxu0 0
        %2956 = vmatprep.subr.bf16.mxu0 0
        %2957 = vmatpush1.bf16.xpose.msra.mxu0 0
        %2958 = vmatprep.subr.bf16.mxu0 0
        %2959 = vmatpush1.bf16.xpose.msra.mxu0 0
        %2960 = vmatprep.subr.bf16.mxu0 0
        %2961 = vmatpush1.bf16.xpose.msra.mxu0 0
        %2962 = vmatprep.subr.bf16.mxu0 0
        %2963 = vmatpush1.bf16.xpose.msra.mxu0 0
        %2964 = vmatprep.subr.bf16.mxu0 0
        %2965 = vmatpush1.bf16.xpose.msra.mxu0 0
        %2966 = vmatprep.subr.bf16.mxu0 0
        %2967 = vmatpush1.bf16.xpose.msra.mxu0 0
        %2968 = vmatprep.subr.bf16.mxu0 0
        %2969 = vmatpush1.bf16.xpose.msra.mxu0 0
        %2970 = vmatprep.subr.bf16.mxu0 0
        %2971 = vmatpush1.bf16.xpose.msra.mxu0 0
        %2972 = vmatprep.mubr.bf16.mxu0 0
        %2973 = vmatmul.mubr.bf16.gmra.mrb[0].mxu0 %v2935
        %v2974 = vpop.f32.mrb[0].mxu0
        %v2975 = vadd.f32 0.0, %v2974
        %v2976 = vpop.f32.mrb[0].mxu0
        %v2977 = vpop.f32.mrb[0].mxu0
        %v2978 = vpop.f32.mrb[0].mxu0
        %2979 = vdwg.mxu0
        %v2981 = vsel %vm2519, %v2497, 0
        %v2984 = vsel %vm2519, %v2513, 0
        %2986 = vmatprep.subr.bf16.mxu0 0
        %2987 = vmatpush1.bf16.xpose.msra.mxu0 %v2984
        %2988 = vmatprep.subr.bf16.mxu0 0
        %2989 = vmatpush1.bf16.xpose.msra.mxu0 0
        %2990 = vmatprep.subr.bf16.mxu0 0
        %2991 = vmatpush1.bf16.xpose.msra.mxu0 0
        %2992 = vmatprep.subr.bf16.mxu0 0
        %2993 = vmatpush1.bf16.xpose.msra.mxu0 0
        %2994 = vmatprep.subr.bf16.mxu0 0
        %2995 = vmatpush1.bf16.xpose.msra.mxu0 0
        %2996 = vmatprep.subr.bf16.mxu0 0
        %2997 = vmatpush1.bf16.xpose.msra.mxu0 0
        %2998 = vmatprep.subr.bf16.mxu0 0
        %2999 = vmatpush1.bf16.xpose.msra.mxu0 0
        %3000 = vmatprep.subr.bf16.mxu0 0
        %3001 = vmatpush1.bf16.xpose.msra.mxu0 0
        %3002 = vmatprep.subr.bf16.mxu0 0
        %3003 = vmatpush1.bf16.xpose.msra.mxu0 0
        %3004 = vmatprep.subr.bf16.mxu0 0
        %3005 = vmatpush1.bf16.xpose.msra.mxu0 0
        %3006 = vmatprep.subr.bf16.mxu0 0
        %3007 = vmatpush1.bf16.xpose.msra.mxu0 0
        %3008 = vmatprep.subr.bf16.mxu0 0
        %3009 = vmatpush1.bf16.xpose.msra.mxu0 0
        %3010 = vmatprep.subr.bf16.mxu0 0
        %3011 = vmatpush1.bf16.xpose.msra.mxu0 0
        %3012 = vmatprep.subr.bf16.mxu0 0
        %3013 = vmatpush1.bf16.xpose.msra.mxu0 0
        %3014 = vmatprep.subr.bf16.mxu0 0
        %3015 = vmatpush1.bf16.xpose.msra.mxu0 0
        %3016 = vmatprep.subr.bf16.mxu0 0
        %3017 = vmatpush1.bf16.xpose.msra.mxu0 0
        %3018 = vmatprep.mubr.bf16.mxu0 0
        %3019 = vmatmul.mubr.bf16.gmra.mrb[0].mxu0 %v2981
        %v3020 = vpop.f32.mrb[0].mxu0
        %v3021 = vadd.f32 0.0, %v3020
        %v3022 = vpop.f32.mrb[0].mxu0
        %v3023 = vpop.f32.mrb[0].mxu0
        %v3024 = vpop.f32.mrb[0].mxu0
        %3025 = vdwg.mxu0
        %v3027 = vsel %vm2519, %v2498, 0
        %v3030 = vsel %vm2519, %v2514, 0
        %3032 = vmatprep.subr.bf16.mxu0 0
        %3033 = vmatpush1.bf16.xpose.msra.mxu0 %v3030
        %3034 = vmatprep.subr.bf16.mxu0 0
        %3035 = vmatpush1.bf16.xpose.msra.mxu0 0
        %3036 = vmatprep.subr.bf16.mxu0 0
        %3037 = vmatpush1.bf16.xpose.msra.mxu0 0
        %3038 = vmatprep.subr.bf16.mxu0 0
        %3039 = vmatpush1.bf16.xpose.msra.mxu0 0
        %3040 = vmatprep.subr.bf16.mxu0 0
        %3041 = vmatpush1.bf16.xpose.msra.mxu0 0
        %3042 = vmatprep.subr.bf16.mxu0 0
        %3043 = vmatpush1.bf16.xpose.msra.mxu0 0
        %3044 = vmatprep.subr.bf16.mxu0 0
        %3045 = vmatpush1.bf16.xpose.msra.mxu0 0
        %3046 = vmatprep.subr.bf16.mxu0 0
        %3047 = vmatpush1.bf16.xpose.msra.mxu0 0
        %3048 = vmatprep.subr.bf16.mxu0 0
        %3049 = vmatpush1.bf16.xpose.msra.mxu0 0
        %3050 = vmatprep.subr.bf16.mxu0 0
        %3051 = vmatpush1.bf16.xpose.msra.mxu0 0
        %3052 = vmatprep.subr.bf16.mxu0 0
        %3053 = vmatpush1.bf16.xpose.msra.mxu0 0
        %3054 = vmatprep.subr.bf16.mxu0 0
        %3055 = vmatpush1.bf16.xpose.msra.mxu0 0
        %3056 = vmatprep.subr.bf16.mxu0 0
        %3057 = vmatpush1.bf16.xpose.msra.mxu0 0
        %3058 = vmatprep.subr.bf16.mxu0 0
        %3059 = vmatpush1.bf16.xpose.msra.mxu0 0
        %3060 = vmatprep.subr.bf16.mxu0 0
        %3061 = vmatpush1.bf16.xpose.msra.mxu0 0
        %3062 = vmatprep.subr.bf16.mxu0 0
        %3063 = vmatpush1.bf16.xpose.msra.mxu0 0
        %3064 = vmatprep.mubr.bf16.mxu0 0
        %3065 = vmatmul.mubr.bf16.gmra.mrb[0].mxu0 %v3027
        %v3066 = vpop.f32.mrb[0].mxu0
        %v3067 = vadd.f32 0.0, %v3066
        %v3068 = vpop.f32.mrb[0].mxu0
        %v3069 = vpop.f32.mrb[0].mxu0
        %v3070 = vpop.f32.mrb[0].mxu0
        %3071 = vdwg.mxu0
        %v3073 = vsel %vm2519, %v2499, 0
        %v3076 = vsel %vm2519, %v2515, 0
        %3078 = vmatprep.subr.bf16.mxu0 0
        %3079 = vmatpush1.bf16.xpose.msra.mxu0 %v3076
        %3080 = vmatprep.subr.bf16.mxu0 0
        %3081 = vmatpush1.bf16.xpose.msra.mxu0 0
        %3082 = vmatprep.subr.bf16.mxu0 0
        %3083 = vmatpush1.bf16.xpose.msra.mxu0 0
        %3084 = vmatprep.subr.bf16.mxu0 0
        %3085 = vmatpush1.bf16.xpose.msra.mxu0 0
        %3086 = vmatprep.subr.bf16.mxu0 0
        %3087 = vmatpush1.bf16.xpose.msra.mxu0 0
        %3088 = vmatprep.subr.bf16.mxu0 0
        %3089 = vmatpush1.bf16.xpose.msra.mxu0 0
        %3090 = vmatprep.subr.bf16.mxu0 0
        %3091 = vmatpush1.bf16.xpose.msra.mxu0 0
        %3092 = vmatprep.subr.bf16.mxu0 0
        %3093 = vmatpush1.bf16.xpose.msra.mxu0 0
        %3094 = vmatprep.subr.bf16.mxu0 0
        %3095 = vmatpush1.bf16.xpose.msra.mxu0 0
        %3096 = vmatprep.subr.bf16.mxu0 0
        %3097 = vmatpush1.bf16.xpose.msra.mxu0 0
        %3098 = vmatprep.subr.bf16.mxu0 0
        %3099 = vmatpush1.bf16.xpose.msra.mxu0 0
        %3100 = vmatprep.subr.bf16.mxu0 0
        %3101 = vmatpush1.bf16.xpose.msra.mxu0 0
        %3102 = vmatprep.subr.bf16.mxu0 0
        %3103 = vmatpush1.bf16.xpose.msra.mxu0 0
        %3104 = vmatprep.subr.bf16.mxu0 0
        %3105 = vmatpush1.bf16.xpose.msra.mxu0 0
        %3106 = vmatprep.subr.bf16.mxu0 0
        %3107 = vmatpush1.bf16.xpose.msra.mxu0 0
        %3108 = vmatprep.subr.bf16.mxu0 0
        %3109 = vmatpush1.bf16.xpose.msra.mxu0 0
        %3110 = vmatprep.mubr.bf16.mxu0 0
        %3111 = vmatmul.mubr.bf16.gmra.mrb[0].mxu0 %v3073
        %v3112 = vpop.f32.mrb[0].mxu0
        %v3113 = vadd.f32 0.0, %v3112
        %v3114 = vpop.f32.mrb[0].mxu0
        %v3115 = vpop.f32.mrb[0].mxu0
        %v3116 = vpop.f32.mrb[0].mxu0
        %3117 = vdwg.mxu0
        %v3119 = vsel %vm2519, %v2500, 0
        %v3122 = vsel %vm2519, %v2516, 0
        %3124 = vmatprep.subr.bf16.mxu0 0
        %3125 = vmatpush1.bf16.xpose.msra.mxu0 %v3122
        %3126 = vmatprep.subr.bf16.mxu0 0
        %3127 = vmatpush1.bf16.xpose.msra.mxu0 0
        %3128 = vmatprep.subr.bf16.mxu0 0
        %3129 = vmatpush1.bf16.xpose.msra.mxu0 0
        %3130 = vmatprep.subr.bf16.mxu0 0
        %3131 = vmatpush1.bf16.xpose.msra.mxu0 0
        %3132 = vmatprep.subr.bf16.mxu0 0
        %3133 = vmatpush1.bf16.xpose.msra.mxu0 0
        %3134 = vmatprep.subr.bf16.mxu0 0
        %3135 = vmatpush1.bf16.xpose.msra.mxu0 0
        %3136 = vmatprep.subr.bf16.mxu0 0
        %3137 = vmatpush1.bf16.xpose.msra.mxu0 0
        %3138 = vmatprep.subr.bf16.mxu0 0
        %3139 = vmatpush1.bf16.xpose.msra.mxu0 0
        %3140 = vmatprep.subr.bf16.mxu0 0
        %3141 = vmatpush1.bf16.xpose.msra.mxu0 0
        %3142 = vmatprep.subr.bf16.mxu0 0
        %3143 = vmatpush1.bf16.xpose.msra.mxu0 0
        %3144 = vmatprep.subr.bf16.mxu0 0
        %3145 = vmatpush1.bf16.xpose.msra.mxu0 0
        %3146 = vmatprep.subr.bf16.mxu0 0
        %3147 = vmatpush1.bf16.xpose.msra.mxu0 0
        %3148 = vmatprep.subr.bf16.mxu0 0
        %3149 = vmatpush1.bf16.xpose.msra.mxu0 0
        %3150 = vmatprep.subr.bf16.mxu0 0
        %3151 = vmatpush1.bf16.xpose.msra.mxu0 0
        %3152 = vmatprep.subr.bf16.mxu0 0
        %3153 = vmatpush1.bf16.xpose.msra.mxu0 0
        %3154 = vmatprep.subr.bf16.mxu0 0
        %3155 = vmatpush1.bf16.xpose.msra.mxu0 0
        %3156 = vmatprep.mubr.bf16.mxu0 0
        %3157 = vmatmul.mubr.bf16.gmra.mrb[0].mxu0 %v3119
        %v3158 = vpop.f32.mrb[0].mxu0
        %v3159 = vadd.f32 0.0, %v3158
        %v3160 = vpop.f32.mrb[0].mxu0
        %v3161 = vpop.f32.mrb[0].mxu0
        %v3162 = vpop.f32.mrb[0].mxu0
        %3163 = vdwg.mxu0
        %v3165 = vsel %vm2519, %v2501, 0
        %v3168 = vsel %vm2519, %v2517, 0
        %3170 = vmatprep.subr.bf16.mxu0 0
        %3171 = vmatpush1.bf16.xpose.msra.mxu0 %v3168
        %3172 = vmatprep.subr.bf16.mxu0 0
        %3173 = vmatpush1.bf16.xpose.msra.mxu0 0
        %3174 = vmatprep.subr.bf16.mxu0 0
        %3175 = vmatpush1.bf16.xpose.msra.mxu0 0
        %3176 = vmatprep.subr.bf16.mxu0 0
        %3177 = vmatpush1.bf16.xpose.msra.mxu0 0
        %3178 = vmatprep.subr.bf16.mxu0 0
        %3179 = vmatpush1.bf16.xpose.msra.mxu0 0
        %3180 = vmatprep.subr.bf16.mxu0 0
        %3181 = vmatpush1.bf16.xpose.msra.mxu0 0
        %3182 = vmatprep.subr.bf16.mxu0 0
        %3183 = vmatpush1.bf16.xpose.msra.mxu0 0
        %3184 = vmatprep.subr.bf16.mxu0 0
        %3185 = vmatpush1.bf16.xpose.msra.mxu0 0
        %3186 = vmatprep.subr.bf16.mxu0 0
        %3187 = vmatpush1.bf16.xpose.msra.mxu0 0
        %3188 = vmatprep.subr.bf16.mxu0 0
        %3189 = vmatpush1.bf16.xpose.msra.mxu0 0
        %3190 = vmatprep.subr.bf16.mxu0 0
        %3191 = vmatpush1.bf16.xpose.msra.mxu0 0
        %3192 = vmatprep.subr.bf16.mxu0 0
        %3193 = vmatpush1.bf16.xpose.msra.mxu0 0
        %3194 = vmatprep.subr.bf16.mxu0 0
        %3195 = vmatpush1.bf16.xpose.msra.mxu0 0
        %3196 = vmatprep.subr.bf16.mxu0 0
        %3197 = vmatpush1.bf16.xpose.msra.mxu0 0
        %3198 = vmatprep.subr.bf16.mxu0 0
        %3199 = vmatpush1.bf16.xpose.msra.mxu0 0
        %3200 = vmatprep.subr.bf16.mxu0 0
        %3201 = vmatpush1.bf16.xpose.msra.mxu0 0
        %3202 = vmatprep.mubr.bf16.mxu0 0
        %3203 = vmatmul.mubr.bf16.gmra.mrb[0].mxu0 %v3165
        %v3204 = vpop.f32.mrb[0].mxu0
        %v3205 = vadd.f32 0.0, %v3204
        %v3206 = vpop.f32.mrb[0].mxu0
        %v3207 = vpop.f32.mrb[0].mxu0
        %v3208 = vpop.f32.mrb[0].mxu0
        %3209 = vdwg.mxu0
        %v3211 = vsel %vm2519, %v2502, 0
        %v3214 = vsel %vm2519, %v2518, 0
        %3216 = vmatprep.subr.bf16.mxu0 0
        %3217 = vmatpush1.bf16.xpose.msra.mxu0 %v3214
        %3218 = vmatprep.subr.bf16.mxu0 0
        %3219 = vmatpush1.bf16.xpose.msra.mxu0 0
        %3220 = vmatprep.subr.bf16.mxu0 0
        %3221 = vmatpush1.bf16.xpose.msra.mxu0 0
        %3222 = vmatprep.subr.bf16.mxu0 0
        %3223 = vmatpush1.bf16.xpose.msra.mxu0 0
        %3224 = vmatprep.subr.bf16.mxu0 0
        %3225 = vmatpush1.bf16.xpose.msra.mxu0 0
        %3226 = vmatprep.subr.bf16.mxu0 0
        %3227 = vmatpush1.bf16.xpose.msra.mxu0 0
        %3228 = vmatprep.subr.bf16.mxu0 0
        %3229 = vmatpush1.bf16.xpose.msra.mxu0 0
        %3230 = vmatprep.subr.bf16.mxu0 0
        %3231 = vmatpush1.bf16.xpose.msra.mxu0 0
        %3232 = vmatprep.subr.bf16.mxu0 0
        %3233 = vmatpush1.bf16.xpose.msra.mxu0 0
        %3234 = vmatprep.subr.bf16.mxu0 0
        %3235 = vmatpush1.bf16.xpose.msra.mxu0 0
        %3236 = vmatprep.subr.bf16.mxu0 0
        %3237 = vmatpush1.bf16.xpose.msra.mxu0 0
        %3238 = vmatprep.subr.bf16.mxu0 0
        %3239 = vmatpush1.bf16.xpose.msra.mxu0 0
        %3240 = vmatprep.subr.bf16.mxu0 0
        %3241 = vmatpush1.bf16.xpose.msra.mxu0 0
        %3242 = vmatprep.subr.bf16.mxu0 0
        %3243 = vmatpush1.bf16.xpose.msra.mxu0 0
        %3244 = vmatprep.subr.bf16.mxu0 0
        %3245 = vmatpush1.bf16.xpose.msra.mxu0 0
        %3246 = vmatprep.subr.bf16.mxu0 0
        %3247 = vmatpush1.bf16.xpose.msra.mxu0 0
        %3248 = vmatprep.mubr.bf16.mxu0 0
        %3249 = vmatmul.mubr.bf16.gmra.mrb[0].mxu0 %v3211
        %v3250 = vpop.f32.mrb[0].mxu0
        %v3251 = vadd.f32 0.0, %v3250
        %v3252 = vpop.f32.mrb[0].mxu0
        %v3253 = vpop.f32.mrb[0].mxu0
        %v3254 = vpop.f32.mrb[0].mxu0
        %3255 = vdwg.mxu0
        %v3256 = vmul.f32 %v2561, 0.35355338
        %v3257 = vmul.f32 %v2607, 0.35355338
        %v3258 = vmul.f32 %v2653, 0.35355338
        %v3259 = vmul.f32 %v2699, 0.35355338
        %v3260 = vmul.f32 %v2745, 0.35355338
        %v3261 = vmul.f32 %v2791, 0.35355338
        %v3262 = vmul.f32 %v2837, 0.35355338
        %v3263 = vmul.f32 %v2883, 0.35355338
        %v3264 = vmul.f32 %v2929, 0.35355338
        %v3265 = vmul.f32 %v2975, 0.35355338
        %v3266 = vmul.f32 %v3021, 0.35355338
        %v3267 = vmul.f32 %v3067, 0.35355338
        %v3268 = vmul.f32 %v3113, 0.35355338
        %v3269 = vmul.f32 %v3159, 0.35355338
        %v3270 = vmul.f32 %v3205, 0.35355338
        %v3271 = vmul.f32 %v3251, 0.35355338
        %v3272 = vadd.f32 %v3256, %v2486
        %v3273 = vadd.f32 %v3257, %v2486
        %v3274 = vadd.f32 %v3258, %v2486
        %v3275 = vadd.f32 %v3259, %v2486
        %v3276 = vadd.f32 %v3260, %v2486
        %v3277 = vadd.f32 %v3261, %v2486
        %v3278 = vadd.f32 %v3262, %v2486
        %v3279 = vadd.f32 %v3263, %v2486
        %v3280 = vadd.f32 %v3264, %v2486
        %v3281 = vadd.f32 %v3265, %v2486
        %v3282 = vadd.f32 %v3266, %v2486
        %v3283 = vadd.f32 %v3267, %v2486
        %v3284 = vadd.f32 %v3268, %v2486
        %v3285 = vadd.f32 %v3269, %v2486
        %v3286 = vadd.f32 %v3270, %v2486
        %v3287 = vadd.f32 %v3271, %v2486
        %v3288 = vsel %vm2519, %v3272, -inf
        %3289 = vmax.xlane.f32.xlu0 %v3288
        %v3290 = vpop.xlane.xlu0 %3289
        %v3291 = vsel %vm2519, %v3273, -inf
        %3292 = vmax.xlane.f32.xlu0 %v3291
        %v3293 = vpop.xlane.xlu0 %3292
        %v3294 = vsel %vm2519, %v3274, -inf
        %3295 = vmax.xlane.f32.xlu0 %v3294
        %v3296 = vpop.xlane.xlu0 %3295
        %v3297 = vsel %vm2519, %v3275, -inf
        %3298 = vmax.xlane.f32.xlu0 %v3297
        %v3299 = vpop.xlane.xlu0 %3298
        %v3300 = vsel %vm2519, %v3276, -inf
        %3301 = vmax.xlane.f32.xlu0 %v3300
        %v3302 = vpop.xlane.xlu0 %3301
        %v3303 = vsel %vm2519, %v3277, -inf
        %3304 = vmax.xlane.f32.xlu0 %v3303
        %v3305 = vpop.xlane.xlu0 %3304
        %v3306 = vsel %vm2519, %v3278, -inf
        %3307 = vmax.xlane.f32.xlu0 %v3306
        %v3308 = vpop.xlane.xlu0 %3307
        %v3309 = vsel %vm2519, %v3279, -inf
        %3310 = vmax.xlane.f32.xlu0 %v3309
        %v3311 = vpop.xlane.xlu0 %3310
        %v3312 = vsel %vm2519, %v3280, -inf
        %3313 = vmax.xlane.f32.xlu0 %v3312
        %v3314 = vpop.xlane.xlu0 %3313
        %v3315 = vsel %vm2519, %v3281, -inf
        %3316 = vmax.xlane.f32.xlu0 %v3315
        %v3317 = vpop.xlane.xlu0 %3316
        %v3318 = vsel %vm2519, %v3282, -inf
        %3319 = vmax.xlane.f32.xlu0 %v3318
        %v3320 = vpop.xlane.xlu0 %3319
        %v3321 = vsel %vm2519, %v3283, -inf
        %3322 = vmax.xlane.f32.xlu0 %v3321
        %v3323 = vpop.xlane.xlu0 %3322
        %v3324 = vsel %vm2519, %v3284, -inf
        %3325 = vmax.xlane.f32.xlu0 %v3324
        %v3326 = vpop.xlane.xlu0 %3325
        %v3327 = vsel %vm2519, %v3285, -inf
        %3328 = vmax.xlane.f32.xlu0 %v3327
        %v3329 = vpop.xlane.xlu0 %3328
        %v3330 = vsel %vm2519, %v3286, -inf
        %3331 = vmax.xlane.f32.xlu0 %v3330
        %v3332 = vpop.xlane.xlu0 %3331
        %v3333 = vsel %vm2519, %v3287, -inf
        %3334 = vmax.xlane.f32.xlu0 %v3333
        %v3335 = vpop.xlane.xlu0 %3334
        %v3336 = vsub.f32 %v3272, %v3290
        %v3337 = vsub.f32 %v3273, %v3293
        %v3338 = vsub.f32 %v3274, %v3296
        %v3339 = vsub.f32 %v3275, %v3299
        %v3340 = vsub.f32 %v3276, %v3302
        %v3341 = vsub.f32 %v3277, %v3305
        %v3342 = vsub.f32 %v3278, %v3308
        %v3343 = vsub.f32 %v3279, %v3311
        %v3344 = vsub.f32 %v3280, %v3314
        %v3345 = vsub.f32 %v3281, %v3317
        %v3346 = vsub.f32 %v3282, %v3320
        %v3347 = vsub.f32 %v3283, %v3323
        %v3348 = vsub.f32 %v3284, %v3326
        %v3349 = vsub.f32 %v3285, %v3329
        %v3350 = vsub.f32 %v3286, %v3332
        %v3351 = vsub.f32 %v3287, %v3335
        %v3352 = vmul.f32 %v3336, 1.442695
        %v3353 = vpow.pop %v3352
        %v3354 = vmul.f32 %v3337, 1.442695
        %v3355 = vpow.pop %v3354
        %v3356 = vmul.f32 %v3338, 1.442695
        %v3357 = vpow.pop %v3356
        %v3358 = vmul.f32 %v3339, 1.442695
        %v3359 = vpow.pop %v3358
        %v3360 = vmul.f32 %v3340, 1.442695
        %v3361 = vpow.pop %v3360
        %v3362 = vmul.f32 %v3341, 1.442695
        %v3363 = vpow.pop %v3362
        %v3364 = vmul.f32 %v3342, 1.442695
        %v3365 = vpow.pop %v3364
        %v3366 = vmul.f32 %v3343, 1.442695
        %v3367 = vpow.pop %v3366
        %v3368 = vmul.f32 %v3344, 1.442695
        %v3369 = vpow.pop %v3368
        %v3370 = vmul.f32 %v3345, 1.442695
        %v3371 = vpow.pop %v3370
        %v3372 = vmul.f32 %v3346, 1.442695
        %v3373 = vpow.pop %v3372
        %v3374 = vmul.f32 %v3347, 1.442695
        %v3375 = vpow.pop %v3374
        %v3376 = vmul.f32 %v3348, 1.442695
        %v3377 = vpow.pop %v3376
        %v3378 = vmul.f32 %v3349, 1.442695
        %v3379 = vpow.pop %v3378
        %v3380 = vmul.f32 %v3350, 1.442695
        %v3381 = vpow.pop %v3380
        %v3382 = vmul.f32 %v3351, 1.442695
        %v3383 = vpow.pop %v3382
        %v3384 = vsel %vm2519, %v3353, 0.0
        %3385 = vadd.xlane.f32.xlu0 %v3384
        %v3386 = vpop.xlane.xlu0 %3385
        %v3387 = vsel %vm2519, %v3355, 0.0
        %3388 = vadd.xlane.f32.xlu0 %v3387
        %v3389 = vpop.xlane.xlu0 %3388
        %v3390 = vsel %vm2519, %v3357, 0.0
        %3391 = vadd.xlane.f32.xlu0 %v3390
        %v3392 = vpop.xlane.xlu0 %3391
        %v3393 = vsel %vm2519, %v3359, 0.0
        %3394 = vadd.xlane.f32.xlu0 %v3393
        %v3395 = vpop.xlane.xlu0 %3394
        %v3396 = vsel %vm2519, %v3361, 0.0
        %3397 = vadd.xlane.f32.xlu0 %v3396
        %v3398 = vpop.xlane.xlu0 %3397
        %v3399 = vsel %vm2519, %v3363, 0.0
        %3400 = vadd.xlane.f32.xlu0 %v3399
        %v3401 = vpop.xlane.xlu0 %3400
        %v3402 = vsel %vm2519, %v3365, 0.0
        %3403 = vadd.xlane.f32.xlu0 %v3402
        %v3404 = vpop.xlane.xlu0 %3403
        %v3405 = vsel %vm2519, %v3367, 0.0
        %3406 = vadd.xlane.f32.xlu0 %v3405
        %v3407 = vpop.xlane.xlu0 %3406
        %v3408 = vsel %vm2519, %v3369, 0.0
        %3409 = vadd.xlane.f32.xlu0 %v3408
        %v3410 = vpop.xlane.xlu0 %3409
        %v3411 = vsel %vm2519, %v3371, 0.0
        %3412 = vadd.xlane.f32.xlu0 %v3411
        %v3413 = vpop.xlane.xlu0 %3412
        %v3414 = vsel %vm2519, %v3373, 0.0
        %3415 = vadd.xlane.f32.xlu0 %v3414
        %v3416 = vpop.xlane.xlu0 %3415
        %v3417 = vsel %vm2519, %v3375, 0.0
        %3418 = vadd.xlane.f32.xlu0 %v3417
        %v3419 = vpop.xlane.xlu0 %3418
        %v3420 = vsel %vm2519, %v3377, 0.0
        %3421 = vadd.xlane.f32.xlu0 %v3420
        %v3422 = vpop.xlane.xlu0 %3421
        %v3423 = vsel %vm2519, %v3379, 0.0
        %3424 = vadd.xlane.f32.xlu0 %v3423
        %v3425 = vpop.xlane.xlu0 %3424
        %v3426 = vsel %vm2519, %v3381, 0.0
        %3427 = vadd.xlane.f32.xlu0 %v3426
        %v3428 = vpop.xlane.xlu0 %3427
        %v3429 = vsel %vm2519, %v3383, 0.0
        %3430 = vadd.xlane.f32.xlu0 %v3429
        %v3431 = vpop.xlane.xlu0 %3430
        %v3432 = vrcp.pop %v3386
        %v3433 = vrcp.pop %v3389
        %v3434 = vrcp.pop %v3392
        %v3435 = vrcp.pop %v3395
        %v3436 = vrcp.pop %v3398
        %v3437 = vrcp.pop %v3401
        %v3438 = vrcp.pop %v3404
        %v3439 = vrcp.pop %v3407
        %v3440 = vrcp.pop %v3410
        %v3441 = vrcp.pop %v3413
        %v3442 = vrcp.pop %v3416
        %v3443 = vrcp.pop %v3419
        %v3444 = vrcp.pop %v3422
        %v3445 = vrcp.pop %v3425
        %v3446 = vrcp.pop %v3428
        %v3447 = vrcp.pop %v3431
        %v3448 = vmul.f32 %v3353, %v3432
        %v3449 = vmul.f32 %v3355, %v3433
        %v3450 = vmul.f32 %v3357, %v3434
        %v3451 = vmul.f32 %v3359, %v3435
        %v3452 = vmul.f32 %v3361, %v3436
        %v3453 = vmul.f32 %v3363, %v3437
        %v3454 = vmul.f32 %v3365, %v3438
        %v3455 = vmul.f32 %v3367, %v3439
        %v3456 = vmul.f32 %v3369, %v3440
        %v3457 = vmul.f32 %v3371, %v3441
        %v3458 = vmul.f32 %v3373, %v3442
        %v3459 = vmul.f32 %v3375, %v3443
        %v3460 = vmul.f32 %v3377, %v3444
        %v3461 = vmul.f32 %v3379, %v3445
        %v3462 = vmul.f32 %v3381, %v3446
        %v3463 = vmul.f32 %v3383, %v3447
        %v3464 = vpack.c.bf16 %v3448, %v3448
        %v3465 = vpack.c.bf16 %v3449, %v3449
        %v3466 = vpack.c.bf16 %v3450, %v3450
        %v3467 = vpack.c.bf16 %v3451, %v3451
        %v3468 = vpack.c.bf16 %v3452, %v3452
        %v3469 = vpack.c.bf16 %v3453, %v3453
        %v3470 = vpack.c.bf16 %v3454, %v3454
        %v3471 = vpack.c.bf16 %v3455, %v3455
        %v3472 = vpack.c.bf16 %v3456, %v3456
        %v3473 = vpack.c.bf16 %v3457, %v3457
        %v3474 = vpack.c.bf16 %v3458, %v3458
        %v3475 = vpack.c.bf16 %v3459, %v3459
        %v3476 = vpack.c.bf16 %v3460, %v3460
        %v3477 = vpack.c.bf16 %v3461, %v3461
        %v3478 = vpack.c.bf16 %v3462, %v3462
        %v3479 = vpack.c.bf16 %v3463, %v3463
        %v3480 = vpack.c.bf16 %v2273, %v2273
        %v3481 = vpack.c.bf16 %v2341, %v2341
        %v3482 = vpack.c.bf16 %v2409, %v2409
        %v3483 = vpack.c.bf16 %v2477, %v2477
        %v3484 = vpack.c.bf16 %v2274, %v2274
        %v3485 = vpack.c.bf16 %v2342, %v2342
        %v3486 = vpack.c.bf16 %v2410, %v2410
        %v3487 = vpack.c.bf16 %v2478, %v2478
        %v3488 = vpack.c.bf16 %v2275, %v2275
        %v3489 = vpack.c.bf16 %v2343, %v2343
        %v3490 = vpack.c.bf16 %v2411, %v2411
        %v3491 = vpack.c.bf16 %v2479, %v2479
        %v3492 = vpack.c.bf16 %v2276, %v2276
        %v3493 = vpack.c.bf16 %v2344, %v2344
        %v3494 = vpack.c.bf16 %v2412, %v2412
        %v3495 = vpack.c.bf16 %v2480, %v2480
        %v3497 = vsel %vm2519, %v3464, 0
        %vm3499 = vcmask 1043456
        %v3501 = vsel %vm3499, %v3480, 0
        %3503 = vmatprep.subr.bf16.mxu0 0
        %3504 = vmatpush1.bf16.msra.mxu0 %v3501
        %3505 = vmatprep.subr.bf16.mxu0 0
        %3506 = vmatpush1.bf16.msra.mxu0 0
        %3507 = vmatprep.subr.bf16.mxu0 0
        %3508 = vmatpush1.bf16.msra.mxu0 0
        %3509 = vmatprep.subr.bf16.mxu0 0
        %3510 = vmatpush1.bf16.msra.mxu0 0
        %3511 = vmatprep.subr.bf16.mxu0 0
        %3512 = vmatpush1.bf16.msra.mxu0 0
        %3513 = vmatprep.subr.bf16.mxu0 0
        %3514 = vmatpush1.bf16.msra.mxu0 0
        %3515 = vmatprep.subr.bf16.mxu0 0
        %3516 = vmatpush1.bf16.msra.mxu0 0
        %3517 = vmatprep.subr.bf16.mxu0 0
        %3518 = vmatpush1.bf16.msra.mxu0 0
        %3519 = vmatprep.subr.bf16.mxu0 0
        %3520 = vmatpush1.bf16.msra.mxu0 0
        %3521 = vmatprep.subr.bf16.mxu0 0
        %3522 = vmatpush1.bf16.msra.mxu0 0
        %3523 = vmatprep.subr.bf16.mxu0 0
        %3524 = vmatpush1.bf16.msra.mxu0 0
        %3525 = vmatprep.subr.bf16.mxu0 0
        %3526 = vmatpush1.bf16.msra.mxu0 0
        %3527 = vmatprep.subr.bf16.mxu0 0
        %3528 = vmatpush1.bf16.msra.mxu0 0
        %3529 = vmatprep.subr.bf16.mxu0 0
        %3530 = vmatpush1.bf16.msra.mxu0 0
        %3531 = vmatprep.subr.bf16.mxu0 0
        %3532 = vmatpush1.bf16.msra.mxu0 0
        %3533 = vmatprep.subr.bf16.mxu0 0
        %3534 = vmatpush1.bf16.msra.mxu0 0
        %3535 = vmatprep.mubr.bf16.mxu0 0
        %3536 = vmatmul.mubr.bf16.gmra.mrb[0].mxu0 %v3497
        %v3537 = vpop.f32.mrb[0].mxu0
        %v3538 = vadd.f32 0.0, %v3537
        %v3539 = vpop.f32.mrb[0].mxu0
        %v3540 = vpop.f32.mrb[0].mxu0
        %v3541 = vpop.f32.mrb[0].mxu0
        %3542 = vdwg.mxu0
        %v3544 = vsel %vm2519, %v3465, 0
        %v3547 = vsel %vm3499, %v3481, 0
        %3549 = vmatprep.subr.bf16.mxu0 0
        %3550 = vmatpush1.bf16.msra.mxu0 %v3547
        %3551 = vmatprep.subr.bf16.mxu0 0
        %3552 = vmatpush1.bf16.msra.mxu0 0
        %3553 = vmatprep.subr.bf16.mxu0 0
        %3554 = vmatpush1.bf16.msra.mxu0 0
        %3555 = vmatprep.subr.bf16.mxu0 0
        %3556 = vmatpush1.bf16.msra.mxu0 0
        %3557 = vmatprep.subr.bf16.mxu0 0
        %3558 = vmatpush1.bf16.msra.mxu0 0
        %3559 = vmatprep.subr.bf16.mxu0 0
        %3560 = vmatpush1.bf16.msra.mxu0 0
        %3561 = vmatprep.subr.bf16.mxu0 0
        %3562 = vmatpush1.bf16.msra.mxu0 0
        %3563 = vmatprep.subr.bf16.mxu0 0
        %3564 = vmatpush1.bf16.msra.mxu0 0
        %3565 = vmatprep.subr.bf16.mxu0 0
        %3566 = vmatpush1.bf16.msra.mxu0 0
        %3567 = vmatprep.subr.bf16.mxu0 0
        %3568 = vmatpush1.bf16.msra.mxu0 0
        %3569 = vmatprep.subr.bf16.mxu0 0
        %3570 = vmatpush1.bf16.msra.mxu0 0
        %3571 = vmatprep.subr.bf16.mxu0 0
        %3572 = vmatpush1.bf16.msra.mxu0 0
        %3573 = vmatprep.subr.bf16.mxu0 0
        %3574 = vmatpush1.bf16.msra.mxu0 0
        %3575 = vmatprep.subr.bf16.mxu0 0
        %3576 = vmatpush1.bf16.msra.mxu0 0
        %3577 = vmatprep.subr.bf16.mxu0 0
        %3578 = vmatpush1.bf16.msra.mxu0 0
        %3579 = vmatprep.subr.bf16.mxu0 0
        %3580 = vmatpush1.bf16.msra.mxu0 0
        %3581 = vmatprep.mubr.bf16.mxu0 0
        %3582 = vmatmul.mubr.bf16.gmra.mrb[0].mxu0 %v3544
        %v3583 = vpop.f32.mrb[0].mxu0
        %v3584 = vadd.f32 0.0, %v3583
        %v3585 = vpop.f32.mrb[0].mxu0
        %v3586 = vpop.f32.mrb[0].mxu0
        %v3587 = vpop.f32.mrb[0].mxu0
        %3588 = vdwg.mxu0
        %v3590 = vsel %vm2519, %v3466, 0
        %v3593 = vsel %vm3499, %v3482, 0
        %3595 = vmatprep.subr.bf16.mxu0 0
        %3596 = vmatpush1.bf16.msra.mxu0 %v3593
        %3597 = vmatprep.subr.bf16.mxu0 0
        %3598 = vmatpush1.bf16.msra.mxu0 0
        %3599 = vmatprep.subr.bf16.mxu0 0
        %3600 = vmatpush1.bf16.msra.mxu0 0
        %3601 = vmatprep.subr.bf16.mxu0 0
        %3602 = vmatpush1.bf16.msra.mxu0 0
        %3603 = vmatprep.subr.bf16.mxu0 0
        %3604 = vmatpush1.bf16.msra.mxu0 0
        %3605 = vmatprep.subr.bf16.mxu0 0
        %3606 = vmatpush1.bf16.msra.mxu0 0
        %3607 = vmatprep.subr.bf16.mxu0 0
        %3608 = vmatpush1.bf16.msra.mxu0 0
        %3609 = vmatprep.subr.bf16.mxu0 0
        %3610 = vmatpush1.bf16.msra.mxu0 0
        %3611 = vmatprep.subr.bf16.mxu0 0
        %3612 = vmatpush1.bf16.msra.mxu0 0
        %3613 = vmatprep.subr.bf16.mxu0 0
        %3614 = vmatpush1.bf16.msra.mxu0 0
        %3615 = vmatprep.subr.bf16.mxu0 0
        %3616 = vmatpush1.bf16.msra.mxu0 0
        %3617 = vmatprep.subr.bf16.mxu0 0
        %3618 = vmatpush1.bf16.msra.mxu0 0
        %3619 = vmatprep.subr.bf16.mxu0 0
        %3620 = vmatpush1.bf16.msra.mxu0 0
        %3621 = vmatprep.subr.bf16.mxu0 0
        %3622 = vmatpush1.bf16.msra.mxu0 0
        %3623 = vmatprep.subr.bf16.mxu0 0
        %3624 = vmatpush1.bf16.msra.mxu0 0
        %3625 = vmatprep.subr.bf16.mxu0 0
        %3626 = vmatpush1.bf16.msra.mxu0 0
        %3627 = vmatprep.mubr.bf16.mxu0 0
        %3628 = vmatmul.mubr.bf16.gmra.mrb[0].mxu0 %v3590
        %v3629 = vpop.f32.mrb[0].mxu0
        %v3630 = vadd.f32 0.0, %v3629
        %v3631 = vpop.f32.mrb[0].mxu0
        %v3632 = vpop.f32.mrb[0].mxu0
        %v3633 = vpop.f32.mrb[0].mxu0
        %3634 = vdwg.mxu0
        %v3636 = vsel %vm2519, %v3467, 0
        %v3639 = vsel %vm3499, %v3483, 0
        %3641 = vmatprep.subr.bf16.mxu0 0
        %3642 = vmatpush1.bf16.msra.mxu0 %v3639
        %3643 = vmatprep.subr.bf16.mxu0 0
        %3644 = vmatpush1.bf16.msra.mxu0 0
        %3645 = vmatprep.subr.bf16.mxu0 0
        %3646 = vmatpush1.bf16.msra.mxu0 0
        %3647 = vmatprep.subr.bf16.mxu0 0
        %3648 = vmatpush1.bf16.msra.mxu0 0
        %3649 = vmatprep.subr.bf16.mxu0 0
        %3650 = vmatpush1.bf16.msra.mxu0 0
        %3651 = vmatprep.subr.bf16.mxu0 0
        %3652 = vmatpush1.bf16.msra.mxu0 0
        %3653 = vmatprep.subr.bf16.mxu0 0
        %3654 = vmatpush1.bf16.msra.mxu0 0
        %3655 = vmatprep.subr.bf16.mxu0 0
        %3656 = vmatpush1.bf16.msra.mxu0 0
        %3657 = vmatprep.subr.bf16.mxu0 0
        %3658 = vmatpush1.bf16.msra.mxu0 0
        %3659 = vmatprep.subr.bf16.mxu0 0
        %3660 = vmatpush1.bf16.msra.mxu0 0
        %3661 = vmatprep.subr.bf16.mxu0 0
        %3662 = vmatpush1.bf16.msra.mxu0 0
        %3663 = vmatprep.subr.bf16.mxu0 0
        %3664 = vmatpush1.bf16.msra.mxu0 0
        %3665 = vmatprep.subr.bf16.mxu0 0
        %3666 = vmatpush1.bf16.msra.mxu0 0
        %3667 = vmatprep.subr.bf16.mxu0 0
        %3668 = vmatpush1.bf16.msra.mxu0 0
        %3669 = vmatprep.subr.bf16.mxu0 0
        %3670 = vmatpush1.bf16.msra.mxu0 0
        %3671 = vmatprep.subr.bf16.mxu0 0
        %3672 = vmatpush1.bf16.msra.mxu0 0
        %3673 = vmatprep.mubr.bf16.mxu0 0
        %3674 = vmatmul.mubr.bf16.gmra.mrb[0].mxu0 %v3636
        %v3675 = vpop.f32.mrb[0].mxu0
        %v3676 = vadd.f32 0.0, %v3675
        %v3677 = vpop.f32.mrb[0].mxu0
        %v3678 = vpop.f32.mrb[0].mxu0
        %v3679 = vpop.f32.mrb[0].mxu0
        %3680 = vdwg.mxu0
        %v3682 = vsel %vm2519, %v3468, 0
        %v3685 = vsel %vm3499, %v3484, 0
        %3687 = vmatprep.subr.bf16.mxu0 0
        %3688 = vmatpush1.bf16.msra.mxu0 %v3685
        %3689 = vmatprep.subr.bf16.mxu0 0
        %3690 = vmatpush1.bf16.msra.mxu0 0
        %3691 = vmatprep.subr.bf16.mxu0 0
        %3692 = vmatpush1.bf16.msra.mxu0 0
        %3693 = vmatprep.subr.bf16.mxu0 0
        %3694 = vmatpush1.bf16.msra.mxu0 0
        %3695 = vmatprep.subr.bf16.mxu0 0
        %3696 = vmatpush1.bf16.msra.mxu0 0
        %3697 = vmatprep.subr.bf16.mxu0 0
        %3698 = vmatpush1.bf16.msra.mxu0 0
        %3699 = vmatprep.subr.bf16.mxu0 0
        %3700 = vmatpush1.bf16.msra.mxu0 0
        %3701 = vmatprep.subr.bf16.mxu0 0
        %3702 = vmatpush1.bf16.msra.mxu0 0
        %3703 = vmatprep.subr.bf16.mxu0 0
        %3704 = vmatpush1.bf16.msra.mxu0 0
        %3705 = vmatprep.subr.bf16.mxu0 0
        %3706 = vmatpush1.bf16.msra.mxu0 0
        %3707 = vmatprep.subr.bf16.mxu0 0
        %3708 = vmatpush1.bf16.msra.mxu0 0
        %3709 = vmatprep.subr.bf16.mxu0 0
        %3710 = vmatpush1.bf16.msra.mxu0 0
        %3711 = vmatprep.subr.bf16.mxu0 0
        %3712 = vmatpush1.bf16.msra.mxu0 0
        %3713 = vmatprep.subr.bf16.mxu0 0
        %3714 = vmatpush1.bf16.msra.mxu0 0
        %3715 = vmatprep.subr.bf16.mxu0 0
        %3716 = vmatpush1.bf16.msra.mxu0 0
        %3717 = vmatprep.subr.bf16.mxu0 0
        %3718 = vmatpush1.bf16.msra.mxu0 0
        %3719 = vmatprep.mubr.bf16.mxu0 0
        %3720 = vmatmul.mubr.bf16.gmra.mrb[0].mxu0 %v3682
        %v3721 = vpop.f32.mrb[0].mxu0
        %v3722 = vadd.f32 0.0, %v3721
        %v3723 = vpop.f32.mrb[0].mxu0
        %v3724 = vpop.f32.mrb[0].mxu0
        %v3725 = vpop.f32.mrb[0].mxu0
        %3726 = vdwg.mxu0
        %v3728 = vsel %vm2519, %v3469, 0
        %v3731 = vsel %vm3499, %v3485, 0
        %3733 = vmatprep.subr.bf16.mxu0 0
        %3734 = vmatpush1.bf16.msra.mxu0 %v3731
        %3735 = vmatprep.subr.bf16.mxu0 0
        %3736 = vmatpush1.bf16.msra.mxu0 0
        %3737 = vmatprep.subr.bf16.mxu0 0
        %3738 = vmatpush1.bf16.msra.mxu0 0
        %3739 = vmatprep.subr.bf16.mxu0 0
        %3740 = vmatpush1.bf16.msra.mxu0 0
        %3741 = vmatprep.subr.bf16.mxu0 0
        %3742 = vmatpush1.bf16.msra.mxu0 0
        %3743 = vmatprep.subr.bf16.mxu0 0
        %3744 = vmatpush1.bf16.msra.mxu0 0
        %3745 = vmatprep.subr.bf16.mxu0 0
        %3746 = vmatpush1.bf16.msra.mxu0 0
        %3747 = vmatprep.subr.bf16.mxu0 0
        %3748 = vmatpush1.bf16.msra.mxu0 0
        %3749 = vmatprep.subr.bf16.mxu0 0
        %3750 = vmatpush1.bf16.msra.mxu0 0
        %3751 = vmatprep.subr.bf16.mxu0 0
        %3752 = vmatpush1.bf16.msra.mxu0 0
        %3753 = vmatprep.subr.bf16.mxu0 0
        %3754 = vmatpush1.bf16.msra.mxu0 0
        %3755 = vmatprep.subr.bf16.mxu0 0
        %3756 = vmatpush1.bf16.msra.mxu0 0
        %3757 = vmatprep.subr.bf16.mxu0 0
        %3758 = vmatpush1.bf16.msra.mxu0 0
        %3759 = vmatprep.subr.bf16.mxu0 0
        %3760 = vmatpush1.bf16.msra.mxu0 0
        %3761 = vmatprep.subr.bf16.mxu0 0
        %3762 = vmatpush1.bf16.msra.mxu0 0
        %3763 = vmatprep.subr.bf16.mxu0 0
        %3764 = vmatpush1.bf16.msra.mxu0 0
        %3765 = vmatprep.mubr.bf16.mxu0 0
        %3766 = vmatmul.mubr.bf16.gmra.mrb[0].mxu0 %v3728
        %v3767 = vpop.f32.mrb[0].mxu0
        %v3768 = vadd.f32 0.0, %v3767
        %v3769 = vpop.f32.mrb[0].mxu0
        %v3770 = vpop.f32.mrb[0].mxu0
        %v3771 = vpop.f32.mrb[0].mxu0
        %3772 = vdwg.mxu0
        %v3774 = vsel %vm2519, %v3470, 0
        %v3777 = vsel %vm3499, %v3486, 0
        %3779 = vmatprep.subr.bf16.mxu0 0
        %3780 = vmatpush1.bf16.msra.mxu0 %v3777
        %3781 = vmatprep.subr.bf16.mxu0 0
        %3782 = vmatpush1.bf16.msra.mxu0 0
        %3783 = vmatprep.subr.bf16.mxu0 0
        %3784 = vmatpush1.bf16.msra.mxu0 0
        %3785 = vmatprep.subr.bf16.mxu0 0
        %3786 = vmatpush1.bf16.msra.mxu0 0
        %3787 = vmatprep.subr.bf16.mxu0 0
        %3788 = vmatpush1.bf16.msra.mxu0 0
        %3789 = vmatprep.subr.bf16.mxu0 0
        %3790 = vmatpush1.bf16.msra.mxu0 0
        %3791 = vmatprep.subr.bf16.mxu0 0
        %3792 = vmatpush1.bf16.msra.mxu0 0
        %3793 = vmatprep.subr.bf16.mxu0 0
        %3794 = vmatpush1.bf16.msra.mxu0 0
        %3795 = vmatprep.subr.bf16.mxu0 0
        %3796 = vmatpush1.bf16.msra.mxu0 0
        %3797 = vmatprep.subr.bf16.mxu0 0
        %3798 = vmatpush1.bf16.msra.mxu0 0
        %3799 = vmatprep.subr.bf16.mxu0 0
        %3800 = vmatpush1.bf16.msra.mxu0 0
        %3801 = vmatprep.subr.bf16.mxu0 0
        %3802 = vmatpush1.bf16.msra.mxu0 0
        %3803 = vmatprep.subr.bf16.mxu0 0
        %3804 = vmatpush1.bf16.msra.mxu0 0
        %3805 = vmatprep.subr.bf16.mxu0 0
        %3806 = vmatpush1.bf16.msra.mxu0 0
        %3807 = vmatprep.subr.bf16.mxu0 0
        %3808 = vmatpush1.bf16.msra.mxu0 0
        %3809 = vmatprep.subr.bf16.mxu0 0
        %3810 = vmatpush1.bf16.msra.mxu0 0
        %3811 = vmatprep.mubr.bf16.mxu0 0
        %3812 = vmatmul.mubr.bf16.gmra.mrb[0].mxu0 %v3774
        %v3813 = vpop.f32.mrb[0].mxu0
        %v3814 = vadd.f32 0.0, %v3813
        %v3815 = vpop.f32.mrb[0].mxu0
        %v3816 = vpop.f32.mrb[0].mxu0
        %v3817 = vpop.f32.mrb[0].mxu0
        %3818 = vdwg.mxu0
        %v3820 = vsel %vm2519, %v3471, 0
        %v3823 = vsel %vm3499, %v3487, 0
        %3825 = vmatprep.subr.bf16.mxu0 0
        %3826 = vmatpush1.bf16.msra.mxu0 %v3823
        %3827 = vmatprep.subr.bf16.mxu0 0
        %3828 = vmatpush1.bf16.msra.mxu0 0
        %3829 = vmatprep.subr.bf16.mxu0 0
        %3830 = vmatpush1.bf16.msra.mxu0 0
        %3831 = vmatprep.subr.bf16.mxu0 0
        %3832 = vmatpush1.bf16.msra.mxu0 0
        %3833 = vmatprep.subr.bf16.mxu0 0
        %3834 = vmatpush1.bf16.msra.mxu0 0
        %3835 = vmatprep.subr.bf16.mxu0 0
        %3836 = vmatpush1.bf16.msra.mxu0 0
        %3837 = vmatprep.subr.bf16.mxu0 0
        %3838 = vmatpush1.bf16.msra.mxu0 0
        %3839 = vmatprep.subr.bf16.mxu0 0
        %3840 = vmatpush1.bf16.msra.mxu0 0
        %3841 = vmatprep.subr.bf16.mxu0 0
        %3842 = vmatpush1.bf16.msra.mxu0 0
        %3843 = vmatprep.subr.bf16.mxu0 0
        %3844 = vmatpush1.bf16.msra.mxu0 0
        %3845 = vmatprep.subr.bf16.mxu0 0
        %3846 = vmatpush1.bf16.msra.mxu0 0
        %3847 = vmatprep.subr.bf16.mxu0 0
        %3848 = vmatpush1.bf16.msra.mxu0 0
        %3849 = vmatprep.subr.bf16.mxu0 0
        %3850 = vmatpush1.bf16.msra.mxu0 0
        %3851 = vmatprep.subr.bf16.mxu0 0
        %3852 = vmatpush1.bf16.msra.mxu0 0
        %3853 = vmatprep.subr.bf16.mxu0 0
        %3854 = vmatpush1.bf16.msra.mxu0 0
        %3855 = vmatprep.subr.bf16.mxu0 0
        %3856 = vmatpush1.bf16.msra.mxu0 0
        %3857 = vmatprep.mubr.bf16.mxu0 0
        %3858 = vmatmul.mubr.bf16.gmra.mrb[0].mxu0 %v3820
        %v3859 = vpop.f32.mrb[0].mxu0
        %v3860 = vadd.f32 0.0, %v3859
        %v3861 = vpop.f32.mrb[0].mxu0
        %v3862 = vpop.f32.mrb[0].mxu0
        %v3863 = vpop.f32.mrb[0].mxu0
        %3864 = vdwg.mxu0
        %v3866 = vsel %vm2519, %v3472, 0
        %v3869 = vsel %vm3499, %v3488, 0
        %3871 = vmatprep.subr.bf16.mxu0 0
        %3872 = vmatpush1.bf16.msra.mxu0 %v3869
        %3873 = vmatprep.subr.bf16.mxu0 0
        %3874 = vmatpush1.bf16.msra.mxu0 0
        %3875 = vmatprep.subr.bf16.mxu0 0
        %3876 = vmatpush1.bf16.msra.mxu0 0
        %3877 = vmatprep.subr.bf16.mxu0 0
        %3878 = vmatpush1.bf16.msra.mxu0 0
        %3879 = vmatprep.subr.bf16.mxu0 0
        %3880 = vmatpush1.bf16.msra.mxu0 0
        %3881 = vmatprep.subr.bf16.mxu0 0
        %3882 = vmatpush1.bf16.msra.mxu0 0
        %3883 = vmatprep.subr.bf16.mxu0 0
        %3884 = vmatpush1.bf16.msra.mxu0 0
        %3885 = vmatprep.subr.bf16.mxu0 0
        %3886 = vmatpush1.bf16.msra.mxu0 0
        %3887 = vmatprep.subr.bf16.mxu0 0
        %3888 = vmatpush1.bf16.msra.mxu0 0
        %3889 = vmatprep.subr.bf16.mxu0 0
        %3890 = vmatpush1.bf16.msra.mxu0 0
        %3891 = vmatprep.subr.bf16.mxu0 0
        %3892 = vmatpush1.bf16.msra.mxu0 0
        %3893 = vmatprep.subr.bf16.mxu0 0
        %3894 = vmatpush1.bf16.msra.mxu0 0
        %3895 = vmatprep.subr.bf16.mxu0 0
        %3896 = vmatpush1.bf16.msra.mxu0 0
        %3897 = vmatprep.subr.bf16.mxu0 0
        %3898 = vmatpush1.bf16.msra.mxu0 0
        %3899 = vmatprep.subr.bf16.mxu0 0
        %3900 = vmatpush1.bf16.msra.mxu0 0
        %3901 = vmatprep.subr.bf16.mxu0 0
        %3902 = vmatpush1.bf16.msra.mxu0 0
        %3903 = vmatprep.mubr.bf16.mxu0 0
        %3904 = vmatmul.mubr.bf16.gmra.mrb[0].mxu0 %v3866
        %v3905 = vpop.f32.mrb[0].mxu0
        %v3906 = vadd.f32 0.0, %v3905
        %v3907 = vpop.f32.mrb[0].mxu0
        %v3908 = vpop.f32.mrb[0].mxu0
        %v3909 = vpop.f32.mrb[0].mxu0
        %3910 = vdwg.mxu0
        %v3912 = vsel %vm2519, %v3473, 0
        %v3915 = vsel %vm3499, %v3489, 0
        %3917 = vmatprep.subr.bf16.mxu0 0
        %3918 = vmatpush1.bf16.msra.mxu0 %v3915
        %3919 = vmatprep.subr.bf16.mxu0 0
        %3920 = vmatpush1.bf16.msra.mxu0 0
        %3921 = vmatprep.subr.bf16.mxu0 0
        %3922 = vmatpush1.bf16.msra.mxu0 0
        %3923 = vmatprep.subr.bf16.mxu0 0
        %3924 = vmatpush1.bf16.msra.mxu0 0
        %3925 = vmatprep.subr.bf16.mxu0 0
        %3926 = vmatpush1.bf16.msra.mxu0 0
        %3927 = vmatprep.subr.bf16.mxu0 0
        %3928 = vmatpush1.bf16.msra.mxu0 0
        %3929 = vmatprep.subr.bf16.mxu0 0
        %3930 = vmatpush1.bf16.msra.mxu0 0
        %3931 = vmatprep.subr.bf16.mxu0 0
        %3932 = vmatpush1.bf16.msra.mxu0 0
        %3933 = vmatprep.subr.bf16.mxu0 0
        %3934 = vmatpush1.bf16.msra.mxu0 0
        %3935 = vmatprep.subr.bf16.mxu0 0
        %3936 = vmatpush1.bf16.msra.mxu0 0
        %3937 = vmatprep.subr.bf16.mxu0 0
        %3938 = vmatpush1.bf16.msra.mxu0 0
        %3939 = vmatprep.subr.bf16.mxu0 0
        %3940 = vmatpush1.bf16.msra.mxu0 0
        %3941 = vmatprep.subr.bf16.mxu0 0
        %3942 = vmatpush1.bf16.msra.mxu0 0
        %3943 = vmatprep.subr.bf16.mxu0 0
        %3944 = vmatpush1.bf16.msra.mxu0 0
        %3945 = vmatprep.subr.bf16.mxu0 0
        %3946 = vmatpush1.bf16.msra.mxu0 0
        %3947 = vmatprep.subr.bf16.mxu0 0
        %3948 = vmatpush1.bf16.msra.mxu0 0
        %3949 = vmatprep.mubr.bf16.mxu0 0
        %3950 = vmatmul.mubr.bf16.gmra.mrb[0].mxu0 %v3912
        %v3951 = vpop.f32.mrb[0].mxu0
        %v3952 = vadd.f32 0.0, %v3951
        %v3953 = vpop.f32.mrb[0].mxu0
        %v3954 = vpop.f32.mrb[0].mxu0
        %v3955 = vpop.f32.mrb[0].mxu0
        %3956 = vdwg.mxu0
        %v3958 = vsel %vm2519, %v3474, 0
        %v3961 = vsel %vm3499, %v3490, 0
        %3963 = vmatprep.subr.bf16.mxu0 0
        %3964 = vmatpush1.bf16.msra.mxu0 %v3961
        %3965 = vmatprep.subr.bf16.mxu0 0
        %3966 = vmatpush1.bf16.msra.mxu0 0
        %3967 = vmatprep.subr.bf16.mxu0 0
        %3968 = vmatpush1.bf16.msra.mxu0 0
        %3969 = vmatprep.subr.bf16.mxu0 0
        %3970 = vmatpush1.bf16.msra.mxu0 0
        %3971 = vmatprep.subr.bf16.mxu0 0
        %3972 = vmatpush1.bf16.msra.mxu0 0
        %3973 = vmatprep.subr.bf16.mxu0 0
        %3974 = vmatpush1.bf16.msra.mxu0 0
        %3975 = vmatprep.subr.bf16.mxu0 0
        %3976 = vmatpush1.bf16.msra.mxu0 0
        %3977 = vmatprep.subr.bf16.mxu0 0
        %3978 = vmatpush1.bf16.msra.mxu0 0
        %3979 = vmatprep.subr.bf16.mxu0 0
        %3980 = vmatpush1.bf16.msra.mxu0 0
        %3981 = vmatprep.subr.bf16.mxu0 0
        %3982 = vmatpush1.bf16.msra.mxu0 0
        %3983 = vmatprep.subr.bf16.mxu0 0
        %3984 = vmatpush1.bf16.msra.mxu0 0
        %3985 = vmatprep.subr.bf16.mxu0 0
        %3986 = vmatpush1.bf16.msra.mxu0 0
        %3987 = vmatprep.subr.bf16.mxu0 0
        %3988 = vmatpush1.bf16.msra.mxu0 0
        %3989 = vmatprep.subr.bf16.mxu0 0
        %3990 = vmatpush1.bf16.msra.mxu0 0
        %3991 = vmatprep.subr.bf16.mxu0 0
        %3992 = vmatpush1.bf16.msra.mxu0 0
        %3993 = vmatprep.subr.bf16.mxu0 0
        %3994 = vmatpush1.bf16.msra.mxu0 0
        %3995 = vmatprep.mubr.bf16.mxu0 0
        %3996 = vmatmul.mubr.bf16.gmra.mrb[0].mxu0 %v3958
        %v3997 = vpop.f32.mrb[0].mxu0
        %v3998 = vadd.f32 0.0, %v3997
        %v3999 = vpop.f32.mrb[0].mxu0
        %v4000 = vpop.f32.mrb[0].mxu0
        %v4001 = vpop.f32.mrb[0].mxu0
        %4002 = vdwg.mxu0
        %v4004 = vsel %vm2519, %v3475, 0
        %v4007 = vsel %vm3499, %v3491, 0
        %4009 = vmatprep.subr.bf16.mxu0 0
        %4010 = vmatpush1.bf16.msra.mxu0 %v4007
        %4011 = vmatprep.subr.bf16.mxu0 0
        %4012 = vmatpush1.bf16.msra.mxu0 0
        %4013 = vmatprep.subr.bf16.mxu0 0
        %4014 = vmatpush1.bf16.msra.mxu0 0
        %4015 = vmatprep.subr.bf16.mxu0 0
        %4016 = vmatpush1.bf16.msra.mxu0 0
        %4017 = vmatprep.subr.bf16.mxu0 0
        %4018 = vmatpush1.bf16.msra.mxu0 0
        %4019 = vmatprep.subr.bf16.mxu0 0
        %4020 = vmatpush1.bf16.msra.mxu0 0
        %4021 = vmatprep.subr.bf16.mxu0 0
        %4022 = vmatpush1.bf16.msra.mxu0 0
        %4023 = vmatprep.subr.bf16.mxu0 0
        %4024 = vmatpush1.bf16.msra.mxu0 0
        %4025 = vmatprep.subr.bf16.mxu0 0
        %4026 = vmatpush1.bf16.msra.mxu0 0
        %4027 = vmatprep.subr.bf16.mxu0 0
        %4028 = vmatpush1.bf16.msra.mxu0 0
        %4029 = vmatprep.subr.bf16.mxu0 0
        %4030 = vmatpush1.bf16.msra.mxu0 0
        %4031 = vmatprep.subr.bf16.mxu0 0
        %4032 = vmatpush1.bf16.msra.mxu0 0
        %4033 = vmatprep.subr.bf16.mxu0 0
        %4034 = vmatpush1.bf16.msra.mxu0 0
        %4035 = vmatprep.subr.bf16.mxu0 0
        %4036 = vmatpush1.bf16.msra.mxu0 0
        %4037 = vmatprep.subr.bf16.mxu0 0
        %4038 = vmatpush1.bf16.msra.mxu0 0
        %4039 = vmatprep.subr.bf16.mxu0 0
        %4040 = vmatpush1.bf16.msra.mxu0 0
        %4041 = vmatprep.mubr.bf16.mxu0 0
        %4042 = vmatmul.mubr.bf16.gmra.mrb[0].mxu0 %v4004
        %v4043 = vpop.f32.mrb[0].mxu0
        %v4044 = vadd.f32 0.0, %v4043
        %v4045 = vpop.f32.mrb[0].mxu0
        %v4046 = vpop.f32.mrb[0].mxu0
        %v4047 = vpop.f32.mrb[0].mxu0
        %4048 = vdwg.mxu0
        %v4050 = vsel %vm2519, %v3476, 0
        %v4053 = vsel %vm3499, %v3492, 0
        %4055 = vmatprep.subr.bf16.mxu0 0
        %4056 = vmatpush1.bf16.msra.mxu0 %v4053
        %4057 = vmatprep.subr.bf16.mxu0 0
        %4058 = vmatpush1.bf16.msra.mxu0 0
        %4059 = vmatprep.subr.bf16.mxu0 0
        %4060 = vmatpush1.bf16.msra.mxu0 0
        %4061 = vmatprep.subr.bf16.mxu0 0
        %4062 = vmatpush1.bf16.msra.mxu0 0
        %4063 = vmatprep.subr.bf16.mxu0 0
        %4064 = vmatpush1.bf16.msra.mxu0 0
        %4065 = vmatprep.subr.bf16.mxu0 0
        %4066 = vmatpush1.bf16.msra.mxu0 0
        %4067 = vmatprep.subr.bf16.mxu0 0
        %4068 = vmatpush1.bf16.msra.mxu0 0
        %4069 = vmatprep.subr.bf16.mxu0 0
        %4070 = vmatpush1.bf16.msra.mxu0 0
        %4071 = vmatprep.subr.bf16.mxu0 0
        %4072 = vmatpush1.bf16.msra.mxu0 0
        %4073 = vmatprep.subr.bf16.mxu0 0
        %4074 = vmatpush1.bf16.msra.mxu0 0
        %4075 = vmatprep.subr.bf16.mxu0 0
        %4076 = vmatpush1.bf16.msra.mxu0 0
        %4077 = vmatprep.subr.bf16.mxu0 0
        %4078 = vmatpush1.bf16.msra.mxu0 0
        %4079 = vmatprep.subr.bf16.mxu0 0
        %4080 = vmatpush1.bf16.msra.mxu0 0
        %4081 = vmatprep.subr.bf16.mxu0 0
        %4082 = vmatpush1.bf16.msra.mxu0 0
        %4083 = vmatprep.subr.bf16.mxu0 0
        %4084 = vmatpush1.bf16.msra.mxu0 0
        %4085 = vmatprep.subr.bf16.mxu0 0
        %4086 = vmatpush1.bf16.msra.mxu0 0
        %4087 = vmatprep.mubr.bf16.mxu0 0
        %4088 = vmatmul.mubr.bf16.gmra.mrb[0].mxu0 %v4050
        %v4089 = vpop.f32.mrb[0].mxu0
        %v4090 = vadd.f32 0.0, %v4089
        %v4091 = vpop.f32.mrb[0].mxu0
        %v4092 = vpop.f32.mrb[0].mxu0
        %v4093 = vpop.f32.mrb[0].mxu0
        %4094 = vdwg.mxu0
        %v4096 = vsel %vm2519, %v3477, 0
        %v4099 = vsel %vm3499, %v3493, 0
        %4101 = vmatprep.subr.bf16.mxu0 0
        %4102 = vmatpush1.bf16.msra.mxu0 %v4099
        %4103 = vmatprep.subr.bf16.mxu0 0
        %4104 = vmatpush1.bf16.msra.mxu0 0
        %4105 = vmatprep.subr.bf16.mxu0 0
        %4106 = vmatpush1.bf16.msra.mxu0 0
        %4107 = vmatprep.subr.bf16.mxu0 0
        %4108 = vmatpush1.bf16.msra.mxu0 0
        %4109 = vmatprep.subr.bf16.mxu0 0
        %4110 = vmatpush1.bf16.msra.mxu0 0
        %4111 = vmatprep.subr.bf16.mxu0 0
        %4112 = vmatpush1.bf16.msra.mxu0 0
        %4113 = vmatprep.subr.bf16.mxu0 0
        %4114 = vmatpush1.bf16.msra.mxu0 0
        %4115 = vmatprep.subr.bf16.mxu0 0
        %4116 = vmatpush1.bf16.msra.mxu0 0
        %4117 = vmatprep.subr.bf16.mxu0 0
        %4118 = vmatpush1.bf16.msra.mxu0 0
        %4119 = vmatprep.subr.bf16.mxu0 0
        %4120 = vmatpush1.bf16.msra.mxu0 0
        %4121 = vmatprep.subr.bf16.mxu0 0
        %4122 = vmatpush1.bf16.msra.mxu0 0
        %4123 = vmatprep.subr.bf16.mxu0 0
        %4124 = vmatpush1.bf16.msra.mxu0 0
        %4125 = vmatprep.subr.bf16.mxu0 0
        %4126 = vmatpush1.bf16.msra.mxu0 0
        %4127 = vmatprep.subr.bf16.mxu0 0
        %4128 = vmatpush1.bf16.msra.mxu0 0
        %4129 = vmatprep.subr.bf16.mxu0 0
        %4130 = vmatpush1.bf16.msra.mxu0 0
        %4131 = vmatprep.subr.bf16.mxu0 0
        %4132 = vmatpush1.bf16.msra.mxu0 0
        %4133 = vmatprep.mubr.bf16.mxu0 0
        %4134 = vmatmul.mubr.bf16.gmra.mrb[0].mxu0 %v4096
        %v4135 = vpop.f32.mrb[0].mxu0
        %v4136 = vadd.f32 0.0, %v4135
        %v4137 = vpop.f32.mrb[0].mxu0
        %v4138 = vpop.f32.mrb[0].mxu0
        %v4139 = vpop.f32.mrb[0].mxu0
        %4140 = vdwg.mxu0
        %v4142 = vsel %vm2519, %v3478, 0
        %v4145 = vsel %vm3499, %v3494, 0
        %4147 = vmatprep.subr.bf16.mxu0 0
        %4148 = vmatpush1.bf16.msra.mxu0 %v4145
        %4149 = vmatprep.subr.bf16.mxu0 0
        %4150 = vmatpush1.bf16.msra.mxu0 0
        %4151 = vmatprep.subr.bf16.mxu0 0
        %4152 = vmatpush1.bf16.msra.mxu0 0
        %4153 = vmatprep.subr.bf16.mxu0 0
        %4154 = vmatpush1.bf16.msra.mxu0 0
        %4155 = vmatprep.subr.bf16.mxu0 0
        %4156 = vmatpush1.bf16.msra.mxu0 0
        %4157 = vmatprep.subr.bf16.mxu0 0
        %4158 = vmatpush1.bf16.msra.mxu0 0
        %4159 = vmatprep.subr.bf16.mxu0 0
        %4160 = vmatpush1.bf16.msra.mxu0 0
        %4161 = vmatprep.subr.bf16.mxu0 0
        %4162 = vmatpush1.bf16.msra.mxu0 0
        %4163 = vmatprep.subr.bf16.mxu0 0
        %4164 = vmatpush1.bf16.msra.mxu0 0
        %4165 = vmatprep.subr.bf16.mxu0 0
        %4166 = vmatpush1.bf16.msra.mxu0 0
        %4167 = vmatprep.subr.bf16.mxu0 0
        %4168 = vmatpush1.bf16.msra.mxu0 0
        %4169 = vmatprep.subr.bf16.mxu0 0
        %4170 = vmatpush1.bf16.msra.mxu0 0
        %4171 = vmatprep.subr.bf16.mxu0 0
        %4172 = vmatpush1.bf16.msra.mxu0 0
        %4173 = vmatprep.subr.bf16.mxu0 0
        %4174 = vmatpush1.bf16.msra.mxu0 0
        %4175 = vmatprep.subr.bf16.mxu0 0
        %4176 = vmatpush1.bf16.msra.mxu0 0
        %4177 = vmatprep.subr.bf16.mxu0 0
        %4178 = vmatpush1.bf16.msra.mxu0 0
        %4179 = vmatprep.mubr.bf16.mxu0 0
        %4180 = vmatmul.mubr.bf16.gmra.mrb[0].mxu0 %v4142
        %v4181 = vpop.f32.mrb[0].mxu0
        %v4182 = vadd.f32 0.0, %v4181
        %v4183 = vpop.f32.mrb[0].mxu0
        %v4184 = vpop.f32.mrb[0].mxu0
        %v4185 = vpop.f32.mrb[0].mxu0
        %4186 = vdwg.mxu0
        %v4188 = vsel %vm2519, %v3479, 0
        %v4191 = vsel %vm3499, %v3495, 0
        %4193 = vmatprep.subr.bf16.mxu0 0
        %4194 = vmatpush1.bf16.msra.mxu0 %v4191
        %4195 = vmatprep.subr.bf16.mxu0 0
        %4196 = vmatpush1.bf16.msra.mxu0 0
        %4197 = vmatprep.subr.bf16.mxu0 0
        %4198 = vmatpush1.bf16.msra.mxu0 0
        %4199 = vmatprep.subr.bf16.mxu0 0
        %4200 = vmatpush1.bf16.msra.mxu0 0
        %4201 = vmatprep.subr.bf16.mxu0 0
        %4202 = vmatpush1.bf16.msra.mxu0 0
        %4203 = vmatprep.subr.bf16.mxu0 0
        %4204 = vmatpush1.bf16.msra.mxu0 0
        %4205 = vmatprep.subr.bf16.mxu0 0
        %4206 = vmatpush1.bf16.msra.mxu0 0
        %4207 = vmatprep.subr.bf16.mxu0 0
        %4208 = vmatpush1.bf16.msra.mxu0 0
        %4209 = vmatprep.subr.bf16.mxu0 0
        %4210 = vmatpush1.bf16.msra.mxu0 0
        %4211 = vmatprep.subr.bf16.mxu0 0
        %4212 = vmatpush1.bf16.msra.mxu0 0
        %4213 = vmatprep.subr.bf16.mxu0 0
        %4214 = vmatpush1.bf16.msra.mxu0 0
        %4215 = vmatprep.subr.bf16.mxu0 0
        %4216 = vmatpush1.bf16.msra.mxu0 0
        %4217 = vmatprep.subr.bf16.mxu0 0
        %4218 = vmatpush1.bf16.msra.mxu0 0
        %4219 = vmatprep.subr.bf16.mxu0 0
        %4220 = vmatpush1.bf16.msra.mxu0 0
        %4221 = vmatprep.subr.bf16.mxu0 0
        %4222 = vmatpush1.bf16.msra.mxu0 0
        %4223 = vmatprep.subr.bf16.mxu0 0
        %4224 = vmatpush1.bf16.msra.mxu0 0
        %4225 = vmatprep.mubr.bf16.mxu0 0
        %4226 = vmatmul.mubr.bf16.gmra.mrb[0].mxu0 %v4188
        %v4227 = vpop.f32.mrb[0].mxu0
        %v4228 = vadd.f32 0.0, %v4227
        %v4229 = vpop.f32.mrb[0].mxu0
        %v4230 = vpop.f32.mrb[0].mxu0
        %v4231 = vpop.f32.mrb[0].mxu0
        %4232 = vdwg.mxu0
        %v4233 = vpack.c.bf16 %v3584, %v3538
        %v4234 = vpack.c.bf16 %v3676, %v3630
        %v4235 = vpack.c.bf16 %v3768, %v3722
        %v4236 = vpack.c.bf16 %v3860, %v3814
        %v4237 = vpack.c.bf16 %v3952, %v3906
        %v4238 = vpack.c.bf16 %v4044, %v3998
        %v4239 = vpack.c.bf16 %v4136, %v4090
        %v4240 = vpack.c.bf16 %v4228, %v4182
        %v4241 = vld [vmem:[#allocation7] sm:$0xf]
        %v4242 = vld [vmem:[#allocation7 + $0x4] sm:$0xf]
        %v4243 = vld [vmem:[#allocation7 + $0x8] sm:$0xf]
        %v4244 = vld [vmem:[#allocation7 + $0xc] sm:$0xf]
        %v4246 = vsel %vm2519, %v4233, 0
        %v4249 = vsel %vm2519, %v4234, 0
        %v4252 = vsel %vm3499, %v4241, 0
        %4254 = vmatprep.subr.bf16.mxu0 0
        %4255 = vmatpush1.bf16.msra.mxu0 %v4252
        %4256 = vmatprep.subr.bf16.mxu0 0
        %4257 = vmatpush1.bf16.msra.mxu0 0
        %4258 = vmatprep.subr.bf16.mxu0 0
        %4259 = vmatpush1.bf16.msra.mxu0 0
        %4260 = vmatprep.subr.bf16.mxu0 0
        %4261 = vmatpush1.bf16.msra.mxu0 0
        %4262 = vmatprep.subr.bf16.mxu0 0
        %4263 = vmatpush1.bf16.msra.mxu0 0
        %4264 = vmatprep.subr.bf16.mxu0 0
        %4265 = vmatpush1.bf16.msra.mxu0 0
        %4266 = vmatprep.subr.bf16.mxu0 0
        %4267 = vmatpush1.bf16.msra.mxu0 0
        %4268 = vmatprep.subr.bf16.mxu0 0
        %4269 = vmatpush1.bf16.msra.mxu0 0
        %4270 = vmatprep.subr.bf16.mxu0 0
        %4271 = vmatpush1.bf16.msra.mxu0 0
        %4272 = vmatprep.subr.bf16.mxu0 0
        %4273 = vmatpush1.bf16.msra.mxu0 0
        %4274 = vmatprep.subr.bf16.mxu0 0
        %4275 = vmatpush1.bf16.msra.mxu0 0
        %4276 = vmatprep.subr.bf16.mxu0 0
        %4277 = vmatpush1.bf16.msra.mxu0 0
        %4278 = vmatprep.subr.bf16.mxu0 0
        %4279 = vmatpush1.bf16.msra.mxu0 0
        %4280 = vmatprep.subr.bf16.mxu0 0
        %4281 = vmatpush1.bf16.msra.mxu0 0
        %4282 = vmatprep.subr.bf16.mxu0 0
        %4283 = vmatpush1.bf16.msra.mxu0 0
        %4284 = vmatprep.subr.bf16.mxu0 0
        %4285 = vmatpush1.bf16.msra.mxu0 0
        %4286 = vmatprep.mubr.bf16.mxu0 0
        %4287 = vmatmul.mubr.bf16.gmra.mrb[0].mxu0 %v4246
        %v4288 = vpop.f32.mrb[0].mxu0
        %v4289 = vadd.f32 0.0, %v4288
        %v4290 = vpop.f32.mrb[0].mxu0
        %v4291 = vpop.f32.mrb[0].mxu0
        %v4292 = vadd.f32 0.0, %v4291
        %v4293 = vpop.f32.mrb[0].mxu0
        %4294 = vmatprep.mubr.bf16.mxu0 0
        %4295 = vmatmul.mubr.bf16.gmra.mrb[0].mxu0 %v4249
        %v4296 = vpop.f32.mrb[0].mxu0
        %v4297 = vadd.f32 0.0, %v4296
        %v4298 = vpop.f32.mrb[0].mxu0
        %v4299 = vpop.f32.mrb[0].mxu0
        %v4300 = vadd.f32 0.0, %v4299
        %v4301 = vpop.f32.mrb[0].mxu0
        %4302 = vdwg.mxu0
        %v4304 = vsel %vm2519, %v4235, 0
        %v4307 = vsel %vm2519, %v4236, 0
        %v4310 = vsel %vm3499, %v4242, 0
        %4312 = vmatprep.subr.bf16.mxu0 0
        %4313 = vmatpush1.bf16.msra.mxu0 %v4310
        %4314 = vmatprep.subr.bf16.mxu0 0
        %4315 = vmatpush1.bf16.msra.mxu0 0
        %4316 = vmatprep.subr.bf16.mxu0 0
        %4317 = vmatpush1.bf16.msra.mxu0 0
        %4318 = vmatprep.subr.bf16.mxu0 0
        %4319 = vmatpush1.bf16.msra.mxu0 0
        %4320 = vmatprep.subr.bf16.mxu0 0
        %4321 = vmatpush1.bf16.msra.mxu0 0
        %4322 = vmatprep.subr.bf16.mxu0 0
        %4323 = vmatpush1.bf16.msra.mxu0 0
        %4324 = vmatprep.subr.bf16.mxu0 0
        %4325 = vmatpush1.bf16.msra.mxu0 0
        %4326 = vmatprep.subr.bf16.mxu0 0
        %4327 = vmatpush1.bf16.msra.mxu0 0
        %4328 = vmatprep.subr.bf16.mxu0 0
        %4329 = vmatpush1.bf16.msra.mxu0 0
        %4330 = vmatprep.subr.bf16.mxu0 0
        %4331 = vmatpush1.bf16.msra.mxu0 0
        %4332 = vmatprep.subr.bf16.mxu0 0
        %4333 = vmatpush1.bf16.msra.mxu0 0
        %4334 = vmatprep.subr.bf16.mxu0 0
        %4335 = vmatpush1.bf16.msra.mxu0 0
        %4336 = vmatprep.subr.bf16.mxu0 0
        %4337 = vmatpush1.bf16.msra.mxu0 0
        %4338 = vmatprep.subr.bf16.mxu0 0
        %4339 = vmatpush1.bf16.msra.mxu0 0
        %4340 = vmatprep.subr.bf16.mxu0 0
        %4341 = vmatpush1.bf16.msra.mxu0 0
        %4342 = vmatprep.subr.bf16.mxu0 0
        %4343 = vmatpush1.bf16.msra.mxu0 0
        %4344 = vmatprep.mubr.bf16.mxu0 0
        %4345 = vmatmul.mubr.bf16.gmra.mrb[0].mxu0 %v4304
        %v4346 = vpop.f32.mrb[0].mxu0
        %v4347 = vadd.f32 0.0, %v4346
        %v4348 = vpop.f32.mrb[0].mxu0
        %v4349 = vpop.f32.mrb[0].mxu0
        %v4350 = vadd.f32 0.0, %v4349
        %v4351 = vpop.f32.mrb[0].mxu0
        %4352 = vmatprep.mubr.bf16.mxu0 0
        %4353 = vmatmul.mubr.bf16.gmra.mrb[0].mxu0 %v4307
        %v4354 = vpop.f32.mrb[0].mxu0
        %v4355 = vadd.f32 0.0, %v4354
        %v4356 = vpop.f32.mrb[0].mxu0
        %v4357 = vpop.f32.mrb[0].mxu0
        %v4358 = vadd.f32 0.0, %v4357
        %v4359 = vpop.f32.mrb[0].mxu0
        %4360 = vdwg.mxu0
        %v4362 = vsel %vm2519, %v4237, 0
        %v4365 = vsel %vm2519, %v4238, 0
        %v4368 = vsel %vm3499, %v4243, 0
        %4370 = vmatprep.subr.bf16.mxu0 0
        %4371 = vmatpush1.bf16.msra.mxu0 %v4368
        %4372 = vmatprep.subr.bf16.mxu0 0
        %4373 = vmatpush1.bf16.msra.mxu0 0
        %4374 = vmatprep.subr.bf16.mxu0 0
        %4375 = vmatpush1.bf16.msra.mxu0 0
        %4376 = vmatprep.subr.bf16.mxu0 0
        %4377 = vmatpush1.bf16.msra.mxu0 0
        %4378 = vmatprep.subr.bf16.mxu0 0
        %4379 = vmatpush1.bf16.msra.mxu0 0
        %4380 = vmatprep.subr.bf16.mxu0 0
        %4381 = vmatpush1.bf16.msra.mxu0 0
        %4382 = vmatprep.subr.bf16.mxu0 0
        %4383 = vmatpush1.bf16.msra.mxu0 0
        %4384 = vmatprep.subr.bf16.mxu0 0
        %4385 = vmatpush1.bf16.msra.mxu0 0
        %4386 = vmatprep.subr.bf16.mxu0 0
        %4387 = vmatpush1.bf16.msra.mxu0 0
        %4388 = vmatprep.subr.bf16.mxu0 0
        %4389 = vmatpush1.bf16.msra.mxu0 0
        %4390 = vmatprep.subr.bf16.mxu0 0
        %4391 = vmatpush1.bf16.msra.mxu0 0
        %4392 = vmatprep.subr.bf16.mxu0 0
        %4393 = vmatpush1.bf16.msra.mxu0 0
        %4394 = vmatprep.subr.bf16.mxu0 0
        %4395 = vmatpush1.bf16.msra.mxu0 0
        %4396 = vmatprep.subr.bf16.mxu0 0
        %4397 = vmatpush1.bf16.msra.mxu0 0
        %4398 = vmatprep.subr.bf16.mxu0 0
        %4399 = vmatpush1.bf16.msra.mxu0 0
        %4400 = vmatprep.subr.bf16.mxu0 0
        %4401 = vmatpush1.bf16.msra.mxu0 0
        %4402 = vmatprep.mubr.bf16.mxu0 0
        %4403 = vmatmul.mubr.bf16.gmra.mrb[0].mxu0 %v4362
        %v4404 = vpop.f32.mrb[0].mxu0
        %v4405 = vadd.f32 0.0, %v4404
        %v4406 = vpop.f32.mrb[0].mxu0
        %v4407 = vpop.f32.mrb[0].mxu0
        %v4408 = vadd.f32 0.0, %v4407
        %v4409 = vpop.f32.mrb[0].mxu0
        %4410 = vmatprep.mubr.bf16.mxu0 0
        %4411 = vmatmul.mubr.bf16.gmra.mrb[0].mxu0 %v4365
        %v4412 = vpop.f32.mrb[0].mxu0
        %v4413 = vadd.f32 0.0, %v4412
        %v4414 = vpop.f32.mrb[0].mxu0
        %v4415 = vpop.f32.mrb[0].mxu0
        %v4416 = vadd.f32 0.0, %v4415
        %v4417 = vpop.f32.mrb[0].mxu0
        %4418 = vdwg.mxu0
        %v4420 = vsel %vm2519, %v4239, 0
        %v4423 = vsel %vm2519, %v4240, 0
        %v4426 = vsel %vm3499, %v4244, 0
        %4428 = vmatprep.subr.bf16.mxu0 0
        %4429 = vmatpush1.bf16.msra.mxu0 %v4426
        %4430 = vmatprep.subr.bf16.mxu0 0
        %4431 = vmatpush1.bf16.msra.mxu0 0
        %4432 = vmatprep.subr.bf16.mxu0 0
        %4433 = vmatpush1.bf16.msra.mxu0 0
        %4434 = vmatprep.subr.bf16.mxu0 0
        %4435 = vmatpush1.bf16.msra.mxu0 0
        %4436 = vmatprep.subr.bf16.mxu0 0
        %4437 = vmatpush1.bf16.msra.mxu0 0
        %4438 = vmatprep.subr.bf16.mxu0 0
        %4439 = vmatpush1.bf16.msra.mxu0 0
        %4440 = vmatprep.subr.bf16.mxu0 0
        %4441 = vmatpush1.bf16.msra.mxu0 0
        %4442 = vmatprep.subr.bf16.mxu0 0
        %4443 = vmatpush1.bf16.msra.mxu0 0
        %4444 = vmatprep.subr.bf16.mxu0 0
        %4445 = vmatpush1.bf16.msra.mxu0 0
        %4446 = vmatprep.subr.bf16.mxu0 0
        %4447 = vmatpush1.bf16.msra.mxu0 0
        %4448 = vmatprep.subr.bf16.mxu0 0
        %4449 = vmatpush1.bf16.msra.mxu0 0
        %4450 = vmatprep.subr.bf16.mxu0 0
        %4451 = vmatpush1.bf16.msra.mxu0 0
        %4452 = vmatprep.subr.bf16.mxu0 0
        %4453 = vmatpush1.bf16.msra.mxu0 0
        %4454 = vmatprep.subr.bf16.mxu0 0
        %4455 = vmatpush1.bf16.msra.mxu0 0
        %4456 = vmatprep.subr.bf16.mxu0 0
        %4457 = vmatpush1.bf16.msra.mxu0 0
        %4458 = vmatprep.subr.bf16.mxu0 0
        %4459 = vmatpush1.bf16.msra.mxu0 0
        %4460 = vmatprep.mubr.bf16.mxu0 0
        %4461 = vmatmul.mubr.bf16.gmra.mrb[0].mxu0 %v4420
        %v4462 = vpop.f32.mrb[0].mxu0
        %v4463 = vadd.f32 0.0, %v4462
        %v4464 = vpop.f32.mrb[0].mxu0
        %v4465 = vpop.f32.mrb[0].mxu0
        %v4466 = vadd.f32 0.0, %v4465
        %v4467 = vpop.f32.mrb[0].mxu0
        %4468 = vmatprep.mubr.bf16.mxu0 0
        %4469 = vmatmul.mubr.bf16.gmra.mrb[0].mxu0 %v4423
        %v4470 = vpop.f32.mrb[0].mxu0
        %v4471 = vadd.f32 0.0, %v4470
        %v4472 = vpop.f32.mrb[0].mxu0
        %v4473 = vpop.f32.mrb[0].mxu0
        %v4474 = vadd.f32 0.0, %v4473
        %v4475 = vpop.f32.mrb[0].mxu0
        %4476 = vdwg.mxu0
        %v4477 = vsel %vm559, %v4289, 0.0
        %v4478 = vsel %vm559, %v4347, 0.0
        %v4479 = vadd.f32 %v4477, %v4478
        %v4480 = vsel %vm559, %v4405, 0.0
        %v4481 = vadd.f32 %v4479, %v4480
        %v4482 = vsel %vm559, %v4463, 0.0
        %v4483 = vadd.f32 %v4481, %v4482
        %v4484 = vsel %vm559, %v4292, 0.0
        %v4485 = vsel %vm559, %v4350, 0.0
        %v4486 = vadd.f32 %v4484, %v4485
        %v4487 = vsel %vm559, %v4408, 0.0
        %v4488 = vadd.f32 %v4486, %v4487
        %v4489 = vsel %vm559, %v4466, 0.0
        %v4490 = vadd.f32 %v4488, %v4489
        %v4491 = vsel %vm559, %v4297, 0.0
        %v4492 = vsel %vm559, %v4355, 0.0
        %v4493 = vadd.f32 %v4491, %v4492
        %v4494 = vsel %vm559, %v4413, 0.0
        %v4495 = vadd.f32 %v4493, %v4494
        %v4496 = vsel %vm559, %v4471, 0.0
        %v4497 = vadd.f32 %v4495, %v4496
        %v4498 = vsel %vm559, %v4300, 0.0
        %v4499 = vsel %vm559, %v4358, 0.0
        %v4500 = vadd.f32 %v4498, %v4499
        %v4501 = vsel %vm559, %v4416, 0.0
        %v4502 = vadd.f32 %v4500, %v4501
        %v4503 = vsel %vm559, %v4474, 0.0
        %v4504 = vadd.f32 %v4502, %v4503
        %v4505 = vadd.f32 %v553, %v4483
        %v4506 = vadd.f32 %v554, %v4490
        %v4507 = vadd.f32 %v555, %v4497
        %v4508 = vadd.f32 %v556, %v4504
        %v4509 = vld [vmem:[#allocation8] sm:$0x1]
        %v4511 = vlaneseq
        %v4512 = vshrl.u32 %v4511, 7
        %v4513 = vsub.s32 0, %v4512
        %v4514 = vrot.slane %v4509, %v4513
        %v4516 = vadd.f32 %v4505, %v4514
        %v4517 = vadd.f32 %v4506, %v4514
        %v4518 = vadd.f32 %v4507, %v4514
        %v4519 = vadd.f32 %v4508, %v4514
        %v4520 = vld [vmem:[#allocation10] sm:$0x1]
        %v4521 = vld [vmem:[#allocation11] sm:$0x1]
        %v4522 = vsel %vm559, %v4516, 0.0
        %4523 = vadd.xlane.f32.xlu0 %v4522
        %v4524 = vpop.xlane.xlu0 %4523
        %v4525 = vsel %vm559, %v4517, 0.0
        %4526 = vadd.xlane.f32.xlu0 %v4525
        %v4527 = vpop.xlane.xlu0 %4526
        %v4528 = vsel %vm559, %v4518, 0.0
        %4529 = vadd.xlane.f32.xlu0 %v4528
        %v4530 = vpop.xlane.xlu0 %4529
        %v4531 = vsel %vm559, %v4519, 0.0
        %4532 = vadd.xlane.f32.xlu0 %v4531
        %v4533 = vpop.xlane.xlu0 %4532
        %v4534 = vmul.f32 %v4524, %v572
        %v4535 = vmul.f32 %v4527, %v572
        %v4536 = vmul.f32 %v4530, %v572
        %v4537 = vmul.f32 %v4533, %v572
        %v4538 = vsub.f32 %v4516, %v4534
        %v4539 = vsub.f32 %v4517, %v4535
        %v4540 = vsub.f32 %v4518, %v4536
        %v4541 = vsub.f32 %v4519, %v4537
        %v4542 = vmul.f32 %v4538, %v4538
        %v4543 = vmul.f32 %v4539, %v4539
        %v4544 = vmul.f32 %v4540, %v4540
        %v4545 = vmul.f32 %v4541, %v4541
        %v4546 = vsel %vm559, %v4542, 0.0
        %4547 = vadd.xlane.f32.xlu0 %v4546
        %v4548 = vpop.xlane.xlu0 %4547
        %v4549 = vsel %vm559, %v4543, 0.0
        %4550 = vadd.xlane.f32.xlu0 %v4549
        %v4551 = vpop.xlane.xlu0 %4550
        %v4552 = vsel %vm559, %v4544, 0.0
        %4553 = vadd.xlane.f32.xlu0 %v4552
        %v4554 = vpop.xlane.xlu0 %4553
        %v4555 = vsel %vm559, %v4545, 0.0
        %4556 = vadd.xlane.f32.xlu0 %v4555
        %v4557 = vpop.xlane.xlu0 %4556
        %v4558 = vmul.f32 %v4548, %v572
        %v4559 = vmul.f32 %v4551, %v572
        %v4560 = vmul.f32 %v4554, %v572
        %v4561 = vmul.f32 %v4557, %v572
        %v4562 = vadd.f32 %v4558, 1e-05
        %v4563 = vadd.f32 %v4559, 1e-05
        %v4564 = vadd.f32 %v4560, 1e-05
        %v4565 = vadd.f32 %v4561, 1e-05
        %v4566 = vrsqrt.pop %v4562
        %v4567 = vrsqrt.pop %v4563
        %v4568 = vrsqrt.pop %v4564
        %v4569 = vrsqrt.pop %v4565
        %v4570 = vmul.f32 %v4538, %v4566
        %v4571 = vmul.f32 %v4539, %v4567
        %v4572 = vmul.f32 %v4540, %v4568
        %v4573 = vmul.f32 %v4541, %v4569
        %v4575 = vlaneseq
        %v4576 = vshrl.u32 %v4575, 7
        %v4577 = vsub.s32 0, %v4576
        %v4578 = vrot.slane %v4520, %v4577
        %v4580 = vmul.f32 %v4570, %v4578
        %v4581 = vmul.f32 %v4571, %v4578
        %v4582 = vmul.f32 %v4572, %v4578
        %v4583 = vmul.f32 %v4573, %v4578
        %v4585 = vlaneseq
        %v4586 = vshrl.u32 %v4585, 7
        %v4587 = vsub.s32 0, %v4586
        %v4588 = vrot.slane %v4521, %v4587
        %v4590 = vadd.f32 %v4580, %v4588
        %v4591 = vadd.f32 %v4581, %v4588
        %v4592 = vadd.f32 %v4582, %v4588
        %v4593 = vadd.f32 %v4583, %v4588
        %v4594 = vpack.c.bf16 %v4591, %v4590
        %v4595 = vpack.c.bf16 %v4593, %v4592
        %v4596 = vld [vmem:[%s10] sm:$0xf]
        %v4597 = vld [vmem:[%s10 + $0x4] sm:$0xf]
        %v4598 = vld [vmem:[%s10 + $0x8] sm:$0xf]
        %v4599 = vld [vmem:[%s10 + $0xc] sm:$0xf]
        %v4600 = vld [vmem:[%s11] sm:$0x1]
        %v4602 = vlaneseq
        %v4603 = vshrl.u32 %v4602, 7
        %v4604 = vsub.s32 0, %v4603
        %v4605 = vrot.slane %v4600, %v4604
        %v4611 = vunpack.c.l.b16 %v4596
        %v4612 = vunpack.c.l.b16 %v4597
        %v4613 = vunpack.c.l.b16 %v4598
        %v4614 = vunpack.c.l.b16 %v4599
        %v4615 = vpack.c.b16 %v4612, %v4611
        %v4616 = vpack.c.b16 %v4614, %v4613
        %v4620 = vsel %vm559, %v4594, 0
        %v4623 = vsel %vm559, %v4595, 0
        %4625 = vmatprep.subr.bf16.mxu0 0
        %4626 = vmatpush1.bf16.msra.mxu0 %v4615
        %4627 = vmatprep.subr.bf16.mxu0 0
        %4628 = vmatpush1.bf16.msra.mxu0 %v4616
        %4629 = vmatprep.subr.bf16.mxu0 0
        %4630 = vmatpush1.bf16.msra.mxu0 0
        %4631 = vmatprep.subr.bf16.mxu0 0
        %4632 = vmatpush1.bf16.msra.mxu0 0
        %4633 = vmatprep.subr.bf16.mxu0 0
        %4634 = vmatpush1.bf16.msra.mxu0 0
        %4635 = vmatprep.subr.bf16.mxu0 0
        %4636 = vmatpush1.bf16.msra.mxu0 0
        %4637 = vmatprep.subr.bf16.mxu0 0
        %4638 = vmatpush1.bf16.msra.mxu0 0
        %4639 = vmatprep.subr.bf16.mxu0 0
        %4640 = vmatpush1.bf16.msra.mxu0 0
        %4641 = vmatprep.subr.bf16.mxu0 0
        %4642 = vmatpush1.bf16.msra.mxu0 0
        %4643 = vmatprep.subr.bf16.mxu0 0
        %4644 = vmatpush1.bf16.msra.mxu0 0
        %4645 = vmatprep.subr.bf16.mxu0 0
        %4646 = vmatpush1.bf16.msra.mxu0 0
        %4647 = vmatprep.subr.bf16.mxu0 0
        %4648 = vmatpush1.bf16.msra.mxu0 0
        %4649 = vmatprep.subr.bf16.mxu0 0
        %4650 = vmatpush1.bf16.msra.mxu0 0
        %4651 = vmatprep.subr.bf16.mxu0 0
        %4652 = vmatpush1.bf16.msra.mxu0 0
        %4653 = vmatprep.subr.bf16.mxu0 0
        %4654 = vmatpush1.bf16.msra.mxu0 0
        %4655 = vmatprep.subr.bf16.mxu0 0
        %4656 = vmatpush1.bf16.msra.mxu0 0
        %4657 = vmatprep.mubr.bf16.mxu0 0
        %4658 = vmatmul.mubr.bf16.gmra.mrb[0].mxu0 %v4620
        %v4659 = vpop.f32.mrb[0].mxu0
        %v4660 = vadd.f32 %v4605, %v4659
        %v4661 = vpop.f32.mrb[0].mxu0
        %v4662 = vpop.f32.mrb[0].mxu0
        %v4663 = vadd.f32 %v4605, %v4662
        %v4664 = vpop.f32.mrb[0].mxu0
        %4665 = vmatprep.mubr.bf16.mxu0 0
        %4666 = vmatmul.mubr.bf16.gmra.mrb[0].mxu0 %v4623
        %v4667 = vpop.f32.mrb[0].mxu0
        %v4668 = vadd.f32 %v4605, %v4667
        %v4669 = vpop.f32.mrb[0].mxu0
        %v4670 = vpop.f32.mrb[0].mxu0
        %v4671 = vadd.f32 %v4605, %v4670
        %v4672 = vpop.f32.mrb[0].mxu0
        %4673 = vdwg.mxu0
        %v4674 = vmul.f32 %v4660, 1.702
        %v4675 = vmul.f32 %v4663, 1.702
        %v4676 = vmul.f32 %v4668, 1.702
        %v4677 = vmul.f32 %v4671, 1.702
        %v4678 = vxor.u32 %v4674, 2147483648
        %v4679 = vxor.u32 %v4675, 2147483648
        %v4680 = vxor.u32 %v4676, 2147483648
        %v4681 = vxor.u32 %v4677, 2147483648
        %v4682 = vmul.f32 %v4678, 1.442695
        %v4683 = vpow.pop %v4682
        %v4684 = vmul.f32 %v4679, 1.442695
        %v4685 = vpow.pop %v4684
        %v4686 = vmul.f32 %v4680, 1.442695
        %v4687 = vpow.pop %v4686
        %v4688 = vmul.f32 %v4681, 1.442695
        %v4689 = vpow.pop %v4688
        %v4690 = vadd.f32 %v4683, 1.0
        %v4691 = vadd.f32 %v4685, 1.0
        %v4692 = vadd.f32 %v4687, 1.0
        %v4693 = vadd.f32 %v4689, 1.0
        %v4694 = vrcp.pop %v4690
        %v4695 = vmul.f32 1.0, %v4694
        %v4696 = vrcp.pop %v4691
        %v4697 = vmul.f32 1.0, %v4696
        %v4698 = vrcp.pop %v4692
        %v4699 = vmul.f32 1.0, %v4698
        %v4700 = vrcp.pop %v4693
        %v4701 = vmul.f32 1.0, %v4700
        %v4702 = vmul.f32 %v4660, %v4695
        %v4703 = vmul.f32 %v4663, %v4697
        %v4704 = vmul.f32 %v4668, %v4699
        %v4705 = vmul.f32 %v4671, %v4701
        %v4706 = vpack.c.bf16 %v4703, %v4702
        %v4707 = vpack.c.bf16 %v4705, %v4704
        %v4708 = vld [vmem:[%s12] sm:$0xf]
        %v4709 = vld [vmem:[%s12 + $0x4] sm:$0xf]
        %v4710 = vld [vmem:[%s12 + $0x8] sm:$0xf]
        %v4711 = vld [vmem:[%s12 + $0xc] sm:$0xf]
        %v4712 = vld [vmem:[%s12 + $0x10] sm:$0xf]
        %v4713 = vld [vmem:[%s12 + $0x14] sm:$0xf]
        %v4714 = vld [vmem:[%s12 + $0x18] sm:$0xf]
        %v4715 = vld [vmem:[%s12 + $0x1c] sm:$0xf]
        %v4716 = vld [vmem:[%s12 + $0x20] sm:$0xf]
        %v4717 = vld [vmem:[%s12 + $0x24] sm:$0xf]
        %v4718 = vld [vmem:[%s12 + $0x28] sm:$0xf]
        %v4719 = vld [vmem:[%s12 + $0x2c] sm:$0xf]
        %v4720 = vld [vmem:[%s12 + $0x30] sm:$0xf]
        %v4721 = vld [vmem:[%s12 + $0x34] sm:$0xf]
        %v4722 = vld [vmem:[%s12 + $0x38] sm:$0xf]
        %v4723 = vld [vmem:[%s12 + $0x3c] sm:$0xf]
        %v4724 = vld [vmem:[%s13] sm:$0x1]
        %v4726 = vlaneseq
        %v4727 = vshrl.u32 %v4726, 7
        %v4728 = vsub.s32 0, %v4727
        %v4729 = vrot.slane %v4724, %v4728
        %v4747 = vunpack.c.l.b16 %v4708
        %v4748 = vunpack.c.l.b16 %v4709
        %v4749 = vunpack.c.l.b16 %v4710
        %v4750 = vunpack.c.l.b16 %v4711
        %v4751 = vunpack.c.l.b16 %v4712
        %v4752 = vunpack.c.l.b16 %v4713
        %v4753 = vunpack.c.l.b16 %v4714
        %v4754 = vunpack.c.l.b16 %v4715
        %v4755 = vunpack.c.l.b16 %v4716
        %v4756 = vunpack.c.l.b16 %v4717
        %v4757 = vunpack.c.l.b16 %v4718
        %v4758 = vunpack.c.l.b16 %v4719
        %v4759 = vunpack.c.l.b16 %v4720
        %v4760 = vunpack.c.l.b16 %v4721
        %v4761 = vunpack.c.l.b16 %v4722
        %v4762 = vunpack.c.l.b16 %v4723
        %v4763 = vpack.c.b16 %v4748, %v4747
        %v4764 = vpack.c.b16 %v4750, %v4749
        %v4765 = vpack.c.b16 %v4752, %v4751
        %v4766 = vpack.c.b16 %v4754, %v4753
        %v4767 = vpack.c.b16 %v4756, %v4755
        %v4768 = vpack.c.b16 %v4758, %v4757
        %v4769 = vpack.c.b16 %v4760, %v4759
        %v4770 = vpack.c.b16 %v4762, %v4761
        %4779 = vmatprep.subr.bf16.mxu0 0
        %4780 = vmatpush1.bf16.msra.mxu0 %v4763
        %4781 = vmatprep.subr.bf16.mxu0 0
        %4782 = vmatpush1.bf16.msra.mxu0 %v4764
        %4783 = vmatprep.subr.bf16.mxu0 0
        %4784 = vmatpush1.bf16.msra.mxu0 %v4765
        %4785 = vmatprep.subr.bf16.mxu0 0
        %4786 = vmatpush1.bf16.msra.mxu0 %v4766
        %4787 = vmatprep.subr.bf16.mxu0 0
        %4788 = vmatpush1.bf16.msra.mxu0 %v4767
        %4789 = vmatprep.subr.bf16.mxu0 0
        %4790 = vmatpush1.bf16.msra.mxu0 %v4768
        %4791 = vmatprep.subr.bf16.mxu0 0
        %4792 = vmatpush1.bf16.msra.mxu0 %v4769
        %4793 = vmatprep.subr.bf16.mxu0 0
        %4794 = vmatpush1.bf16.msra.mxu0 %v4770
        %4795 = vmatprep.subr.bf16.mxu0 0
        %4796 = vmatpush1.bf16.msra.mxu0 0
        %4797 = vmatprep.subr.bf16.mxu0 0
        %4798 = vmatpush1.bf16.msra.mxu0 0
        %4799 = vmatprep.subr.bf16.mxu0 0
        %4800 = vmatpush1.bf16.msra.mxu0 0
        %4801 = vmatprep.subr.bf16.mxu0 0
        %4802 = vmatpush1.bf16.msra.mxu0 0
        %4803 = vmatprep.subr.bf16.mxu0 0
        %4804 = vmatpush1.bf16.msra.mxu0 0
        %4805 = vmatprep.subr.bf16.mxu0 0
        %4806 = vmatpush1.bf16.msra.mxu0 0
        %4807 = vmatprep.subr.bf16.mxu0 0
        %4808 = vmatpush1.bf16.msra.mxu0 0
        %4809 = vmatprep.subr.bf16.mxu0 0
        %4810 = vmatpush1.bf16.msra.mxu0 0
        %4811 = vmatprep.mubr.bf16.mxu0 0
        %4812 = vmatmul.mubr.bf16.gmra.mrb[0].mxu0 %v4706
        %v4813 = vpop.f32.mrb[0].mxu0
        %v4814 = vadd.f32 %v4729, %v4813
        %v4815 = vpop.f32.mrb[0].mxu0
        %v4816 = vpop.f32.mrb[0].mxu0
        %v4817 = vadd.f32 %v4729, %v4816
        %v4818 = vpop.f32.mrb[0].mxu0
        %4819 = vmatprep.mubr.bf16.mxu0 0
        %4820 = vmatmul.mubr.bf16.gmra.mrb[0].mxu0 %v4707
        %v4821 = vpop.f32.mrb[0].mxu0
        %v4822 = vadd.f32 %v4729, %v4821
        %v4823 = vpop.f32.mrb[0].mxu0
        %v4824 = vpop.f32.mrb[0].mxu0
        %v4825 = vadd.f32 %v4729, %v4824
        %v4826 = vpop.f32.mrb[0].mxu0
        %4827 = vdwg.mxu0
        %v4828 = vadd.f32 %v4516, %v4814
        %v4829 = vadd.f32 %v4517, %v4817
        %v4830 = vadd.f32 %v4518, %v4822
        %v4831 = vadd.f32 %v4519, %v4825
        %4832 = vst.msk [vmem:[%s539] sm:$0xff] %vm559, %v4828
        %4833 = vst.msk [vmem:[%s539 + $0x8] sm:$0xff] %vm559, %v4829
        %4834 = vst.msk [vmem:[%s539 + $0x10] sm:$0xff] %vm559, %v4830
        %4835 = vst.msk [vmem:[%s539 + $0x18] sm:$0xff] %vm559, %v4831
        %s4836 = sand.u32 %s339, 1
        %s4837 = scalar_lea.sflag [#allocation4], %s4836
        %s4838 = sand.u32 %s339, 1
        %s4839 = smul.addr %s4838, 32
        %s4840 = scalar_lea.vmem [#allocation13], %s4839
        // Predicated region
        $region101: #{tpu_custom_call.1} parent=75 // pred_check
          %p4841 = pneg %p349
        $region102: #{tpu_custom_call.1} parent=75 // pred_check_branch
          %4843 = sbr.rel (%p4841) target = $region104
        $region103: #{tpu_custom_call.1} parent=75 // pred_region
          %s4844 = smul.u32 4, %s32
          %s4846 = ssub.s32 512, 512
          %4847 = vsyncadd %s4837, %s4846
          %s4848 = smul.addr %s4844, 128
          %s4849 = scalar_lea.hbm %s14, %s4848
          %s4850 = sshll.u32 %s4840, 4
          %s4851 = int_to_ptr.vmem [resolvable:$true] %s4850
          %4856 = dma.vmem_to_hbm [thread:$0]  %s4851, 512, %s4849, %s4837, 128, 128, 8
        $region104: #{tpu_custom_call.1} parent=75 // pred_fallthru
          _
      $region76: #{tpu_custom_call.1} parent=5 // pred_fallthru
        _
      %p4857 = scmp.le.s32.totalorder 2, %s27
      // Predicated region
      $region105: #{tpu_custom_call.1} parent=5 // pred_check
        %p4858 = pneg %p4857
      $region106: #{tpu_custom_call.1} parent=5 // pred_check_branch
        %4860 = sbr.rel (%p4858) target = $region108
      $region107: #{tpu_custom_call.1} parent=5 // pred_region
        %s4861 = ssub.s32 %s27, 2
        // Predicated region
        $region109: #{tpu_custom_call.1} parent=107 // pred_check
          %p4862 = pneg %p355
        $region110: #{tpu_custom_call.1} parent=107 // pred_check_branch
          %4864 = sbr.rel (%p4862) target = $region112
        $region111: #{tpu_custom_call.1} parent=107 // pred_region
          %s4865 = sand.u32 %s340, 1
          %s4866 = scalar_lea.sflag [#allocation4], %s4865
          %s4867 = sand.u32 %s340, 1
          %s4868 = smul.addr %s4867, 32
          %s4869 = scalar_lea.vmem [#allocation13], %s4868
          %4870 = dma.done %s4866, 512
        $region112: #{tpu_custom_call.1} parent=107 // pred_fallthru
          _
      $region108: #{tpu_custom_call.1} parent=5 // pred_fallthru
        _
    $region6: #{tpu_custom_call.1} parent=1 // loop_footer
      %s31 = sadd.s32 1, %s27
    $region7: #{tpu_custom_call.1} parent=1 // loop_footer_branch
      %26 = sbr.rel target = $region3
    $region8: #{tpu_custom_call.1} parent=1 // loop_exit
      _
    %4871 = vsyncpa [#allocation3], 1
    %s4872 = scalar_lea.sflag [#allocation3], 1
    %4873 = vsyncpa %s4872, 1
    %4874 = vsyncpa [#allocation6], 1
    %4875 = vsyncpa [#allocation9], 1
    %4876 = vsyncpa [#allocation12], 1
    %4877 = vsyncpa [#allocation4], 1
    %s4878 = scalar_lea.sflag [#allocation4], 1
    %4879 = vsyncpa %s4878, 1

</llo_original>
